<compile_context>
chip_gen: v5e
topology: v5e:2x2
jax: 0.10.0
libtpu: 0.0.40
codegen_flags: <defaults>
</compile_context>

<pallas_src>
import functools

import jax
import jax.numpy as jnp
from jax import lax
from jax.experimental import pallas as pl
from jax.experimental.pallas import tpu as pltpu


_SCALE_CFG = {2: (6, 2, 2), 4: (8, 4, 2), 8: (12, 8, 2)}  # kernel, stride, pad


def _round_up(x, m):
    return ((x + m - 1) // m) * m


# ---------------------------------------------------------------------------
# Pallas kernels: matmul + bias + PReLU (+ optional fused +/- residual)
# ---------------------------------------------------------------------------
# Single-K-tile fast path (no accumulator scratch, bf16 output).
def _mm_prelu_kernel(p_ref, w_ref, b_ref, a_ref, o_ref):
    acc = jnp.dot(p_ref[...], w_ref[...], preferred_element_type=jnp.float32)
    acc = acc + b_ref[...]
    o_ref[...] = jnp.where(acc > 0, acc, a_ref[...] * acc).astype(o_ref.dtype)


def _mm_prelu_res_kernel(p_ref, w_ref, b_ref, a_ref, r_ref, o_ref, *, sign):
    acc = jnp.dot(p_ref[...], w_ref[...], preferred_element_type=jnp.float32)
    acc = acc + b_ref[...]
    y = jnp.where(acc > 0, acc, a_ref[...] * acc)
    o_ref[...] = (y + sign * r_ref[...].astype(jnp.float32)).astype(o_ref.dtype)


# Multi-K-tile path (large K only): f32 VMEM accumulator, K-last reduction.
def _mm_prelu_kernel_acc(p_ref, w_ref, b_ref, a_ref, o_ref, acc_ref):
    @pl.when(pl.program_id(2) == 0)
    def _init():
        acc_ref[...] = jnp.zeros_like(acc_ref)

    acc_ref[...] += jnp.dot(p_ref[...], w_ref[...],
                            preferred_element_type=jnp.float32)

    @pl.when(pl.program_id(2) == pl.num_programs(2) - 1)
    def _finalize():
        acc = acc_ref[...] + b_ref[...]
        o_ref[...] = jnp.where(acc > 0, acc, a_ref[...] * acc).astype(o_ref.dtype)


def _mm_prelu_res_kernel_acc(p_ref, w_ref, b_ref, a_ref, r_ref, o_ref, acc_ref,
                             *, sign):
    @pl.when(pl.program_id(2) == 0)
    def _init():
        acc_ref[...] = jnp.zeros_like(acc_ref)

    acc_ref[...] += jnp.dot(p_ref[...], w_ref[...],
                            preferred_element_type=jnp.float32)

    @pl.when(pl.program_id(2) == pl.num_programs(2) - 1)
    def _finalize():
        acc = acc_ref[...] + b_ref[...]
        y = jnp.where(acc > 0, acc, a_ref[...] * acc)
        o_ref[...] = (y + sign * r_ref[...].astype(jnp.float32)).astype(o_ref.dtype)


# ---------------------------------------------------------------------------
# Tiling selection + wrapper
# ---------------------------------------------------------------------------
def _choose_m_tiling(M, Kp):
    """Pick (tm, Mp): minimize padding, cap patch working set, and keep >= 2
    M tiles whenever M >= 256 so both v7x TensorCores stay busy."""
    max_tm_by_vmem = max(128, (8 * 2 ** 20) // max(1, 2 * Kp * 2))
    best = None
    for tm in (1024, 512, 384, 256, 192, 128):
        if tm > max_tm_by_vmem:
            continue
        Mp = _round_up(M, tm)
        tiles = Mp // tm
        if M >= 256 and tiles < 2:
            continue
        key = (Mp - M, -tm)
        if best is None or key < best[0]:
            best = (key, tm, Mp)
    if best is None:  # unreachable in practice; defensive fallback
        tm = min(_round_up(max(M, 16), 16), 128)
        return tm, _round_up(M, tm)
    return best[1], best[2]


def fused_matmul_prelu(patches, w, b, alpha, residual=None, sign=1.0):
    """PReLU(patches @ w + b) [+ sign * residual]; f32 accumulate, bf16 output.

    patches : (M, K)  any float  -> treated/cast as bf16
    w       : (K, Np) bf16       -> Np pre-padded to a multiple of 128
    b, alpha: (Np,) f32 (zero-padded)
    residual: optional (M, <=Np) bf16/f32, added in f32 inside the kernel
    returns : (M, Np) bf16
    """
    M, K = patches.shape
    Kw, Np = w.shape
    assert K == Kw and Np % 128 == 0

    # Lane-dense N tiles; full Np when it fits so the weight stays resident.
    tn = Np if Np <= 1024 else 512

    # K tiling: single tile for typical DDBPN K (no padding, no accumulator);
    # grid over K only when K is huge, with tk chosen to minimize Kp - K.
    single_k = K <= 2048
    if single_k:
        tk, Kp = K, K
    else:
        nk = pl.cdiv(K, 2048)
        tk = _round_up(pl.cdiv(K, nk), 128)
        Kp = ((K + tk - 1) // tk) * tk

    tm, Mp = _choose_m_tiling(M, Kp)

    p = patches if patches.dtype == jnp.bfloat16 else patches.astype(jnp.bfloat16)
    if Mp > M or Kp > K:
        p = jnp.pad(p, ((0, Mp - M), (0, Kp - K)))
    wm = w if w.dtype == jnp.bfloat16 else w.astype(jnp.bfloat16)
    if Kp > K:
        wm = jnp.pad(wm, ((0, Kp - K), (0, 0)))
    b2 = b.astype(jnp.float32).reshape(1, Np)
    a2 = alpha.astype(jnp.float32).reshape(1, Np)

    args = [p, wm, b2, a2]
    res_bytes = 0
    if residual is not None:
        r = residual
        Mr, Nr = r.shape
        assert Mr == M and Nr <= Np
        if Mp > Mr or Np > Nr:
            r = jnp.pad(r, ((0, Mp - Mr), (0, Np - Nr)))
        args.append(r)
        res_bytes = 2 * tm * tn * jnp.dtype(r.dtype).itemsize

    if single_k:
        grid = (Np // tn, Mp // tm)           # N outer, M inner -> W fetched once per N tile
        in_specs = [
            pl.BlockSpec((tm, Kp), lambda j, i: (i, 0)),
            pl.BlockSpec((Kp, tn), lambda j, i: (0, j)),   # resident weight
            pl.BlockSpec((1, tn), lambda j, i: (0, j)),
            pl.BlockSpec((1, tn), lambda j, i: (0, j)),
        ]
        if residual is not None:
            in_specs.append(pl.BlockSpec((tm, tn), lambda j, i: (i, j)))
            kernel = functools.partial(_mm_prelu_res_kernel, sign=float(sign))
        else:
            kernel = _mm_prelu_kernel
        out_specs = pl.BlockSpec((tm, tn), lambda j, i: (i, j))
        scratch = []
        dims = ("parallel", "parallel")
        patch_buf, w_buf, acc_buf = 2 * tm * Kp * 2, Kp * tn * 2, 0
    else:
        grid = (Np // tn, Mp // tm, Kp // tk)
        in_specs = [
            pl.BlockSpec((tm, tk), lambda j, i, kk: (i, kk)),
            pl.BlockSpec((tk, tn), lambda j, i, kk: (kk, j)),
            pl.BlockSpec((1, tn), lambda j, i, kk: (0, j)),
            pl.BlockSpec((1, tn), lambda j, i, kk: (0, j)),
        ]
        if residual is not None:
            in_specs.append(pl.BlockSpec((tm, tn), lambda j, i, kk: (i, j)))
            kernel = functools.partial(_mm_prelu_res_kernel_acc, sign=float(sign))
        else:
            kernel = _mm_prelu_kernel_acc
        out_specs = pl.BlockSpec((tm, tn), lambda j, i, kk: (i, j))
        scratch = [pltpu.VMEM((tm, tn), jnp.float32)]
        dims = ("parallel", "parallel", "arbitrary")
        patch_buf, w_buf, acc_buf = 2 * tm * tk * 2, 2 * tk * tn * 2, tm * tn * 4

    out_buf = 2 * tm * tn * 2
    est = patch_buf + w_buf + out_buf + res_bytes + acc_buf + 8 * tn * 4
    # Computed footprint with 2x headroom; never above 48 MiB (v7x has 64 MiB
    # physical VMEM per TensorCore), never below the 32 MiB default.
    vmem_limit = int(min(48 * 2 ** 20, max(32 * 2 ** 20, 2 * est + (2 << 20))))

    out = pl.pallas_call(
        kernel,
        out_shape=jax.ShapeDtypeStruct((Mp, Np), jnp.bfloat16),
        grid_spec=pltpu.PrefetchScalarGridSpec(
            num_scalar_prefetch=0,
            grid=grid,
            in_specs=in_specs,
            out_specs=out_specs,
            scratch_shapes=scratch,
        ),
        compiler_params=pltpu.CompilerParams(
            dimension_semantics=dims,
            vmem_limit_bytes=vmem_limit,
        ),
    )(*args)
    return out[:M] if Mp > M else out


# ---------------------------------------------------------------------------
# Glue (plain JAX, bf16): im2col, sub-pixel shuffles, weight packing
# ---------------------------------------------------------------------------
def _im2col(x, kh, kw, stride, pad):
    """x: (B, H, W, C) -> patches (B*Ho*Wo, kh*kw*C)  (tap-major, channel-minor)."""
    B, H, W, C = x.shape
    xp = jnp.pad(x, ((0, 0), (pad, pad), (pad, pad), (0, 0)))
    Ho = (H + 2 * pad - kh) // stride + 1
    Wo = (W + 2 * pad - kw) // stride + 1
    cols = []
    for i in range(kh):
        for j in range(kw):
            cols.append(xp[:, i:i + Ho * stride:stride, j:j + Wo * stride:stride, :])
    p = jnp.stack(cols, axis=-2)                       # (B, Ho, Wo, kh*kw, C)
    return p.reshape(B * Ho * Wo, kh * kw * C), (B, Ho, Wo)


def _conv_weight_to_mat(w):
    """PyTorch Conv2d weight (Cout, Cin, kH, kW) -> (kH*kW*Cin, Cout)."""
    Cout, Cin, kH, kW = w.shape
    return jnp.transpose(w, (2, 3, 1, 0)).reshape(kH * kW * Cin, Cout)


def _convT_weight_to_subpixel_mat(wt, scale):
    """ConvTranspose2d weight (Cin, Cout, k, k) -> (9*Cin, s*s*Cout).

    Exact reformulation of ConvTranspose2d(k, stride=s, padding=p) as a 3x3
    stride-1 conv over the input grid followed by a pixel shuffle."""
    k, s, p = _SCALE_CFG[scale]
    assert 0 < p <= s
    Cin, Cout = wt.shape[0], wt.shape[1]
    w6 = jnp.zeros((3, 3, Cin, s, s, Cout), wt.dtype)
    for dyi in range(3):
        dy = dyi - 1
        for ry in range(s):
            ty = ry + ((1 if ry < p else 0) - dy) * s
            if not 0 <= ty < k:
                continue
            for dxi in range(3):
                dx = dxi - 1
                for rx in range(s):
                    tx = rx + ((1 if rx < p else 0) - dx) * s
                    if not 0 <= tx < k:
                        continue
                    w6 = w6.at[dyi, dxi, :, ry, rx, :].set(wt[:, :, ty, tx])
    return w6.reshape(9 * Cin, s * s * Cout)


def _phase_offsets(scale):
    k, s, p = _SCALE_CFG[scale]
    return [s * (1 if r < p else 0) + r - p for r in range(s)]


def _pixel_shuffle(flat, B, H, W, scale, C):
    """(B*H*W, s*s*C) phase-major -> (B, s*H, s*W, C) with phase offsets."""
    _, s, _ = _SCALE_CFG[scale]
    off = _phase_offsets(scale)
    perm = [0] * s
    for r, o in enumerate(off):
        perm[o] = r
    a = flat.reshape(B, H, W, s, s, C)
    a = a[:, :, :, perm, :, :][:, :, :, :, perm, :]
    a = jnp.transpose(a, (0, 1, 3, 2, 4, 5))
    return a.reshape(B, H * s, W * s, C)


def _pixel_unshuffle(x, scale):
    """(B, s*H, s*W, C) -> (B*H*W, s*s*C) phase-major (inverse of _pixel_shuffle)."""
    _, s, _ = _SCALE_CFG[scale]
    off = _phase_offsets(scale)
    B, Hs, Ws, C = x.shape
    H, W = Hs // s, Ws // s
    a = x.reshape(B, H, s, W, s, C).transpose(0, 1, 3, 2, 4, 5)
    a = a[:, :, :, off, :, :][:, :, :, :, off, :]
    return a.reshape(B * H * W, s * s * C)


# ---------------------------------------------------------------------------
# Parameter init (PyTorch layouts) and packing into kernel-ready matrices
# ---------------------------------------------------------------------------
def init_raw_params(key, in_channels, nr, scale, up=True, bottleneck=True):
    k, _, _ = _SCALE_CFG[scale]
    inter = nr if bottleneck else in_channels
    keys = jax.random.split(key, 8)
    rnd = lambda kk, shape: 0.05 * jax.random.normal(kk, shape, jnp.float32)
    raw = {}
    if bottleneck:
        raw["wb"] = rnd(keys[0], (nr, in_channels, 1, 1))      # Conv2d 1x1
        raw["bb"] = rnd(keys[1], (nr,))
        raw["ab"] = jnp.full((nr,), 0.25, jnp.float32)
    shp_13 = (inter, nr, k, k) if up else (nr, inter, k, k)    # conv_1 / conv_3
    shp_2 = (inter, nr, k, k) if up else (nr, inter, k, k)     # conv_2 (opposite dir)
    raw["w1"] = rnd(keys[2], shp_13)
    raw["b1"] = rnd(keys[3], (nr,))
    raw["a1"] = jnp.full((nr,), 0.25, jnp.float32)
    raw["w2"] = rnd(keys[4], shp_2)
    raw["b2"] = rnd(keys[5], (inter,))
    raw["a2"] = jnp.full((inter,), 0.25, jnp.float32)
    raw["w3"] = rnd(keys[6], shp_13)
    raw["b3"] = rnd(keys[7], (nr,))
    raw["a3"] = jnp.full((nr,), 0.25, jnp.float32)
    return raw


def prepare_params(raw, in_channels, nr, scale, up=True, bottleneck=True):
    """Pack weights once into (K, Np) bf16 matrices (Np = round_up(N, 128))."""
    _, s, _ = _SCALE_CFG[scale]

    def pad_n(mat, bvec, avec):
        Np = _round_up(mat.shape[1], 128)
        wm = jnp.pad(mat, ((0, 0), (0, Np - mat.shape[1]))).astype(jnp.bfloat16)
        bp = jnp.pad(bvec, (0, Np - bvec.shape[0])).astype(jnp.float32)
        ap = jnp.pad(avec, (0, Np - avec.shape[0])).astype(jnp.float32)
        return wm, bp, ap

    def prep_up(wt, b, a):        # ConvTranspose -> sub-pixel 3x3 matrix
        mat = _convT_weight_to_subpixel_mat(wt, scale)
        return pad_n(mat, jnp.tile(b, s * s), jnp.tile(a, s * s))

    def prep_down(wc, b, a):      # Conv2d -> standard im2col matrix
        return pad_n(_conv_weight_to_mat(wc), b, a)

    params = {}
    if bottleneck:
        wb = jnp.transpose(raw["wb"][:, :, 0, 0], (1, 0))      # (Cin, nr)
        params["wb"], params["bb"], params["ab"] = pad_n(wb, raw["bb"], raw["ab"])
    prep13 = prep_up if up else prep_down
    prep2 = prep_down if up else prep_up
    params["w1"], params["b1"], params["a1"] = prep13(raw["w1"], raw["b1"], raw["a1"])
    params["w2"], params["b2"], params["a2"] = prep2(raw["w2"], raw["b2"], raw["a2"])
    params["w3"], params["b3"], params["a3"] = prep13(raw["w3"], raw["b3"], raw["a3"])
    return params


# ---------------------------------------------------------------------------
# DenseProjection forward
# ---------------------------------------------------------------------------
def dense_projection_forward(params, x_nchw, *, in_channels, nr, scale, up, bottleneck):
    k, s, p = _SCALE_CFG[scale]
    inter = nr if bottleneck else in_channels

    # bf16 activation chain end-to-end (f32 accumulation inside the kernels).
    x = jnp.transpose(x_nchw, (0, 2, 3, 1)).astype(jnp.bfloat16)   # NHWC
    B, H, W, _ = x.shape

    if bottleneck:
        x_flat = fused_matmul_prelu(x.reshape(B * H * W, in_channels),
                                    params["wb"], params["bb"], params["ab"])
        x_base = x_flat[:, :inter].reshape(B, H, W, inter)
    else:
        x_base = x
        x_flat = x.reshape(B * H * W, in_channels)

    if up:
        # conv_1: ConvTranspose as sub-pixel 3x3 conv over the (H, W) grid.
        p1, _ = _im2col(x_base, 3, 3, 1, 1)
        a0_flat = fused_matmul_prelu(p1, params["w1"], params["b1"], params["a1"])
        a0_hi = _pixel_shuffle(a0_flat[:, :s * s * nr], B, H, W, scale, nr)

        # conv_2: strided Conv2d back to (H, W); "- x" fused into the kernel.
        # x_flat (bottleneck output) is already in the padded (M, Np) layout.
        p2, _ = _im2col(a0_hi, k, k, s, p)
        e_flat = fused_matmul_prelu(p2, params["w2"], params["b2"], params["a2"],
                                    residual=x_flat, sign=-1.0)
        e_base = e_flat[:, :inter].reshape(B, H, W, inter)

        # conv_3: second sub-pixel ConvTranspose, "+ a_0" fused in the same
        # phase-major sub-pixel layout so only one pixel shuffle happens.
        p3, _ = _im2col(e_base, 3, 3, 1, 1)
        out_flat = fused_matmul_prelu(p3, params["w3"], params["b3"], params["a3"],
                                      residual=a0_flat, sign=+1.0)
        out = _pixel_shuffle(out_flat[:, :s * s * nr], B, H, W, scale, nr)
    else:
        Hl, Wl = H // s, W // s
        p1, _ = _im2col(x_base, k, k, s, p)
        a0_flat = fused_matmul_prelu(p1, params["w1"], params["b1"], params["a1"])
        a0_lo = a0_flat[:, :nr].reshape(B, Hl, Wl, nr)

        x_phase = _pixel_unshuffle(x_base, scale)
        p2, _ = _im2col(a0_lo, 3, 3, 1, 1)
        e_flat = fused_matmul_prelu(p2, params["w2"], params["b2"], params["a2"],
                                    residual=x_phase, sign=-1.0)
        e_hi = _pixel_shuffle(e_flat[:, :s * s * inter], B, Hl, Wl, scale, inter)

        p3, _ = _im2col(e_hi, k, k, s, p)
        out_flat = fused_matmul_prelu(p3, params["w3"], params["b3"], params["a3"],
                                      residual=a0_flat, sign=+1.0)
        out = out_flat[:, :nr].reshape(B, Hl, Wl, nr)

    return jnp.transpose(out, (0, 3, 1, 2)).astype(jnp.float32)      # NCHW


# ---------------------------------------------------------------------------
# Pure-JAX reference (lax convs, f32) for a numerical self-check.
# Note: the Pallas path uses bf16 activations / MXU inputs with f32 accumulate,
# so a loose relative tolerance (5e-2 of max|ref|) is expected and intended.
# ---------------------------------------------------------------------------
def reference_forward(raw, x, *, in_channels, nr, scale, up, bottleneck):
    k, s, p = _SCALE_CFG[scale]

    def conv(xx, w, b, stride, pad):
        y = lax.conv_general_dilated(
            xx, w, (stride, stride), [(pad, pad), (pad, pad)],
            dimension_numbers=("NCHW", "OIHW", "NCHW"),
            precision=lax.Precision.HIGHEST)
        return y + b.reshape(1, -1, 1, 1)

    def convT(xx, w, b, stride, pad):
        wc = jnp.transpose(w, (1, 0, 2, 3))[:, :, ::-1, ::-1]
        y = lax.conv_general_dilated(
            xx, wc, (1, 1), [(k - 1 - pad,) * 2] * 2,
            lhs_dilation=(stride, stride),
            dimension_numbers=("NCHW", "OIHW", "NCHW"),
            precision=lax.Precision.HIGHEST)
        return y + b.reshape(1, -1, 1, 1)

    def prelu(v, a):
        return jnp.where(v > 0, v, a.reshape(1, -1, 1, 1) * v)

    proj13 = convT if up else conv
    proj2 = conv if up else convT
    if bottleneck:
        x = prelu(conv(x, raw["wb"], raw["bb"], 1, 0), raw["ab"])
    a0 = prelu(proj13(x, raw["w1"], raw["b1"], s, p), raw["a1"])
    b0 = prelu(proj2(a0, raw["w2"], raw["b2"], s, p), raw["a2"])
    e = b0 - x
    a1 = prelu(proj13(e, raw["w3"], raw["b3"], s, p), raw["a3"])
    return a0 + a1


if __name__ == "__main__":
    key = jax.random.PRNGKey(0)
    k_x, k_p = jax.random.split(key)

    # DenseProjection(in_channels=4, nr=8, scale=2, up=True, bottleneck=True)
    B, Cin, H, W = 2, 4, 16, 16
    nr, scale, up, bottleneck = 8, 2, True, True

    x = jax.random.normal(k_x, (B, Cin, H, W), jnp.float32)
    raw = init_raw_params(k_p, Cin, nr, scale, up=up, bottleneck=bottleneck)
    params = prepare_params(raw, Cin, nr, scale, up=up, bottleneck=bottleneck)

    fwd = jax.jit(functools.partial(
        dense_projection_forward, in_channels=Cin, nr=nr, scale=scale,
        up=up, bottleneck=bottleneck))
    out = jax.block_until_ready(fwd(params, x))

    assert out.shape == (B, nr, H * scale, W * scale), out.shape
    assert bool(jnp.all(jnp.isfinite(out)))

    # Numerical check against a pure-JAX (lax) reference of the PyTorch module.
    ref = reference_forward(raw, x, in_channels=Cin, nr=nr, scale=scale,
                            up=up, bottleneck=bottleneck)
    rel_err = float(jnp.max(jnp.abs(out - ref)) / (jnp.max(jnp.abs(ref)) + 1e-6))
    assert rel_err < 5e-2, f"mismatch vs reference: rel_err={rel_err}"

    print("KERNEL_OK")
</pallas_src>

<mosaic_0001>
module attributes {stable_mosaic.version = 11 : i64} {
  func.func @_mm_prelu_kernel(%arg0: i32, %arg1: i32, %arg2: memref<256x4xbf16, #tpu.memory_space<vmem>>, %arg3: memref<4x128xbf16, #tpu.memory_space<vmem>>, %arg4: memref<1x128xf32, #tpu.memory_space<vmem>>, %arg5: memref<1x128xf32, #tpu.memory_space<vmem>>, %arg6: memref<256x128xbf16, #tpu.memory_space<vmem>>) attributes {dimension_semantics = [#tpu.dimension_semantics<parallel>, #tpu.dimension_semantics<parallel>], iteration_bounds = array<i64: 1, 2>, scalar_prefetch = 0 : i64, scratch_operands = 0 : i64, tpu.core_type = #tpu.core_type<tc>, window_params = [{transform_indices = @transform_0, window_bounds = array<i64: 256, 4>}, {transform_indices = @transform_1, window_bounds = array<i64: 4, 128>}, {transform_indices = @transform_2, window_bounds = array<i64: 1, 128>}, {transform_indices = @transform_3, window_bounds = array<i64: 1, 128>}, {transform_indices = @transform_4, window_bounds = array<i64: 256, 128>}]} {
    %c0 = arith.constant 0 : index
    %c0_0 = arith.constant 0 : index
    %0 = vector.load %arg2[%c0, %c0_0] : memref<256x4xbf16, #tpu.memory_space<vmem>>, vector<256x4xbf16>
    %c0_1 = arith.constant 0 : index
    %c0_2 = arith.constant 0 : index
    %1 = vector.load %arg3[%c0_1, %c0_2] : memref<4x128xbf16, #tpu.memory_space<vmem>>, vector<4x128xbf16>
    %cst = arith.constant dense<0.000000e+00> : vector<256x128xf32>
    %2 = tpu.matmul %0, %1, %cst {dimension_numbers = #tpu.dot_dimension_numbers<[1], [0], [0], [1], [0, 0, 1, 1], [], []>} : vector<256x4xbf16>, vector<4x128xbf16>, vector<256x128xf32> -> vector<256x128xf32>
    %c0_3 = arith.constant 0 : index
    %c0_4 = arith.constant 0 : index
    %3 = vector.load %arg4[%c0_3, %c0_4] : memref<1x128xf32, #tpu.memory_space<vmem>>, vector<1x128xf32>
    %4 = vector.broadcast %3 : vector<1x128xf32> to vector<256x128xf32>
    %5 = arith.addf %2, %4 : vector<256x128xf32>
    %cst_5 = arith.constant 0.000000e+00 : f32
    %6 = vector.broadcast %cst_5 : f32 to vector<256x128xf32>
    %7 = arith.cmpf ogt, %5, %6 : vector<256x128xf32>
    %c0_6 = arith.constant 0 : index
    %c0_7 = arith.constant 0 : index
    %8 = vector.load %arg5[%c0_6, %c0_7] : memref<1x128xf32, #tpu.memory_space<vmem>>, vector<1x128xf32>
    %9 = vector.broadcast %8 : vector<1x128xf32> to vector<256x128xf32>
    %10 = arith.mulf %9, %5 : vector<256x128xf32>
    %11 = arith.select %7, %5, %10 : vector<256x128xi1>, vector<256x128xf32>
    %12 = arith.truncf %11 : vector<256x128xf32> to vector<256x128xbf16>
    %c0_8 = arith.constant 0 : index
    %c0_9 = arith.constant 0 : index
    %13 = vector.load %arg6[%c0_8, %c0_9] : memref<256x128xbf16, #tpu.memory_space<vmem>>, vector<256x128xbf16>
    tpu.vector_store %arg6[%c0_8, %c0_9], %12 {strides = array<i32>} : memref<256x128xbf16, #tpu.memory_space<vmem>>, vector<256x128xbf16>,
    return
  }
  func.func @transform_0(%arg0: i32, %arg1: i32) -> (i32, i32) {
    %c0_i32 = arith.constant 0 : i32
    %c0_i32_0 = arith.constant 0 : i32
    return %arg1, %c0_i32 : i32, i32
  }
  func.func @transform_1(%arg0: i32, %arg1: i32) -> (i32, i32) {
    %c0_i32 = arith.constant 0 : i32
    %c0_i32_0 = arith.constant 0 : i32
    return %c0_i32, %arg0 : i32, i32
  }
  func.func @transform_2(%arg0: i32, %arg1: i32) -> (i32, i32) {
    %c0_i32 = arith.constant 0 : i32
    %c0_i32_0 = arith.constant 0 : i32
    return %c0_i32, %arg0 : i32, i32
  }
  func.func @transform_3(%arg0: i32, %arg1: i32) -> (i32, i32) {
    %c0_i32 = arith.constant 0 : i32
    %c0_i32_0 = arith.constant 0 : i32
    return %c0_i32, %arg0 : i32, i32
  }
  func.func @transform_4(%arg0: i32, %arg1: i32) -> (i32, i32) {
    %c0_i32 = arith.constant 0 : i32
    return %arg1, %arg0 : i32, i32
  }
}

module attributes {stable_mosaic.version = 11 : i64} {
  func.func @_mm_prelu_kernel(%arg0: i32, %arg1: i32, %arg2: memref<256x72xbf16, #tpu.memory_space<vmem>>, %arg3: memref<72x128xbf16, #tpu.memory_space<vmem>>, %arg4: memref<1x128xf32, #tpu.memory_space<vmem>>, %arg5: memref<1x128xf32, #tpu.memory_space<vmem>>, %arg6: memref<256x128xbf16, #tpu.memory_space<vmem>>) attributes {dimension_semantics = [#tpu.dimension_semantics<parallel>, #tpu.dimension_semantics<parallel>], iteration_bounds = array<i64: 1, 2>, scalar_prefetch = 0 : i64, scratch_operands = 0 : i64, tpu.core_type = #tpu.core_type<tc>, window_params = [{transform_indices = @transform_0, window_bounds = array<i64: 256, 72>}, {transform_indices = @transform_1, window_bounds = array<i64: 72, 128>}, {transform_indices = @transform_2, window_bounds = array<i64: 1, 128>}, {transform_indices = @transform_3, window_bounds = array<i64: 1, 128>}, {transform_indices = @transform_4, window_bounds = array<i64: 256, 128>}]} {
    %c0 = arith.constant 0 : index
    %c0_0 = arith.constant 0 : index
    %0 = vector.load %arg2[%c0, %c0_0] : memref<256x72xbf16, #tpu.memory_space<vmem>>, vector<256x72xbf16>
    %c0_1 = arith.constant 0 : index
    %c0_2 = arith.constant 0 : index
    %1 = vector.load %arg3[%c0_1, %c0_2] : memref<72x128xbf16, #tpu.memory_space<vmem>>, vector<72x128xbf16>
    %cst = arith.constant dense<0.000000e+00> : vector<256x128xf32>
    %2 = tpu.matmul %0, %1, %cst {dimension_numbers = #tpu.dot_dimension_numbers<[1], [0], [0], [1], [0, 0, 1, 1], [], []>} : vector<256x72xbf16>, vector<72x128xbf16>, vector<256x128xf32> -> vector<256x128xf32>
    %c0_3 = arith.constant 0 : index
    %c0_4 = arith.constant 0 : index
    %3 = vector.load %arg4[%c0_3, %c0_4] : memref<1x128xf32, #tpu.memory_space<vmem>>, vector<1x128xf32>
    %4 = vector.broadcast %3 : vector<1x128xf32> to vector<256x128xf32>
    %5 = arith.addf %2, %4 : vector<256x128xf32>
    %cst_5 = arith.constant 0.000000e+00 : f32
    %6 = vector.broadcast %cst_5 : f32 to vector<256x128xf32>
    %7 = arith.cmpf ogt, %5, %6 : vector<256x128xf32>
    %c0_6 = arith.constant 0 : index
    %c0_7 = arith.constant 0 : index
    %8 = vector.load %arg5[%c0_6, %c0_7] : memref<1x128xf32, #tpu.memory_space<vmem>>, vector<1x128xf32>
    %9 = vector.broadcast %8 : vector<1x128xf32> to vector<256x128xf32>
    %10 = arith.mulf %9, %5 : vector<256x128xf32>
    %11 = arith.select %7, %5, %10 : vector<256x128xi1>, vector<256x128xf32>
    %12 = arith.truncf %11 : vector<256x128xf32> to vector<256x128xbf16>
    %c0_8 = arith.constant 0 : index
    %c0_9 = arith.constant 0 : index
    %13 = vector.load %arg6[%c0_8, %c0_9] : memref<256x128xbf16, #tpu.memory_space<vmem>>, vector<256x128xbf16>
    tpu.vector_store %arg6[%c0_8, %c0_9], %12 {strides = array<i32>} : memref<256x128xbf16, #tpu.memory_space<vmem>>, vector<256x128xbf16>,
    return
  }
  func.func @transform_0(%arg0: i32, %arg1: i32) -> (i32, i32) {
    %c0_i32 = arith.constant 0 : i32
    %c0_i32_0 = arith.constant 0 : i32
    return %arg1, %c0_i32 : i32, i32
  }
  func.func @transform_1(%arg0: i32, %arg1: i32) -> (i32, i32) {
    %c0_i32 = arith.constant 0 : i32
    %c0_i32_0 = arith.constant 0 : i32
    return %c0_i32, %arg0 : i32, i32
  }
  func.func @transform_2(%arg0: i32, %arg1: i32) -> (i32, i32) {
    %c0_i32 = arith.constant 0 : i32
    %c0_i32_0 = arith.constant 0 : i32
    return %c0_i32, %arg0 : i32, i32
  }
  func.func @transform_3(%arg0: i32, %arg1: i32) -> (i32, i32) {
    %c0_i32 = arith.constant 0 : i32
    %c0_i32_0 = arith.constant 0 : i32
    return %c0_i32, %arg0 : i32, i32
  }
  func.func @transform_4(%arg0: i32, %arg1: i32) -> (i32, i32) {
    %c0_i32 = arith.constant 0 : i32
    return %arg1, %arg0 : i32, i32
  }
}

module attributes {stable_mosaic.version = 11 : i64} {
  func.func @_mm_prelu_res_kernel(%arg0: i32, %arg1: i32, %arg2: memref<256x288xbf16, #tpu.memory_space<vmem>>, %arg3: memref<288x128xbf16, #tpu.memory_space<vmem>>, %arg4: memref<1x128xf32, #tpu.memory_space<vmem>>, %arg5: memref<1x128xf32, #tpu.memory_space<vmem>>, %arg6: memref<256x128xbf16, #tpu.memory_space<vmem>>, %arg7: memref<256x128xbf16, #tpu.memory_space<vmem>>) attributes {dimension_semantics = [#tpu.dimension_semantics<parallel>, #tpu.dimension_semantics<parallel>], iteration_bounds = array<i64: 1, 2>, scalar_prefetch = 0 : i64, scratch_operands = 0 : i64, tpu.core_type = #tpu.core_type<tc>, window_params = [{transform_indices = @transform_0, window_bounds = array<i64: 256, 288>}, {transform_indices = @transform_1, window_bounds = array<i64: 288, 128>}, {transform_indices = @transform_2, window_bounds = array<i64: 1, 128>}, {transform_indices = @transform_3, window_bounds = array<i64: 1, 128>}, {transform_indices = @transform_4, window_bounds = array<i64: 256, 128>}, {transform_indices = @transform_5, window_bounds = array<i64: 256, 128>}]} {
    %c0 = arith.constant 0 : index
    %c0_0 = arith.constant 0 : index
    %0 = vector.load %arg2[%c0, %c0_0] : memref<256x288xbf16, #tpu.memory_space<vmem>>, vector<256x288xbf16>
    %c0_1 = arith.constant 0 : index
    %c0_2 = arith.constant 0 : index
    %1 = vector.load %arg3[%c0_1, %c0_2] : memref<288x128xbf16, #tpu.memory_space<vmem>>, vector<288x128xbf16>
    %cst = arith.constant dense<0.000000e+00> : vector<256x128xf32>
    %2 = tpu.matmul %0, %1, %cst {dimension_numbers = #tpu.dot_dimension_numbers<[1], [0], [0], [1], [0, 0, 1, 1], [], []>} : vector<256x288xbf16>, vector<288x128xbf16>, vector<256x128xf32> -> vector<256x128xf32>
    %c0_3 = arith.constant 0 : index
    %c0_4 = arith.constant 0 : index
    %3 = vector.load %arg4[%c0_3, %c0_4] : memref<1x128xf32, #tpu.memory_space<vmem>>, vector<1x128xf32>
    %4 = vector.broadcast %3 : vector<1x128xf32> to vector<256x128xf32>
    %5 = arith.addf %2, %4 : vector<256x128xf32>
    %cst_5 = arith.constant 0.000000e+00 : f32
    %6 = vector.broadcast %cst_5 : f32 to vector<256x128xf32>
    %7 = arith.cmpf ogt, %5, %6 : vector<256x128xf32>
    %c0_6 = arith.constant 0 : index
    %c0_7 = arith.constant 0 : index
    %8 = vector.load %arg5[%c0_6, %c0_7] : memref<1x128xf32, #tpu.memory_space<vmem>>, vector<1x128xf32>
    %9 = vector.broadcast %8 : vector<1x128xf32> to vector<256x128xf32>
    %10 = arith.mulf %9, %5 : vector<256x128xf32>
    %11 = arith.select %7, %5, %10 : vector<256x128xi1>, vector<256x128xf32>
    %c0_8 = arith.constant 0 : index
    %c0_9 = arith.constant 0 : index
    %12 = vector.load %arg6[%c0_8, %c0_9] : memref<256x128xbf16, #tpu.memory_space<vmem>>, vector<256x128xbf16>
    %13 = arith.extf %12 : vector<256x128xbf16> to vector<256x128xf32>
    %cst_10 = arith.constant -1.000000e+00 : f32
    %14 = vector.broadcast %cst_10 : f32 to vector<256x128xf32>
    %15 = arith.mulf %14, %13 : vector<256x128xf32>
    %16 = arith.addf %11, %15 : vector<256x128xf32>
    %17 = arith.truncf %16 : vector<256x128xf32> to vector<256x128xbf16>
    %c0_11 = arith.constant 0 : index
    %c0_12 = arith.constant 0 : index
    %18 = vector.load %arg7[%c0_11, %c0_12] : memref<256x128xbf16, #tpu.memory_space<vmem>>, vector<256x128xbf16>
    tpu.vector_store %arg7[%c0_11, %c0_12], %17 {strides = array<i32>} : memref<256x128xbf16, #tpu.memory_space<vmem>>, vector<256x128xbf16>,
    return
  }
  func.func @transform_0(%arg0: i32, %arg1: i32) -> (i32, i32) {
    %c0_i32 = arith.constant 0 : i32
    %c0_i32_0 = arith.constant 0 : i32
    return %arg1, %c0_i32 : i32, i32
  }
  func.func @transform_1(%arg0: i32, %arg1: i32) -> (i32, i32) {
    %c0_i32 = arith.constant 0 : i32
    %c0_i32_0 = arith.constant 0 : i32
    return %c0_i32, %arg0 : i32, i32
  }
  func.func @transform_2(%arg0: i32, %arg1: i32) -> (i32, i32) {
    %c0_i32 = arith.constant 0 : i32
    %c0_i32_0 = arith.constant 0 : i32
    return %c0_i32, %arg0 : i32, i32
  }
  func.func @transform_3(%arg0: i32, %arg1: i32) -> (i32, i32) {
    %c0_i32 = arith.constant 0 : i32
    %c0_i32_0 = arith.constant 0 : i32
    return %c0_i32, %arg0 : i32, i32
  }
  func.func @transform_4(%arg0: i32, %arg1: i32) -> (i32, i32) {
    %c0_i32 = arith.constant 0 : i32
    return %arg1, %arg0 : i32, i32
  }
  func.func @transform_5(%arg0: i32, %arg1: i32) -> (i32, i32) {
    %c0_i32 = arith.constant 0 : i32
    return %arg1, %arg0 : i32, i32
  }
}

module attributes {stable_mosaic.version = 11 : i64} {
  func.func @_mm_prelu_res_kernel(%arg0: i32, %arg1: i32, %arg2: memref<256x72xbf16, #tpu.memory_space<vmem>>, %arg3: memref<72x128xbf16, #tpu.memory_space<vmem>>, %arg4: memref<1x128xf32, #tpu.memory_space<vmem>>, %arg5: memref<1x128xf32, #tpu.memory_space<vmem>>, %arg6: memref<256x128xbf16, #tpu.memory_space<vmem>>, %arg7: memref<256x128xbf16, #tpu.memory_space<vmem>>) attributes {dimension_semantics = [#tpu.dimension_semantics<parallel>, #tpu.dimension_semantics<parallel>], iteration_bounds = array<i64: 1, 2>, scalar_prefetch = 0 : i64, scratch_operands = 0 : i64, tpu.core_type = #tpu.core_type<tc>, window_params = [{transform_indices = @transform_0, window_bounds = array<i64: 256, 72>}, {transform_indices = @transform_1, window_bounds = array<i64: 72, 128>}, {transform_indices = @transform_2, window_bounds = array<i64: 1, 128>}, {transform_indices = @transform_3, window_bounds = array<i64: 1, 128>}, {transform_indices = @transform_4, window_bounds = array<i64: 256, 128>}, {transform_indices = @transform_5, window_bounds = array<i64: 256, 128>}]} {
    %c0 = arith.constant 0 : index
    %c0_0 = arith.constant 0 : index
    %0 = vector.load %arg2[%c0, %c0_0] : memref<256x72xbf16, #tpu.memory_space<vmem>>, vector<256x72xbf16>
    %c0_1 = arith.constant 0 : index
    %c0_2 = arith.constant 0 : index
    %1 = vector.load %arg3[%c0_1, %c0_2] : memref<72x128xbf16, #tpu.memory_space<vmem>>, vector<72x128xbf16>
    %cst = arith.constant dense<0.000000e+00> : vector<256x128xf32>
    %2 = tpu.matmul %0, %1, %cst {dimension_numbers = #tpu.dot_dimension_numbers<[1], [0], [0], [1], [0, 0, 1, 1], [], []>} : vector<256x72xbf16>, vector<72x128xbf16>, vector<256x128xf32> -> vector<256x128xf32>
    %c0_3 = arith.constant 0 : index
    %c0_4 = arith.constant 0 : index
    %3 = vector.load %arg4[%c0_3, %c0_4] : memref<1x128xf32, #tpu.memory_space<vmem>>, vector<1x128xf32>
    %4 = vector.broadcast %3 : vector<1x128xf32> to vector<256x128xf32>
    %5 = arith.addf %2, %4 : vector<256x128xf32>
    %cst_5 = arith.constant 0.000000e+00 : f32
    %6 = vector.broadcast %cst_5 : f32 to vector<256x128xf32>
    %7 = arith.cmpf ogt, %5, %6 : vector<256x128xf32>
    %c0_6 = arith.constant 0 : index
    %c0_7 = arith.constant 0 : index
    %8 = vector.load %arg5[%c0_6, %c0_7] : memref<1x128xf32, #tpu.memory_space<vmem>>, vector<1x128xf32>
    %9 = vector.broadcast %8 : vector<1x128xf32> to vector<256x128xf32>
    %10 = arith.mulf %9, %5 : vector<256x128xf32>
    %11 = arith.select %7, %5, %10 : vector<256x128xi1>, vector<256x128xf32>
    %c0_8 = arith.constant 0 : index
    %c0_9 = arith.constant 0 : index
    %12 = vector.load %arg6[%c0_8, %c0_9] : memref<256x128xbf16, #tpu.memory_space<vmem>>, vector<256x128xbf16>
    %13 = arith.extf %12 : vector<256x128xbf16> to vector<256x128xf32>
    %cst_10 = arith.constant 1.000000e+00 : f32
    %14 = vector.broadcast %cst_10 : f32 to vector<256x128xf32>
    %15 = arith.mulf %14, %13 : vector<256x128xf32>
    %16 = arith.addf %11, %15 : vector<256x128xf32>
    %17 = arith.truncf %16 : vector<256x128xf32> to vector<256x128xbf16>
    %c0_11 = arith.constant 0 : index
    %c0_12 = arith.constant 0 : index
    %18 = vector.load %arg7[%c0_11, %c0_12] : memref<256x128xbf16, #tpu.memory_space<vmem>>, vector<256x128xbf16>
    tpu.vector_store %arg7[%c0_11, %c0_12], %17 {strides = array<i32>} : memref<256x128xbf16, #tpu.memory_space<vmem>>, vector<256x128xbf16>,
    return
  }
  func.func @transform_0(%arg0: i32, %arg1: i32) -> (i32, i32) {
    %c0_i32 = arith.constant 0 : i32
    %c0_i32_0 = arith.constant 0 : i32
    return %arg1, %c0_i32 : i32, i32
  }
  func.func @transform_1(%arg0: i32, %arg1: i32) -> (i32, i32) {
    %c0_i32 = arith.constant 0 : i32
    %c0_i32_0 = arith.constant 0 : i32
    return %c0_i32, %arg0 : i32, i32
  }
  func.func @transform_2(%arg0: i32, %arg1: i32) -> (i32, i32) {
    %c0_i32 = arith.constant 0 : i32
    %c0_i32_0 = arith.constant 0 : i32
    return %c0_i32, %arg0 : i32, i32
  }
  func.func @transform_3(%arg0: i32, %arg1: i32) -> (i32, i32) {
    %c0_i32 = arith.constant 0 : i32
    %c0_i32_0 = arith.constant 0 : i32
    return %c0_i32, %arg0 : i32, i32
  }
  func.func @transform_4(%arg0: i32, %arg1: i32) -> (i32, i32) {
    %c0_i32 = arith.constant 0 : i32
    return %arg1, %arg0 : i32, i32
  }
  func.func @transform_5(%arg0: i32, %arg1: i32) -> (i32, i32) {
    %c0_i32 = arith.constant 0 : i32
    return %arg1, %arg0 : i32, i32
  }
}

</mosaic_0001>

<llo_original>
// kernel: dense_projection_forward.4
$region0: #{dense_projection_forward.4}
  #allocation0 [shape = 'u32[]', space=smem, size = 0x4, offset = 0x4, fixed_abs, tag = 'smem constant byte address 0x4 - core index']
  #allocation1 [shape = 'u32[72,128]{1,0:T(1,128)}', space=vmem, size = 0x9000, scoped, tag = 'internal scratch']
  %s0 = inlined_call_operand.vmem [shape: bf16[512,4], index: 0, kind: input, shape index: {}]
  %s1 = inlined_call_operand.hbm [shape: bf16[4,128], index: 1, kind: input, shape index: {}]
  %s2 = inlined_call_operand.hbm [shape: f32[1,128], index: 2, kind: input, shape index: {}]
  %s3 = inlined_call_operand.hbm [shape: f32[1,128], index: 3, kind: input, shape index: {}]
  %s4 = inlined_call_operand.vmem [shape: bf16[512,128], index: 4, kind: output, shape index: {}]
  %s5 = sld [smem:[#allocation0]]
  $region61: #{dense_projection_forward.4} parent=0
    _
  %s7 = ssub.s32 1, %s5
  %s8 = scalar_select 0, %s7, %s5
  $region1: #{dense_projection_forward.4} parent=0
    #allocation2 [shape = 'u8[1024]{0}', space=vmem, size = 0x400, scoped, tag = 'input window, operand 1, single buffered']
    #allocation3 [shape = 's32[2]{0}', space=sflag, size = 0x8, scoped, tag = 'scoped memory for dense_projection_forward.4']
    #allocation4 [shape = 'u8[512]{0}', space=vmem, size = 0x400, scoped, tag = 'input window, operand 2, single buffered']
    #allocation5 [shape = 's32[1]{0}', space=sflag, size = 0x4, scoped, tag = 'scoped memory for dense_projection_forward.4']
    #allocation6 [shape = 'u8[512]{0}', space=vmem, size = 0x400, scoped, tag = 'input window, operand 3, single buffered']
    %9 = vsyncpa [#allocation3], 0
    %10 = vsyncpa [#allocation5], 0
    loop: start=0, step=1, limit=4
    $region2: #{dense_projection_forward.4} parent=1 // loop_pre_header
      _
    $region3: #{dense_projection_forward.4} parent=1 // loop_header
      %s12 = sphi 0, %s16
      %p13 = scmp.ge.s32.totalorder %s12, 4
      %s19 = sphi 0, %s31
      %s20 = sphi 0, %s27
      %s21 = sphi 0, %s19
      %s22 = sphi 0, %s20
      %s23 = sphi 0, %s21
      %s24 = sphi 0, %s22
      %s34 = sphi 0, %s36
      %s37 = sphi 0, %s34
      %s38 = sphi 0, %s37
      %s54 = sphi 0, %s38
      %s60 = sphi 0, %s62
      %s63 = sphi 0, %s60
      %s64 = sphi 0, %s63
      %s80 = sphi 0, %s64
      %s86 = sphi 0, %s88
      %s89 = sphi 0, %s86
      %s90 = sphi 0, %s89
      %s106 = sphi 0, %s90
      %s112 = sphi 0, %s114
      %s115 = sphi 0, %s112
      %s116 = sphi 0, %s115
      %s132 = sphi 0, %s116
      %s140 = sphi 0, %s142
      %s143 = sphi 0, %s140
      %s144 = sphi 0, %s143
      %s160 = sphi 0, %s144
    $region4: #{dense_projection_forward.4} parent=1 // loop_header_branch
      %15 = sbr.rel (%p13) target = $region8
    $region5: #{dense_projection_forward.4} parent=1 // loop_body
      %s17 = ssub.s32 %s12, 1
      %s18 = ssub.s32 %s12, 2
      %s25 = sadd.s32 1, %s20
      %p26 = scmp.ge.s32.totalorder %s25, 2
      %s27 = scalar_select %p26, 0, %s25
      %s28 = sadd.s32 1, %s19
      %s29 = scalar_select %p26, %s28, %s19
      %p30 = scmp.ge.s32.totalorder %s29, 1
      %s31 = scalar_select %p30, 0, %s29
      %s32 = ssub.s32 %s20, %s27
      %p33 = scmp.eq.s32.totalorder %s32, 0
      %s35 = sadd.s32 %s34, 1
      %s36 = scalar_select %p33, %s34, %s35
      %p39 = pneg %p33
      %p40 = scmp.eq.s32.totalorder %s12, 1
      %p41 = por %p39, %p40
      %p42 = scmp.ne.s32.totalorder %s34, %s37
      %p43 = scmp.eq.s32.totalorder %s12, 0
      %p44 = por %p42, %p43
      %p45 = scmp.ne.s32.totalorder %s34, %s37
      %p46 = scmp.eq.s32.totalorder %s17, 1
      %p47 = por %p45, %p46
      %p48 = scmp.ne.s32.totalorder %s37, %s38
      %p49 = scmp.eq.s32.totalorder %s17, 0
      %p50 = por %p48, %p49
      %p51 = scmp.ne.s32.totalorder %s37, %s38
      %p52 = scmp.eq.s32.totalorder %s18, 1
      %p53 = por %p51, %p52
      %p55 = scmp.ne.s32.totalorder %s38, %s54
      %p56 = scmp.eq.s32.totalorder %s18, 0
      %p57 = por %p55, %p56
      %s58 = ssub.s32 %s19, %s31
      %p59 = scmp.eq.s32.totalorder %s58, 0
      %s61 = sadd.s32 %s60, 1
      %s62 = scalar_select %p59, %s60, %s61
      %p65 = pneg %p59
      %p66 = scmp.eq.s32.totalorder %s12, 1
      %p67 = por %p65, %p66
      %p68 = scmp.ne.s32.totalorder %s60, %s63
      %p69 = scmp.eq.s32.totalorder %s12, 0
      %p70 = por %p68, %p69
      %p71 = scmp.ne.s32.totalorder %s60, %s63
      %p72 = scmp.eq.s32.totalorder %s17, 1
      %p73 = por %p71, %p72
      %p74 = scmp.ne.s32.totalorder %s63, %s64
      %p75 = scmp.eq.s32.totalorder %s17, 0
      %p76 = por %p74, %p75
      %p77 = scmp.ne.s32.totalorder %s63, %s64
      %p78 = scmp.eq.s32.totalorder %s18, 1
      %p79 = por %p77, %p78
      %p81 = scmp.ne.s32.totalorder %s64, %s80
      %p82 = scmp.eq.s32.totalorder %s18, 0
      %p83 = por %p81, %p82
      %s84 = ssub.s32 %s19, %s31
      %p85 = scmp.eq.s32.totalorder %s84, 0
      %s87 = sadd.s32 %s86, 1
      %s88 = scalar_select %p85, %s86, %s87
      %p91 = pneg %p85
      %p92 = scmp.eq.s32.totalorder %s12, 1
      %p93 = por %p91, %p92
      %p94 = scmp.ne.s32.totalorder %s86, %s89
      %p95 = scmp.eq.s32.totalorder %s12, 0
      %p96 = por %p94, %p95
      %p97 = scmp.ne.s32.totalorder %s86, %s89
      %p98 = scmp.eq.s32.totalorder %s17, 1
      %p99 = por %p97, %p98
      %p100 = scmp.ne.s32.totalorder %s89, %s90
      %p101 = scmp.eq.s32.totalorder %s17, 0
      %p102 = por %p100, %p101
      %p103 = scmp.ne.s32.totalorder %s89, %s90
      %p104 = scmp.eq.s32.totalorder %s18, 1
      %p105 = por %p103, %p104
      %p107 = scmp.ne.s32.totalorder %s90, %s106
      %p108 = scmp.eq.s32.totalorder %s18, 0
      %p109 = por %p107, %p108
      %s110 = ssub.s32 %s19, %s31
      %p111 = scmp.eq.s32.totalorder %s110, 0
      %s113 = sadd.s32 %s112, 1
      %s114 = scalar_select %p111, %s112, %s113
      %p117 = pneg %p111
      %p118 = scmp.eq.s32.totalorder %s12, 1
      %p119 = por %p117, %p118
      %p120 = scmp.ne.s32.totalorder %s112, %s115
      %p121 = scmp.eq.s32.totalorder %s12, 0
      %p122 = por %p120, %p121
      %p123 = scmp.ne.s32.totalorder %s112, %s115
      %p124 = scmp.eq.s32.totalorder %s17, 1
      %p125 = por %p123, %p124
      %p126 = scmp.ne.s32.totalorder %s115, %s116
      %p127 = scmp.eq.s32.totalorder %s17, 0
      %p128 = por %p126, %p127
      %p129 = scmp.ne.s32.totalorder %s115, %s116
      %p130 = scmp.eq.s32.totalorder %s18, 1
      %p131 = por %p129, %p130
      %p133 = scmp.ne.s32.totalorder %s116, %s132
      %p134 = scmp.eq.s32.totalorder %s18, 0
      %p135 = por %p133, %p134
      %s136 = ssub.s32 %s20, %s27
      %s137 = ssub.s32 %s19, %s31
      %s138 = sor.u32 %s136, %s137
      %p139 = scmp.eq.s32.totalorder %s138, 0
      %s141 = sadd.s32 %s140, 1
      %s142 = scalar_select %p139, %s140, %s141
      %p145 = pneg %p139
      %p146 = scmp.eq.s32.totalorder %s12, 1
      %p147 = por %p145, %p146
      %p148 = scmp.ne.s32.totalorder %s140, %s143
      %p149 = scmp.eq.s32.totalorder %s12, 0
      %p150 = por %p148, %p149
      %p151 = scmp.ne.s32.totalorder %s140, %s143
      %p152 = scmp.eq.s32.totalorder %s17, 1
      %p153 = por %p151, %p152
      %p154 = scmp.ne.s32.totalorder %s143, %s144
      %p155 = scmp.eq.s32.totalorder %s17, 0
      %p156 = por %p154, %p155
      %p157 = scmp.ne.s32.totalorder %s143, %s144
      %p158 = scmp.eq.s32.totalorder %s18, 1
      %p159 = por %p157, %p158
      %p161 = scmp.ne.s32.totalorder %s144, %s160
      %p162 = scmp.eq.s32.totalorder %s18, 0
      %p163 = por %p161, %p162
      %p164 = scmp.le.s32.totalorder 1, %s12
      %p165 = scmp.lt.s32.totalorder %s12, 3
      %p166 = pnand %p164, %p165
      %p167 = pneg %p166
      // Predicated region
      $region9: #{dense_projection_forward.4} parent=5 // pred_check
        _
      $region10: #{dense_projection_forward.4} parent=5 // pred_check_branch
        %169 = sbr.rel (%p166) target = $region12
      $region11: #{dense_projection_forward.4} parent=5 // pred_region
        %s170 = ssub.s32 %s12, 1
        // Predicated region
        $region13: #{dense_projection_forward.4} parent=11 // pred_check
          %p171 = pneg %p76
        $region14: #{dense_projection_forward.4} parent=11 // pred_check_branch
          %173 = sbr.rel (%p171) target = $region16
        $region15: #{dense_projection_forward.4} parent=11 // pred_region
          %175 = vsyncadd [#allocation3], 0
          %s176 = smul.addr %s21, 2
          %s177 = scalar_lea.hbm %s1, %s176
          %s179 = sshll.u32 %s177, 4
          %s180 = int_to_ptr.hbm [resolvable:$true] %s179
          %s181 = sshll.u32 [#allocation2], 4
          %s182 = int_to_ptr.vmem [resolvable:$true] %s181
          %184 = dma.hbm_to_vmem [thread:$0]  %s180, 32, %s182, [#allocation3]
        $region16: #{dense_projection_forward.4} parent=11 // pred_fallthru
          _
        // Predicated region
        $region17: #{dense_projection_forward.4} parent=11 // pred_check
          %p185 = pneg %p102
        $region18: #{dense_projection_forward.4} parent=11 // pred_check_branch
          %187 = sbr.rel (%p185) target = $region20
        $region19: #{dense_projection_forward.4} parent=11 // pred_region
          %189 = vsyncadd [#allocation5], 0
          %s190 = scalar_lea.hbm %s2, %s21
          %s192 = sshll.u32 %s190, 4
          %s193 = int_to_ptr.hbm [resolvable:$true] %s192
          %s194 = sshll.u32 [#allocation4], 4
          %s195 = int_to_ptr.vmem [resolvable:$true] %s194
          %197 = dma.hbm_to_vmem [thread:$0]  %s193, 16, %s195, [#allocation5]
        $region20: #{dense_projection_forward.4} parent=11 // pred_fallthru
          _
        // Predicated region
        $region21: #{dense_projection_forward.4} parent=11 // pred_check
          %p198 = pneg %p128
        $region22: #{dense_projection_forward.4} parent=11 // pred_check_branch
          %200 = sbr.rel (%p198) target = $region24
        $region23: #{dense_projection_forward.4} parent=11 // pred_region
          %202 = vsyncadd [#allocation5], 0
          %s203 = scalar_lea.hbm %s3, %s21
          %s205 = sshll.u32 %s203, 4
          %s206 = int_to_ptr.hbm [resolvable:$true] %s205
          %s207 = sshll.u32 [#allocation6], 4
          %s208 = int_to_ptr.vmem [resolvable:$true] %s207
          %210 = dma.hbm_to_vmem [thread:$0]  %s206, 16, %s208, [#allocation5]
        $region24: #{dense_projection_forward.4} parent=11 // pred_fallthru
          _
      $region12: #{dense_projection_forward.4} parent=5 // pred_fallthru
        _
      %p211 = scmp.lt.s32.totalorder %s12, 2
      // Predicated region
      $region25: #{dense_projection_forward.4} parent=5 // pred_check
        %p212 = pneg %p211
      $region26: #{dense_projection_forward.4} parent=5 // pred_check_branch
        %214 = sbr.rel (%p212) target = $region28
      $region27: #{dense_projection_forward.4} parent=5 // pred_region
        // Predicated region
        $region29: #{dense_projection_forward.4} parent=27 // pred_check
          %p215 = pneg %p44
        $region30: #{dense_projection_forward.4} parent=27 // pred_check_branch
          %217 = sbr.rel (%p215) target = $region32
        $region31: #{dense_projection_forward.4} parent=27 // pred_region
          %s218 = smul.u32 32, %s20
          %p219 = scmp.lt.s32.totalorder %s218, 63
          %s220 = scalar_select %p219, %s218, 63
          %s221 = smul.addr %s220, 4
          %s222 = scalar_lea.vmem %s0, %s221
          %s223 = smul.u32 32, %s20
        $region32: #{dense_projection_forward.4} parent=27 // pred_fallthru
          _
      $region28: #{dense_projection_forward.4} parent=5 // pred_fallthru
        _
      %p224 = scmp.le.s32.totalorder 1, %s12
      %p225 = scmp.lt.s32.totalorder %s12, 3
      %p226 = pnand %p224, %p225
      %p227 = pneg %p226
      // Predicated region
      $region33: #{dense_projection_forward.4} parent=5 // pred_check
        _
      $region34: #{dense_projection_forward.4} parent=5 // pred_check_branch
        %229 = sbr.rel (%p226) target = $region36
      $region35: #{dense_projection_forward.4} parent=5 // pred_region
        %s230 = ssub.s32 %s12, 1
        // Predicated region
        $region37: #{dense_projection_forward.4} parent=35 // pred_check
          %p231 = pneg %p76
        $region38: #{dense_projection_forward.4} parent=35 // pred_check_branch
          %233 = sbr.rel (%p231) target = $region40
        $region39: #{dense_projection_forward.4} parent=35 // pred_region
          %235 = dma.done [#allocation3], 32
        $region40: #{dense_projection_forward.4} parent=35 // pred_fallthru
          _
        // Predicated region
        $region41: #{dense_projection_forward.4} parent=35 // pred_check
          %p236 = pneg %p102
        $region42: #{dense_projection_forward.4} parent=35 // pred_check_branch
          %238 = sbr.rel (%p236) target = $region44
        $region43: #{dense_projection_forward.4} parent=35 // pred_region
          %240 = dma.done [#allocation5], 16
        $region44: #{dense_projection_forward.4} parent=35 // pred_fallthru
          _
        // Predicated region
        $region45: #{dense_projection_forward.4} parent=35 // pred_check
          %p241 = pneg %p128
        $region46: #{dense_projection_forward.4} parent=35 // pred_check_branch
          %243 = sbr.rel (%p241) target = $region48
        $region47: #{dense_projection_forward.4} parent=35 // pred_region
          %245 = dma.done [#allocation5], 16
        $region48: #{dense_projection_forward.4} parent=35 // pred_fallthru
          _
        %s246 = smul.u32 32, %s22
        %p247 = scmp.lt.s32.totalorder %s246, 63
        %s248 = scalar_select %p247, %s246, 63
        %s249 = smul.addr %s248, 4
        %s250 = scalar_lea.vmem %s0, %s249
        %p251 = pneg %p50
        %p252 = pneg %p47
        %p253 = pneg %p76
        %p254 = pneg %p73
        %p255 = pneg %p102
        %p256 = pneg %p99
        %p257 = pneg %p128
        %p258 = pneg %p125
        %p259 = pneg %p156
        %p260 = pneg %p153
        %s261 = smul.u32 32, %s22
        %p262 = scmp.lt.s32.totalorder %s261, 63
        %s263 = scalar_select %p262, %s261, 63
        %p264 = scmp.lt.s32.totalorder %s21, 0
        %s265 = scalar_select %p264, %s21, 0
        %s266 = sadd.s32 %s265, %s263
        %s267 = smul.addr %s266, 4
        %s268 = scalar_lea.vmem %s4, %s267
        %s269 = smul.u32 32, %s22
        %p270 = scmp.lt.s32.totalorder %s269, 63
        %s271 = scalar_select %p270, %s269, 63
        %s272 = smul.addr %s271, 4
        %s273 = scalar_lea.vmem %s0, %s272
        %s274 = smul.u32 32, %s22
        %s275 = smul.u32 32, %s22
        %p276 = scmp.lt.s32.totalorder %s275, 63
        %s277 = scalar_select %p276, %s275, 63
        %p278 = scmp.lt.s32.totalorder %s21, 0
        %s279 = scalar_select %p278, %s21, 0
        %s280 = sadd.s32 %s279, %s277
        %s281 = smul.addr %s280, 4
        %s282 = scalar_lea.vmem %s4, %s281
        %s283 = smul.u32 32, %s22
        %v285 = vld [vmem:[%s273] sm:$0xf]
        %v286 = vld [vmem:[%s273 + $0x4] sm:$0xf]
        %v287 = vld [vmem:[%s273 + $0x8] sm:$0xf]
        %v288 = vld [vmem:[%s273 + $0xc] sm:$0xf]
        %v289 = vld [vmem:[%s273 + $0x10] sm:$0xf]
        %v290 = vld [vmem:[%s273 + $0x14] sm:$0xf]
        %v291 = vld [vmem:[%s273 + $0x18] sm:$0xf]
        %v292 = vld [vmem:[%s273 + $0x1c] sm:$0xf]
        %v293 = vld [vmem:[%s273 + $0x20] sm:$0xf]
        %v294 = vld [vmem:[%s273 + $0x24] sm:$0xf]
        %v295 = vld [vmem:[%s273 + $0x28] sm:$0xf]
        %v296 = vld [vmem:[%s273 + $0x2c] sm:$0xf]
        %v297 = vld [vmem:[%s273 + $0x30] sm:$0xf]
        %v298 = vld [vmem:[%s273 + $0x34] sm:$0xf]
        %v299 = vld [vmem:[%s273 + $0x38] sm:$0xf]
        %v300 = vld [vmem:[%s273 + $0x3c] sm:$0xf]
        %v301 = vld [vmem:[%s273 + $0x40] sm:$0xf]
        %v302 = vld [vmem:[%s273 + $0x44] sm:$0xf]
        %v303 = vld [vmem:[%s273 + $0x48] sm:$0xf]
        %v304 = vld [vmem:[%s273 + $0x4c] sm:$0xf]
        %v305 = vld [vmem:[%s273 + $0x50] sm:$0xf]
        %v306 = vld [vmem:[%s273 + $0x54] sm:$0xf]
        %v307 = vld [vmem:[%s273 + $0x58] sm:$0xf]
        %v308 = vld [vmem:[%s273 + $0x5c] sm:$0xf]
        %v309 = vld [vmem:[%s273 + $0x60] sm:$0xf]
        %v310 = vld [vmem:[%s273 + $0x64] sm:$0xf]
        %v311 = vld [vmem:[%s273 + $0x68] sm:$0xf]
        %v312 = vld [vmem:[%s273 + $0x6c] sm:$0xf]
        %v313 = vld [vmem:[%s273 + $0x70] sm:$0xf]
        %v314 = vld [vmem:[%s273 + $0x74] sm:$0xf]
        %v315 = vld [vmem:[%s273 + $0x78] sm:$0xf]
        %v316 = vld [vmem:[%s273 + $0x7c] sm:$0xf]
        %v317 = vld [vmem:[#allocation2] sm:$0x3]
        %v318 = vld [vmem:[#allocation4] sm:$0x1]
        %v320 = vperm.slane %v318, 0
        %v354 = vunpack.c.l.b16 %v285
        %v355 = vunpack.c.l.b16 %v286
        %v356 = vunpack.c.l.b16 %v287
        %v357 = vunpack.c.l.b16 %v288
        %v358 = vunpack.c.l.b16 %v289
        %v359 = vunpack.c.l.b16 %v290
        %v360 = vunpack.c.l.b16 %v291
        %v361 = vunpack.c.l.b16 %v292
        %v362 = vunpack.c.l.b16 %v293
        %v363 = vunpack.c.l.b16 %v294
        %v364 = vunpack.c.l.b16 %v295
        %v365 = vunpack.c.l.b16 %v296
        %v366 = vunpack.c.l.b16 %v297
        %v367 = vunpack.c.l.b16 %v298
        %v368 = vunpack.c.l.b16 %v299
        %v369 = vunpack.c.l.b16 %v300
        %v370 = vunpack.c.l.b16 %v301
        %v371 = vunpack.c.l.b16 %v302
        %v372 = vunpack.c.l.b16 %v303
        %v373 = vunpack.c.l.b16 %v304
        %v374 = vunpack.c.l.b16 %v305
        %v375 = vunpack.c.l.b16 %v306
        %v376 = vunpack.c.l.b16 %v307
        %v377 = vunpack.c.l.b16 %v308
        %v378 = vunpack.c.l.b16 %v309
        %v379 = vunpack.c.l.b16 %v310
        %v380 = vunpack.c.l.b16 %v311
        %v381 = vunpack.c.l.b16 %v312
        %v382 = vunpack.c.l.b16 %v313
        %v383 = vunpack.c.l.b16 %v314
        %v384 = vunpack.c.l.b16 %v315
        %v385 = vunpack.c.l.b16 %v316
        %v386 = vpack.c.b16 %v355, %v354
        %v387 = vpack.c.b16 %v357, %v356
        %v388 = vpack.c.b16 %v359, %v358
        %v389 = vpack.c.b16 %v361, %v360
        %v390 = vpack.c.b16 %v363, %v362
        %v391 = vpack.c.b16 %v365, %v364
        %v392 = vpack.c.b16 %v367, %v366
        %v393 = vpack.c.b16 %v369, %v368
        %v394 = vpack.c.b16 %v371, %v370
        %v395 = vpack.c.b16 %v373, %v372
        %v396 = vpack.c.b16 %v375, %v374
        %v397 = vpack.c.b16 %v377, %v376
        %v398 = vpack.c.b16 %v379, %v378
        %v399 = vpack.c.b16 %v381, %v380
        %v400 = vpack.c.b16 %v383, %v382
        %v401 = vpack.c.b16 %v385, %v384
        %vm402 = vcmask 31744
        %v404 = vsel %vm402, %v386, 0
        %v407 = vsel %vm402, %v387, 0
        %v410 = vsel %vm402, %v388, 0
        %v413 = vsel %vm402, %v389, 0
        %v416 = vsel %vm402, %v390, 0
        %v419 = vsel %vm402, %v391, 0
        %v422 = vsel %vm402, %v392, 0
        %v425 = vsel %vm402, %v393, 0
        %v428 = vsel %vm402, %v394, 0
        %v431 = vsel %vm402, %v395, 0
        %v434 = vsel %vm402, %v396, 0
        %v437 = vsel %vm402, %v397, 0
        %v440 = vsel %vm402, %v398, 0
        %v443 = vsel %vm402, %v399, 0
        %v446 = vsel %vm402, %v400, 0
        %v449 = vsel %vm402, %v401, 0
        %vm451 = vcmask 1041408
        %v453 = vsel %vm451, %v317, 0
        %455 = vmatpush.bf16.msra.mxu0 0
        %456 = vmatpush.bf16.msra.mxu0 0
        %457 = vmatpush.bf16.msra.mxu0 0
        %458 = vmatpush.bf16.msra.mxu0 0
        %459 = vmatpush.bf16.msra.mxu0 0
        %460 = vmatpush.bf16.msra.mxu0 0
        %461 = vmatpush.bf16.msra.mxu0 0
        %462 = vmatpush.bf16.msra.mxu0 %v453
        %463 = vmatmul.bf16.gmra.mxu0 %v404
        %v464 = vpop.f32.mrf.mxu0
        %v465 = vadd.f32 %v320, %v464
        %v466 = vpop.f32.mrf.mxu0
        %v467 = vadd.f32 %v320, %v466
        %468 = vmatmul.bf16.gmra.mxu0 %v407
        %v469 = vpop.f32.mrf.mxu0
        %v470 = vadd.f32 %v320, %v469
        %v471 = vpop.f32.mrf.mxu0
        %v472 = vadd.f32 %v320, %v471
        %473 = vmatmul.bf16.gmra.mxu0 %v410
        %v474 = vpop.f32.mrf.mxu0
        %v475 = vadd.f32 %v320, %v474
        %v476 = vpop.f32.mrf.mxu0
        %v477 = vadd.f32 %v320, %v476
        %478 = vmatmul.bf16.gmra.mxu0 %v413
        %v479 = vpop.f32.mrf.mxu0
        %v480 = vadd.f32 %v320, %v479
        %v481 = vpop.f32.mrf.mxu0
        %v482 = vadd.f32 %v320, %v481
        %483 = vmatmul.bf16.gmra.mxu0 %v416
        %v484 = vpop.f32.mrf.mxu0
        %v485 = vadd.f32 %v320, %v484
        %v486 = vpop.f32.mrf.mxu0
        %v487 = vadd.f32 %v320, %v486
        %488 = vmatmul.bf16.gmra.mxu0 %v419
        %v489 = vpop.f32.mrf.mxu0
        %v490 = vadd.f32 %v320, %v489
        %v491 = vpop.f32.mrf.mxu0
        %v492 = vadd.f32 %v320, %v491
        %493 = vmatmul.bf16.gmra.mxu0 %v422
        %v494 = vpop.f32.mrf.mxu0
        %v495 = vadd.f32 %v320, %v494
        %v496 = vpop.f32.mrf.mxu0
        %v497 = vadd.f32 %v320, %v496
        %498 = vmatmul.bf16.gmra.mxu0 %v425
        %v499 = vpop.f32.mrf.mxu0
        %v500 = vadd.f32 %v320, %v499
        %v501 = vpop.f32.mrf.mxu0
        %v502 = vadd.f32 %v320, %v501
        %503 = vmatmul.bf16.gmra.mxu0 %v428
        %v504 = vpop.f32.mrf.mxu0
        %v505 = vadd.f32 %v320, %v504
        %v506 = vpop.f32.mrf.mxu0
        %v507 = vadd.f32 %v320, %v506
        %508 = vmatmul.bf16.gmra.mxu0 %v431
        %v509 = vpop.f32.mrf.mxu0
        %v510 = vadd.f32 %v320, %v509
        %v511 = vpop.f32.mrf.mxu0
        %v512 = vadd.f32 %v320, %v511
        %513 = vmatmul.bf16.gmra.mxu0 %v434
        %v514 = vpop.f32.mrf.mxu0
        %v515 = vadd.f32 %v320, %v514
        %v516 = vpop.f32.mrf.mxu0
        %v517 = vadd.f32 %v320, %v516
        %518 = vmatmul.bf16.gmra.mxu0 %v437
        %v519 = vpop.f32.mrf.mxu0
        %v520 = vadd.f32 %v320, %v519
        %v521 = vpop.f32.mrf.mxu0
        %v522 = vadd.f32 %v320, %v521
        %523 = vmatmul.bf16.gmra.mxu0 %v440
        %v524 = vpop.f32.mrf.mxu0
        %v525 = vadd.f32 %v320, %v524
        %v526 = vpop.f32.mrf.mxu0
        %v527 = vadd.f32 %v320, %v526
        %528 = vmatmul.bf16.gmra.mxu0 %v443
        %v529 = vpop.f32.mrf.mxu0
        %v530 = vadd.f32 %v320, %v529
        %v531 = vpop.f32.mrf.mxu0
        %v532 = vadd.f32 %v320, %v531
        %533 = vmatmul.bf16.gmra.mxu0 %v446
        %v534 = vpop.f32.mrf.mxu0
        %v535 = vadd.f32 %v320, %v534
        %v536 = vpop.f32.mrf.mxu0
        %v537 = vadd.f32 %v320, %v536
        %538 = vmatmul.bf16.gmra.mxu0 %v449
        %v539 = vpop.f32.mrf.mxu0
        %v540 = vadd.f32 %v320, %v539
        %v541 = vpop.f32.mrf.mxu0
        %v542 = vadd.f32 %v320, %v541
        %543 = vdwg.mxu0
        %vm544 = vcmp.gt.f32.partialorder %v465, 0.0
        %vm545 = vcmp.gt.f32.partialorder %v467, 0.0
        %vm546 = vcmp.gt.f32.partialorder %v470, 0.0
        %vm547 = vcmp.gt.f32.partialorder %v472, 0.0
        %vm548 = vcmp.gt.f32.partialorder %v475, 0.0
        %vm549 = vcmp.gt.f32.partialorder %v477, 0.0
        %vm550 = vcmp.gt.f32.partialorder %v480, 0.0
        %vm551 = vcmp.gt.f32.partialorder %v482, 0.0
        %vm552 = vcmp.gt.f32.partialorder %v485, 0.0
        %vm553 = vcmp.gt.f32.partialorder %v487, 0.0
        %vm554 = vcmp.gt.f32.partialorder %v490, 0.0
        %vm555 = vcmp.gt.f32.partialorder %v492, 0.0
        %vm556 = vcmp.gt.f32.partialorder %v495, 0.0
        %vm557 = vcmp.gt.f32.partialorder %v497, 0.0
        %vm558 = vcmp.gt.f32.partialorder %v500, 0.0
        %vm559 = vcmp.gt.f32.partialorder %v502, 0.0
        %vm560 = vcmp.gt.f32.partialorder %v505, 0.0
        %vm561 = vcmp.gt.f32.partialorder %v507, 0.0
        %vm562 = vcmp.gt.f32.partialorder %v510, 0.0
        %vm563 = vcmp.gt.f32.partialorder %v512, 0.0
        %vm564 = vcmp.gt.f32.partialorder %v515, 0.0
        %vm565 = vcmp.gt.f32.partialorder %v517, 0.0
        %vm566 = vcmp.gt.f32.partialorder %v520, 0.0
        %vm567 = vcmp.gt.f32.partialorder %v522, 0.0
        %vm568 = vcmp.gt.f32.partialorder %v525, 0.0
        %vm569 = vcmp.gt.f32.partialorder %v527, 0.0
        %vm570 = vcmp.gt.f32.partialorder %v530, 0.0
        %vm571 = vcmp.gt.f32.partialorder %v532, 0.0
        %vm572 = vcmp.gt.f32.partialorder %v535, 0.0
        %vm573 = vcmp.gt.f32.partialorder %v537, 0.0
        %vm574 = vcmp.gt.f32.partialorder %v540, 0.0
        %vm575 = vcmp.gt.f32.partialorder %v542, 0.0
        %v576 = vld [vmem:[#allocation6] sm:$0x1]
        %v578 = vperm.slane %v576, 0
        %v580 = vmul.f32 %v578, %v465
        %v581 = vmul.f32 %v578, %v467
        %v582 = vmul.f32 %v578, %v470
        %v583 = vmul.f32 %v578, %v472
        %v584 = vmul.f32 %v578, %v475
        %v585 = vmul.f32 %v578, %v477
        %v586 = vmul.f32 %v578, %v480
        %v587 = vmul.f32 %v578, %v482
        %v588 = vmul.f32 %v578, %v485
        %v589 = vmul.f32 %v578, %v487
        %v590 = vmul.f32 %v578, %v490
        %v591 = vmul.f32 %v578, %v492
        %v592 = vmul.f32 %v578, %v495
        %v593 = vmul.f32 %v578, %v497
        %v594 = vmul.f32 %v578, %v500
        %v595 = vmul.f32 %v578, %v502
        %v596 = vmul.f32 %v578, %v505
        %v597 = vmul.f32 %v578, %v507
        %v598 = vmul.f32 %v578, %v510
        %v599 = vmul.f32 %v578, %v512
        %v600 = vmul.f32 %v578, %v515
        %v601 = vmul.f32 %v578, %v517
        %v602 = vmul.f32 %v578, %v520
        %v603 = vmul.f32 %v578, %v522
        %v604 = vmul.f32 %v578, %v525
        %v605 = vmul.f32 %v578, %v527
        %v606 = vmul.f32 %v578, %v530
        %v607 = vmul.f32 %v578, %v532
        %v608 = vmul.f32 %v578, %v535
        %v609 = vmul.f32 %v578, %v537
        %v610 = vmul.f32 %v578, %v540
        %v611 = vmul.f32 %v578, %v542
        %v612 = vsel %vm544, %v465, %v580
        %v613 = vsel %vm545, %v467, %v581
        %v614 = vsel %vm546, %v470, %v582
        %v615 = vsel %vm547, %v472, %v583
        %v616 = vsel %vm548, %v475, %v584
        %v617 = vsel %vm549, %v477, %v585
        %v618 = vsel %vm550, %v480, %v586
        %v619 = vsel %vm551, %v482, %v587
        %v620 = vsel %vm552, %v485, %v588
        %v621 = vsel %vm553, %v487, %v589
        %v622 = vsel %vm554, %v490, %v590
        %v623 = vsel %vm555, %v492, %v591
        %v624 = vsel %vm556, %v495, %v592
        %v625 = vsel %vm557, %v497, %v593
        %v626 = vsel %vm558, %v500, %v594
        %v627 = vsel %vm559, %v502, %v595
        %v628 = vsel %vm560, %v505, %v596
        %v629 = vsel %vm561, %v507, %v597
        %v630 = vsel %vm562, %v510, %v598
        %v631 = vsel %vm563, %v512, %v599
        %v632 = vsel %vm564, %v515, %v600
        %v633 = vsel %vm565, %v517, %v601
        %v634 = vsel %vm566, %v520, %v602
        %v635 = vsel %vm567, %v522, %v603
        %v636 = vsel %vm568, %v525, %v604
        %v637 = vsel %vm569, %v527, %v605
        %v638 = vsel %vm570, %v530, %v606
        %v639 = vsel %vm571, %v532, %v607
        %v640 = vsel %vm572, %v535, %v608
        %v641 = vsel %vm573, %v537, %v609
        %v642 = vsel %vm574, %v540, %v610
        %v643 = vsel %vm575, %v542, %v611
        %v644 = vpack.c.bf16 %v612, %v612
        %v645 = vpack.c.bf16 %v613, %v613
        %v646 = vpack.c.bf16 %v614, %v614
        %v647 = vpack.c.bf16 %v615, %v615
        %v648 = vpack.c.bf16 %v616, %v616
        %v649 = vpack.c.bf16 %v617, %v617
        %v650 = vpack.c.bf16 %v618, %v618
        %v651 = vpack.c.bf16 %v619, %v619
        %v652 = vpack.c.bf16 %v620, %v620
        %v653 = vpack.c.bf16 %v621, %v621
        %v654 = vpack.c.bf16 %v622, %v622
        %v655 = vpack.c.bf16 %v623, %v623
        %v656 = vpack.c.bf16 %v624, %v624
        %v657 = vpack.c.bf16 %v625, %v625
        %v658 = vpack.c.bf16 %v626, %v626
        %v659 = vpack.c.bf16 %v627, %v627
        %v660 = vpack.c.bf16 %v628, %v628
        %v661 = vpack.c.bf16 %v629, %v629
        %v662 = vpack.c.bf16 %v630, %v630
        %v663 = vpack.c.bf16 %v631, %v631
        %v664 = vpack.c.bf16 %v632, %v632
        %v665 = vpack.c.bf16 %v633, %v633
        %v666 = vpack.c.bf16 %v634, %v634
        %v667 = vpack.c.bf16 %v635, %v635
        %v668 = vpack.c.bf16 %v636, %v636
        %v669 = vpack.c.bf16 %v637, %v637
        %v670 = vpack.c.bf16 %v638, %v638
        %v671 = vpack.c.bf16 %v639, %v639
        %v672 = vpack.c.bf16 %v640, %v640
        %v673 = vpack.c.bf16 %v641, %v641
        %v674 = vpack.c.bf16 %v642, %v642
        %v675 = vpack.c.bf16 %v643, %v643
        %676 = vst [vmem:[%s282] sm:$0xf] %v644
        %677 = vst [vmem:[%s282 + $0x4] sm:$0xf] %v645
        %678 = vst [vmem:[%s282 + $0x8] sm:$0xf] %v646
        %679 = vst [vmem:[%s282 + $0xc] sm:$0xf] %v647
        %680 = vst [vmem:[%s282 + $0x10] sm:$0xf] %v648
        %681 = vst [vmem:[%s282 + $0x14] sm:$0xf] %v649
        %682 = vst [vmem:[%s282 + $0x18] sm:$0xf] %v650
        %683 = vst [vmem:[%s282 + $0x1c] sm:$0xf] %v651
        %684 = vst [vmem:[%s282 + $0x20] sm:$0xf] %v652
        %685 = vst [vmem:[%s282 + $0x24] sm:$0xf] %v653
        %686 = vst [vmem:[%s282 + $0x28] sm:$0xf] %v654
        %687 = vst [vmem:[%s282 + $0x2c] sm:$0xf] %v655
        %688 = vst [vmem:[%s282 + $0x30] sm:$0xf] %v656
        %689 = vst [vmem:[%s282 + $0x34] sm:$0xf] %v657
        %690 = vst [vmem:[%s282 + $0x38] sm:$0xf] %v658
        %691 = vst [vmem:[%s282 + $0x3c] sm:$0xf] %v659
        %692 = vst [vmem:[%s282 + $0x40] sm:$0xf] %v660
        %693 = vst [vmem:[%s282 + $0x44] sm:$0xf] %v661
        %694 = vst [vmem:[%s282 + $0x48] sm:$0xf] %v662
        %695 = vst [vmem:[%s282 + $0x4c] sm:$0xf] %v663
        %696 = vst [vmem:[%s282 + $0x50] sm:$0xf] %v664
        %697 = vst [vmem:[%s282 + $0x54] sm:$0xf] %v665
        %698 = vst [vmem:[%s282 + $0x58] sm:$0xf] %v666
        %699 = vst [vmem:[%s282 + $0x5c] sm:$0xf] %v667
        %700 = vst [vmem:[%s282 + $0x60] sm:$0xf] %v668
        %701 = vst [vmem:[%s282 + $0x64] sm:$0xf] %v669
        %702 = vst [vmem:[%s282 + $0x68] sm:$0xf] %v670
        %703 = vst [vmem:[%s282 + $0x6c] sm:$0xf] %v671
        %704 = vst [vmem:[%s282 + $0x70] sm:$0xf] %v672
        %705 = vst [vmem:[%s282 + $0x74] sm:$0xf] %v673
        %706 = vst [vmem:[%s282 + $0x78] sm:$0xf] %v674
        %707 = vst [vmem:[%s282 + $0x7c] sm:$0xf] %v675
        %s708 = smul.u32 32, %s22
        %p709 = scmp.lt.s32.totalorder %s708, 63
        %s710 = scalar_select %p709, %s708, 63
        %p711 = scmp.lt.s32.totalorder %s21, 0
        %s712 = scalar_select %p711, %s21, 0
        %s713 = sadd.s32 %s712, %s710
        %s714 = smul.addr %s713, 4
        %s715 = scalar_lea.vmem %s4, %s714
        // Predicated region
        $region49: #{dense_projection_forward.4} parent=35 // pred_check
          %p716 = pneg %p153
        $region50: #{dense_projection_forward.4} parent=35 // pred_check_branch
          %718 = sbr.rel (%p716) target = $region52
        $region51: #{dense_projection_forward.4} parent=35 // pred_region
          %s719 = smul.u32 32, %s22
        $region52: #{dense_projection_forward.4} parent=35 // pred_fallthru
          _
      $region36: #{dense_projection_forward.4} parent=5 // pred_fallthru
        _
      %p720 = scmp.le.s32.totalorder 2, %s12
      // Predicated region
      $region53: #{dense_projection_forward.4} parent=5 // pred_check
        %p721 = pneg %p720
      $region54: #{dense_projection_forward.4} parent=5 // pred_check_branch
        %723 = sbr.rel (%p721) target = $region56
      $region55: #{dense_projection_forward.4} parent=5 // pred_region
        %s724 = ssub.s32 %s12, 2
        // Predicated region
        $region57: #{dense_projection_forward.4} parent=55 // pred_check
          %p725 = pneg %p159
        $region58: #{dense_projection_forward.4} parent=55 // pred_check_branch
          %727 = sbr.rel (%p725) target = $region60
        $region59: #{dense_projection_forward.4} parent=55 // pred_region
          %s728 = smul.u32 32, %s24
          %p729 = scmp.lt.s32.totalorder %s728, 63
          %s730 = scalar_select %p729, %s728, 63
          %p731 = scmp.lt.s32.totalorder %s23, 0
          %s732 = scalar_select %p731, %s23, 0
          %s733 = sadd.s32 %s732, %s730
          %s734 = smul.addr %s733, 4
          %s735 = scalar_lea.vmem %s4, %s734
        $region60: #{dense_projection_forward.4} parent=55 // pred_fallthru
          _
      $region56: #{dense_projection_forward.4} parent=5 // pred_fallthru
        _
    $region6: #{dense_projection_forward.4} parent=1 // loop_footer
      %s16 = sadd.s32 1, %s12
    $region7: #{dense_projection_forward.4} parent=1 // loop_footer_branch
      %11 = sbr.rel target = $region3
    $region8: #{dense_projection_forward.4} parent=1 // loop_exit
      _
    %736 = vsyncpa [#allocation3], 1
    %s737 = scalar_lea.sflag [#allocation3], 1
    %738 = vsyncpa %s737, 1
    %739 = vsyncpa [#allocation5], 1

// kernel: dense_projection_forward.5
$region0: #{dense_projection_forward.5}
  #allocation0 [shape = 'u32[]', space=smem, size = 0x4, offset = 0x4, fixed_abs, tag = 'smem constant byte address 0x4 - core index']
  #allocation1 [shape = 'u32[72,128]{1,0:T(1,128)}', space=vmem, size = 0x9000, scoped, tag = 'internal scratch']
  %s0 = inlined_call_operand.vmem [shape: bf16[512,72], index: 0, kind: input, shape index: {}]
  %s1 = inlined_call_operand.hbm [shape: bf16[72,128], index: 1, kind: input, shape index: {}]
  %s2 = inlined_call_operand.hbm [shape: f32[1,128], index: 2, kind: input, shape index: {}]
  %s3 = inlined_call_operand.hbm [shape: f32[1,128], index: 3, kind: input, shape index: {}]
  %s4 = inlined_call_operand.vmem [shape: bf16[512,128], index: 4, kind: output, shape index: {}]
  %s5 = sld [smem:[#allocation0]]
  $region61: #{dense_projection_forward.5} parent=0
    _
  %s7 = ssub.s32 1, %s5
  %s8 = scalar_select 0, %s7, %s5
  $region1: #{dense_projection_forward.5} parent=0
    #allocation2 [shape = 'u8[18432]{0}', space=vmem, size = 0x4800, scoped, tag = 'input window, operand 1, single buffered']
    #allocation3 [shape = 's32[2]{0}', space=sflag, size = 0x8, scoped, tag = 'scoped memory for dense_projection_forward.5']
    #allocation4 [shape = 'u8[512]{0}', space=vmem, size = 0x400, scoped, tag = 'input window, operand 2, single buffered']
    #allocation5 [shape = 's32[1]{0}', space=sflag, size = 0x4, scoped, tag = 'scoped memory for dense_projection_forward.5']
    #allocation6 [shape = 'u8[512]{0}', space=vmem, size = 0x400, scoped, tag = 'input window, operand 3, single buffered']
    %9 = vsyncpa [#allocation3], 0
    %10 = vsyncpa [#allocation5], 0
    loop: start=0, step=1, limit=4
    $region2: #{dense_projection_forward.5} parent=1 // loop_pre_header
      _
    $region3: #{dense_projection_forward.5} parent=1 // loop_header
      %s12 = sphi 0, %s16
      %p13 = scmp.ge.s32.totalorder %s12, 4
      %s19 = sphi 0, %s31
      %s20 = sphi 0, %s27
      %s21 = sphi 0, %s19
      %s22 = sphi 0, %s20
      %s23 = sphi 0, %s21
      %s24 = sphi 0, %s22
      %s34 = sphi 0, %s36
      %s37 = sphi 0, %s34
      %s38 = sphi 0, %s37
      %s54 = sphi 0, %s38
      %s60 = sphi 0, %s62
      %s63 = sphi 0, %s60
      %s64 = sphi 0, %s63
      %s80 = sphi 0, %s64
      %s86 = sphi 0, %s88
      %s89 = sphi 0, %s86
      %s90 = sphi 0, %s89
      %s106 = sphi 0, %s90
      %s112 = sphi 0, %s114
      %s115 = sphi 0, %s112
      %s116 = sphi 0, %s115
      %s132 = sphi 0, %s116
      %s140 = sphi 0, %s142
      %s143 = sphi 0, %s140
      %s144 = sphi 0, %s143
      %s160 = sphi 0, %s144
    $region4: #{dense_projection_forward.5} parent=1 // loop_header_branch
      %15 = sbr.rel (%p13) target = $region8
    $region5: #{dense_projection_forward.5} parent=1 // loop_body
      %s17 = ssub.s32 %s12, 1
      %s18 = ssub.s32 %s12, 2
      %s25 = sadd.s32 1, %s20
      %p26 = scmp.ge.s32.totalorder %s25, 2
      %s27 = scalar_select %p26, 0, %s25
      %s28 = sadd.s32 1, %s19
      %s29 = scalar_select %p26, %s28, %s19
      %p30 = scmp.ge.s32.totalorder %s29, 1
      %s31 = scalar_select %p30, 0, %s29
      %s32 = ssub.s32 %s20, %s27
      %p33 = scmp.eq.s32.totalorder %s32, 0
      %s35 = sadd.s32 %s34, 1
      %s36 = scalar_select %p33, %s34, %s35
      %p39 = pneg %p33
      %p40 = scmp.eq.s32.totalorder %s12, 1
      %p41 = por %p39, %p40
      %p42 = scmp.ne.s32.totalorder %s34, %s37
      %p43 = scmp.eq.s32.totalorder %s12, 0
      %p44 = por %p42, %p43
      %p45 = scmp.ne.s32.totalorder %s34, %s37
      %p46 = scmp.eq.s32.totalorder %s17, 1
      %p47 = por %p45, %p46
      %p48 = scmp.ne.s32.totalorder %s37, %s38
      %p49 = scmp.eq.s32.totalorder %s17, 0
      %p50 = por %p48, %p49
      %p51 = scmp.ne.s32.totalorder %s37, %s38
      %p52 = scmp.eq.s32.totalorder %s18, 1
      %p53 = por %p51, %p52
      %p55 = scmp.ne.s32.totalorder %s38, %s54
      %p56 = scmp.eq.s32.totalorder %s18, 0
      %p57 = por %p55, %p56
      %s58 = ssub.s32 %s19, %s31
      %p59 = scmp.eq.s32.totalorder %s58, 0
      %s61 = sadd.s32 %s60, 1
      %s62 = scalar_select %p59, %s60, %s61
      %p65 = pneg %p59
      %p66 = scmp.eq.s32.totalorder %s12, 1
      %p67 = por %p65, %p66
      %p68 = scmp.ne.s32.totalorder %s60, %s63
      %p69 = scmp.eq.s32.totalorder %s12, 0
      %p70 = por %p68, %p69
      %p71 = scmp.ne.s32.totalorder %s60, %s63
      %p72 = scmp.eq.s32.totalorder %s17, 1
      %p73 = por %p71, %p72
      %p74 = scmp.ne.s32.totalorder %s63, %s64
      %p75 = scmp.eq.s32.totalorder %s17, 0
      %p76 = por %p74, %p75
      %p77 = scmp.ne.s32.totalorder %s63, %s64
      %p78 = scmp.eq.s32.totalorder %s18, 1
      %p79 = por %p77, %p78
      %p81 = scmp.ne.s32.totalorder %s64, %s80
      %p82 = scmp.eq.s32.totalorder %s18, 0
      %p83 = por %p81, %p82
      %s84 = ssub.s32 %s19, %s31
      %p85 = scmp.eq.s32.totalorder %s84, 0
      %s87 = sadd.s32 %s86, 1
      %s88 = scalar_select %p85, %s86, %s87
      %p91 = pneg %p85
      %p92 = scmp.eq.s32.totalorder %s12, 1
      %p93 = por %p91, %p92
      %p94 = scmp.ne.s32.totalorder %s86, %s89
      %p95 = scmp.eq.s32.totalorder %s12, 0
      %p96 = por %p94, %p95
      %p97 = scmp.ne.s32.totalorder %s86, %s89
      %p98 = scmp.eq.s32.totalorder %s17, 1
      %p99 = por %p97, %p98
      %p100 = scmp.ne.s32.totalorder %s89, %s90
      %p101 = scmp.eq.s32.totalorder %s17, 0
      %p102 = por %p100, %p101
      %p103 = scmp.ne.s32.totalorder %s89, %s90
      %p104 = scmp.eq.s32.totalorder %s18, 1
      %p105 = por %p103, %p104
      %p107 = scmp.ne.s32.totalorder %s90, %s106
      %p108 = scmp.eq.s32.totalorder %s18, 0
      %p109 = por %p107, %p108
      %s110 = ssub.s32 %s19, %s31
      %p111 = scmp.eq.s32.totalorder %s110, 0
      %s113 = sadd.s32 %s112, 1
      %s114 = scalar_select %p111, %s112, %s113
      %p117 = pneg %p111
      %p118 = scmp.eq.s32.totalorder %s12, 1
      %p119 = por %p117, %p118
      %p120 = scmp.ne.s32.totalorder %s112, %s115
      %p121 = scmp.eq.s32.totalorder %s12, 0
      %p122 = por %p120, %p121
      %p123 = scmp.ne.s32.totalorder %s112, %s115
      %p124 = scmp.eq.s32.totalorder %s17, 1
      %p125 = por %p123, %p124
      %p126 = scmp.ne.s32.totalorder %s115, %s116
      %p127 = scmp.eq.s32.totalorder %s17, 0
      %p128 = por %p126, %p127
      %p129 = scmp.ne.s32.totalorder %s115, %s116
      %p130 = scmp.eq.s32.totalorder %s18, 1
      %p131 = por %p129, %p130
      %p133 = scmp.ne.s32.totalorder %s116, %s132
      %p134 = scmp.eq.s32.totalorder %s18, 0
      %p135 = por %p133, %p134
      %s136 = ssub.s32 %s20, %s27
      %s137 = ssub.s32 %s19, %s31
      %s138 = sor.u32 %s136, %s137
      %p139 = scmp.eq.s32.totalorder %s138, 0
      %s141 = sadd.s32 %s140, 1
      %s142 = scalar_select %p139, %s140, %s141
      %p145 = pneg %p139
      %p146 = scmp.eq.s32.totalorder %s12, 1
      %p147 = por %p145, %p146
      %p148 = scmp.ne.s32.totalorder %s140, %s143
      %p149 = scmp.eq.s32.totalorder %s12, 0
      %p150 = por %p148, %p149
      %p151 = scmp.ne.s32.totalorder %s140, %s143
      %p152 = scmp.eq.s32.totalorder %s17, 1
      %p153 = por %p151, %p152
      %p154 = scmp.ne.s32.totalorder %s143, %s144
      %p155 = scmp.eq.s32.totalorder %s17, 0
      %p156 = por %p154, %p155
      %p157 = scmp.ne.s32.totalorder %s143, %s144
      %p158 = scmp.eq.s32.totalorder %s18, 1
      %p159 = por %p157, %p158
      %p161 = scmp.ne.s32.totalorder %s144, %s160
      %p162 = scmp.eq.s32.totalorder %s18, 0
      %p163 = por %p161, %p162
      %p164 = scmp.le.s32.totalorder 1, %s12
      %p165 = scmp.lt.s32.totalorder %s12, 3
      %p166 = pnand %p164, %p165
      %p167 = pneg %p166
      // Predicated region
      $region9: #{dense_projection_forward.5} parent=5 // pred_check
        _
      $region10: #{dense_projection_forward.5} parent=5 // pred_check_branch
        %169 = sbr.rel (%p166) target = $region12
      $region11: #{dense_projection_forward.5} parent=5 // pred_region
        %s170 = ssub.s32 %s12, 1
        // Predicated region
        $region13: #{dense_projection_forward.5} parent=11 // pred_check
          %p171 = pneg %p76
        $region14: #{dense_projection_forward.5} parent=11 // pred_check_branch
          %173 = sbr.rel (%p171) target = $region16
        $region15: #{dense_projection_forward.5} parent=11 // pred_region
          %175 = vsyncadd [#allocation3], 0
          %s176 = smul.addr %s21, 4
          %s177 = scalar_lea.hbm %s1, %s176
          %s178 = sshll.u32 %s177, 4
          %s179 = int_to_ptr.hbm [resolvable:$true] %s178
          %s180 = sshll.u32 [#allocation2], 4
          %s181 = int_to_ptr.vmem [resolvable:$true] %s180
          %186 = dma.hbm_to_vmem [thread:$0]  %s179, 576, %s181, [#allocation3], 64, 64, 4
        $region16: #{dense_projection_forward.5} parent=11 // pred_fallthru
          _
        // Predicated region
        $region17: #{dense_projection_forward.5} parent=11 // pred_check
          %p187 = pneg %p102
        $region18: #{dense_projection_forward.5} parent=11 // pred_check_branch
          %189 = sbr.rel (%p187) target = $region20
        $region19: #{dense_projection_forward.5} parent=11 // pred_region
          %191 = vsyncadd [#allocation5], 0
          %s192 = scalar_lea.hbm %s2, %s21
          %s194 = sshll.u32 %s192, 4
          %s195 = int_to_ptr.hbm [resolvable:$true] %s194
          %s196 = sshll.u32 [#allocation4], 4
          %s197 = int_to_ptr.vmem [resolvable:$true] %s196
          %199 = dma.hbm_to_vmem [thread:$0]  %s195, 16, %s197, [#allocation5]
        $region20: #{dense_projection_forward.5} parent=11 // pred_fallthru
          _
        // Predicated region
        $region21: #{dense_projection_forward.5} parent=11 // pred_check
          %p200 = pneg %p128
        $region22: #{dense_projection_forward.5} parent=11 // pred_check_branch
          %202 = sbr.rel (%p200) target = $region24
        $region23: #{dense_projection_forward.5} parent=11 // pred_region
          %204 = vsyncadd [#allocation5], 0
          %s205 = scalar_lea.hbm %s3, %s21
          %s207 = sshll.u32 %s205, 4
          %s208 = int_to_ptr.hbm [resolvable:$true] %s207
          %s209 = sshll.u32 [#allocation6], 4
          %s210 = int_to_ptr.vmem [resolvable:$true] %s209
          %212 = dma.hbm_to_vmem [thread:$0]  %s208, 16, %s210, [#allocation5]
        $region24: #{dense_projection_forward.5} parent=11 // pred_fallthru
          _
      $region12: #{dense_projection_forward.5} parent=5 // pred_fallthru
        _
      %p213 = scmp.lt.s32.totalorder %s12, 2
      // Predicated region
      $region25: #{dense_projection_forward.5} parent=5 // pred_check
        %p214 = pneg %p213
      $region26: #{dense_projection_forward.5} parent=5 // pred_check_branch
        %216 = sbr.rel (%p214) target = $region28
      $region27: #{dense_projection_forward.5} parent=5 // pred_region
        // Predicated region
        $region29: #{dense_projection_forward.5} parent=27 // pred_check
          %p217 = pneg %p44
        $region30: #{dense_projection_forward.5} parent=27 // pred_check_branch
          %219 = sbr.rel (%p217) target = $region32
        $region31: #{dense_projection_forward.5} parent=27 // pred_region
          %s220 = smul.u32 32, %s20
          %p221 = scmp.lt.s32.totalorder %s220, 63
          %s222 = scalar_select %p221, %s220, 63
          %s223 = smul.addr %s222, 4
          %s224 = scalar_lea.vmem %s0, %s223
          %s225 = smul.u32 32, %s20
        $region32: #{dense_projection_forward.5} parent=27 // pred_fallthru
          _
      $region28: #{dense_projection_forward.5} parent=5 // pred_fallthru
        _
      %p226 = scmp.le.s32.totalorder 1, %s12
      %p227 = scmp.lt.s32.totalorder %s12, 3
      %p228 = pnand %p226, %p227
      %p229 = pneg %p228
      // Predicated region
      $region33: #{dense_projection_forward.5} parent=5 // pred_check
        _
      $region34: #{dense_projection_forward.5} parent=5 // pred_check_branch
        %231 = sbr.rel (%p228) target = $region36
      $region35: #{dense_projection_forward.5} parent=5 // pred_region
        %s232 = ssub.s32 %s12, 1
        // Predicated region
        $region37: #{dense_projection_forward.5} parent=35 // pred_check
          %p233 = pneg %p76
        $region38: #{dense_projection_forward.5} parent=35 // pred_check_branch
          %235 = sbr.rel (%p233) target = $region40
        $region39: #{dense_projection_forward.5} parent=35 // pred_region
          %237 = dma.done [#allocation3], 576
        $region40: #{dense_projection_forward.5} parent=35 // pred_fallthru
          _
        // Predicated region
        $region41: #{dense_projection_forward.5} parent=35 // pred_check
          %p238 = pneg %p102
        $region42: #{dense_projection_forward.5} parent=35 // pred_check_branch
          %240 = sbr.rel (%p238) target = $region44
        $region43: #{dense_projection_forward.5} parent=35 // pred_region
          %242 = dma.done [#allocation5], 16
        $region44: #{dense_projection_forward.5} parent=35 // pred_fallthru
          _
        // Predicated region
        $region45: #{dense_projection_forward.5} parent=35 // pred_check
          %p243 = pneg %p128
        $region46: #{dense_projection_forward.5} parent=35 // pred_check_branch
          %245 = sbr.rel (%p243) target = $region48
        $region47: #{dense_projection_forward.5} parent=35 // pred_region
          %247 = dma.done [#allocation5], 16
        $region48: #{dense_projection_forward.5} parent=35 // pred_fallthru
          _
        %s248 = smul.u32 32, %s22
        %p249 = scmp.lt.s32.totalorder %s248, 63
        %s250 = scalar_select %p249, %s248, 63
        %s251 = smul.addr %s250, 4
        %s252 = scalar_lea.vmem %s0, %s251
        %p253 = pneg %p50
        %p254 = pneg %p47
        %p255 = pneg %p76
        %p256 = pneg %p73
        %p257 = pneg %p102
        %p258 = pneg %p99
        %p259 = pneg %p128
        %p260 = pneg %p125
        %p261 = pneg %p156
        %p262 = pneg %p153
        %s263 = smul.u32 32, %s22
        %p264 = scmp.lt.s32.totalorder %s263, 63
        %s265 = scalar_select %p264, %s263, 63
        %p266 = scmp.lt.s32.totalorder %s21, 0
        %s267 = scalar_select %p266, %s21, 0
        %s268 = sadd.s32 %s267, %s265
        %s269 = smul.addr %s268, 4
        %s270 = scalar_lea.vmem %s4, %s269
        %s271 = smul.u32 32, %s22
        %p272 = scmp.lt.s32.totalorder %s271, 63
        %s273 = scalar_select %p272, %s271, 63
        %s274 = smul.addr %s273, 4
        %s275 = scalar_lea.vmem %s0, %s274
        %s276 = smul.u32 32, %s22
        %s277 = smul.u32 32, %s22
        %p278 = scmp.lt.s32.totalorder %s277, 63
        %s279 = scalar_select %p278, %s277, 63
        %p280 = scmp.lt.s32.totalorder %s21, 0
        %s281 = scalar_select %p280, %s21, 0
        %s282 = sadd.s32 %s281, %s279
        %s283 = smul.addr %s282, 4
        %s284 = scalar_lea.vmem %s4, %s283
        %s285 = smul.u32 32, %s22
        %v287 = vld [vmem:[%s275] sm:$0xf]
        %v288 = vld [vmem:[%s275 + $0x4] sm:$0xf]
        %v289 = vld [vmem:[%s275 + $0x8] sm:$0xf]
        %v290 = vld [vmem:[%s275 + $0xc] sm:$0xf]
        %v291 = vld [vmem:[%s275 + $0x10] sm:$0xf]
        %v292 = vld [vmem:[%s275 + $0x14] sm:$0xf]
        %v293 = vld [vmem:[%s275 + $0x18] sm:$0xf]
        %v294 = vld [vmem:[%s275 + $0x1c] sm:$0xf]
        %v295 = vld [vmem:[%s275 + $0x20] sm:$0xf]
        %v296 = vld [vmem:[%s275 + $0x24] sm:$0xf]
        %v297 = vld [vmem:[%s275 + $0x28] sm:$0xf]
        %v298 = vld [vmem:[%s275 + $0x2c] sm:$0xf]
        %v299 = vld [vmem:[%s275 + $0x30] sm:$0xf]
        %v300 = vld [vmem:[%s275 + $0x34] sm:$0xf]
        %v301 = vld [vmem:[%s275 + $0x38] sm:$0xf]
        %v302 = vld [vmem:[%s275 + $0x3c] sm:$0xf]
        %v303 = vld [vmem:[%s275 + $0x40] sm:$0xf]
        %v304 = vld [vmem:[%s275 + $0x44] sm:$0xf]
        %v305 = vld [vmem:[%s275 + $0x48] sm:$0xf]
        %v306 = vld [vmem:[%s275 + $0x4c] sm:$0xf]
        %v307 = vld [vmem:[%s275 + $0x50] sm:$0xf]
        %v308 = vld [vmem:[%s275 + $0x54] sm:$0xf]
        %v309 = vld [vmem:[%s275 + $0x58] sm:$0xf]
        %v310 = vld [vmem:[%s275 + $0x5c] sm:$0xf]
        %v311 = vld [vmem:[%s275 + $0x60] sm:$0xf]
        %v312 = vld [vmem:[%s275 + $0x64] sm:$0xf]
        %v313 = vld [vmem:[%s275 + $0x68] sm:$0xf]
        %v314 = vld [vmem:[%s275 + $0x6c] sm:$0xf]
        %v315 = vld [vmem:[%s275 + $0x70] sm:$0xf]
        %v316 = vld [vmem:[%s275 + $0x74] sm:$0xf]
        %v317 = vld [vmem:[%s275 + $0x78] sm:$0xf]
        %v318 = vld [vmem:[%s275 + $0x7c] sm:$0xf]
        %v319 = vld [vmem:[#allocation2] sm:$0xf]
        %v320 = vld [vmem:[#allocation2 + $0x4] sm:$0xf]
        %v321 = vld [vmem:[#allocation2 + $0x8] sm:$0xf]
        %v322 = vld [vmem:[#allocation2 + $0xc] sm:$0xf]
        %v323 = vld [vmem:[#allocation2 + $0x10] sm:$0xf]
        %v324 = vld [vmem:[#allocation2 + $0x14] sm:$0xf]
        %v325 = vld [vmem:[#allocation2 + $0x18] sm:$0xf]
        %v326 = vld [vmem:[#allocation2 + $0x1c] sm:$0xf]
        %v327 = vld [vmem:[#allocation2 + $0x20] sm:$0xf]
        %v328 = vld [vmem:[#allocation4] sm:$0x1]
        %v330 = vperm.slane %v328, 0
        %v364 = vunpack.c.l.b16 %v287
        %v365 = vunpack.c.l.b16 %v288
        %v366 = vunpack.c.l.b16 %v289
        %v367 = vunpack.c.l.b16 %v290
        %v368 = vunpack.c.l.b16 %v291
        %v369 = vunpack.c.l.b16 %v292
        %v370 = vunpack.c.l.b16 %v293
        %v371 = vunpack.c.l.b16 %v294
        %v372 = vunpack.c.l.b16 %v295
        %v373 = vunpack.c.l.b16 %v296
        %v374 = vunpack.c.l.b16 %v297
        %v375 = vunpack.c.l.b16 %v298
        %v376 = vunpack.c.l.b16 %v299
        %v377 = vunpack.c.l.b16 %v300
        %v378 = vunpack.c.l.b16 %v301
        %v379 = vunpack.c.l.b16 %v302
        %v380 = vunpack.c.l.b16 %v303
        %v381 = vunpack.c.l.b16 %v304
        %v382 = vunpack.c.l.b16 %v305
        %v383 = vunpack.c.l.b16 %v306
        %v384 = vunpack.c.l.b16 %v307
        %v385 = vunpack.c.l.b16 %v308
        %v386 = vunpack.c.l.b16 %v309
        %v387 = vunpack.c.l.b16 %v310
        %v388 = vunpack.c.l.b16 %v311
        %v389 = vunpack.c.l.b16 %v312
        %v390 = vunpack.c.l.b16 %v313
        %v391 = vunpack.c.l.b16 %v314
        %v392 = vunpack.c.l.b16 %v315
        %v393 = vunpack.c.l.b16 %v316
        %v394 = vunpack.c.l.b16 %v317
        %v395 = vunpack.c.l.b16 %v318
        %v396 = vpack.c.b16 %v365, %v364
        %v397 = vpack.c.b16 %v367, %v366
        %v398 = vpack.c.b16 %v369, %v368
        %v399 = vpack.c.b16 %v371, %v370
        %v400 = vpack.c.b16 %v373, %v372
        %v401 = vpack.c.b16 %v375, %v374
        %v402 = vpack.c.b16 %v377, %v376
        %v403 = vpack.c.b16 %v379, %v378
        %v404 = vpack.c.b16 %v381, %v380
        %v405 = vpack.c.b16 %v383, %v382
        %v406 = vpack.c.b16 %v385, %v384
        %v407 = vpack.c.b16 %v387, %v386
        %v408 = vpack.c.b16 %v389, %v388
        %v409 = vpack.c.b16 %v391, %v390
        %v410 = vpack.c.b16 %v393, %v392
        %v411 = vpack.c.b16 %v395, %v394
        %v421 = vunpack.c.l.b16 %v319
        %v422 = vunpack.c.l.b16 %v320
        %v423 = vunpack.c.l.b16 %v321
        %v424 = vunpack.c.l.b16 %v322
        %v425 = vunpack.c.l.b16 %v323
        %v426 = vunpack.c.l.b16 %v324
        %v427 = vunpack.c.l.b16 %v325
        %v428 = vunpack.c.l.b16 %v326
        %v429 = vunpack.c.l.b16 %v327
        %v430 = vpack.c.b16 %v422, %v421
        %v431 = vpack.c.b16 %v424, %v423
        %v432 = vpack.c.b16 %v426, %v425
        %v433 = vpack.c.b16 %v428, %v427
        %v434 = vpack.c.b16 %v429, %v429
        %vm439 = vcmask 588800
        %v441 = vsel %vm439, %v396, 0
        %v444 = vsel %vm439, %v397, 0
        %v447 = vsel %vm439, %v398, 0
        %v450 = vsel %vm439, %v399, 0
        %v453 = vsel %vm439, %v400, 0
        %v456 = vsel %vm439, %v401, 0
        %v459 = vsel %vm439, %v402, 0
        %v462 = vsel %vm439, %v403, 0
        %v465 = vsel %vm439, %v404, 0
        %v468 = vsel %vm439, %v405, 0
        %v471 = vsel %vm439, %v406, 0
        %v474 = vsel %vm439, %v407, 0
        %v477 = vsel %vm439, %v408, 0
        %v480 = vsel %vm439, %v409, 0
        %v483 = vsel %vm439, %v410, 0
        %v486 = vsel %vm439, %v411, 0
        %vm488 = vcmask 1043456
        %v490 = vsel %vm488, %v434, 0
        %492 = vmatpush.bf16.msra.mxu0 0
        %493 = vmatpush.bf16.msra.mxu0 0
        %494 = vmatpush.bf16.msra.mxu0 0
        %495 = vmatpush.bf16.msra.mxu0 %v490
        %496 = vmatpush.bf16.msra.mxu0 %v433
        %497 = vmatpush.bf16.msra.mxu0 %v432
        %498 = vmatpush.bf16.msra.mxu0 %v431
        %499 = vmatpush.bf16.msra.mxu0 %v430
        %500 = vmatmul.bf16.gmra.mxu0 %v441
        %v501 = vpop.f32.mrf.mxu0
        %v502 = vadd.f32 %v330, %v501
        %v503 = vpop.f32.mrf.mxu0
        %v504 = vadd.f32 %v330, %v503
        %505 = vmatmul.bf16.gmra.mxu0 %v444
        %v506 = vpop.f32.mrf.mxu0
        %v507 = vadd.f32 %v330, %v506
        %v508 = vpop.f32.mrf.mxu0
        %v509 = vadd.f32 %v330, %v508
        %510 = vmatmul.bf16.gmra.mxu0 %v447
        %v511 = vpop.f32.mrf.mxu0
        %v512 = vadd.f32 %v330, %v511
        %v513 = vpop.f32.mrf.mxu0
        %v514 = vadd.f32 %v330, %v513
        %515 = vmatmul.bf16.gmra.mxu0 %v450
        %v516 = vpop.f32.mrf.mxu0
        %v517 = vadd.f32 %v330, %v516
        %v518 = vpop.f32.mrf.mxu0
        %v519 = vadd.f32 %v330, %v518
        %520 = vmatmul.bf16.gmra.mxu0 %v453
        %v521 = vpop.f32.mrf.mxu0
        %v522 = vadd.f32 %v330, %v521
        %v523 = vpop.f32.mrf.mxu0
        %v524 = vadd.f32 %v330, %v523
        %525 = vmatmul.bf16.gmra.mxu0 %v456
        %v526 = vpop.f32.mrf.mxu0
        %v527 = vadd.f32 %v330, %v526
        %v528 = vpop.f32.mrf.mxu0
        %v529 = vadd.f32 %v330, %v528
        %530 = vmatmul.bf16.gmra.mxu0 %v459
        %v531 = vpop.f32.mrf.mxu0
        %v532 = vadd.f32 %v330, %v531
        %v533 = vpop.f32.mrf.mxu0
        %v534 = vadd.f32 %v330, %v533
        %535 = vmatmul.bf16.gmra.mxu0 %v462
        %v536 = vpop.f32.mrf.mxu0
        %v537 = vadd.f32 %v330, %v536
        %v538 = vpop.f32.mrf.mxu0
        %v539 = vadd.f32 %v330, %v538
        %540 = vmatmul.bf16.gmra.mxu0 %v465
        %v541 = vpop.f32.mrf.mxu0
        %v542 = vadd.f32 %v330, %v541
        %v543 = vpop.f32.mrf.mxu0
        %v544 = vadd.f32 %v330, %v543
        %545 = vmatmul.bf16.gmra.mxu0 %v468
        %v546 = vpop.f32.mrf.mxu0
        %v547 = vadd.f32 %v330, %v546
        %v548 = vpop.f32.mrf.mxu0
        %v549 = vadd.f32 %v330, %v548
        %550 = vmatmul.bf16.gmra.mxu0 %v471
        %v551 = vpop.f32.mrf.mxu0
        %v552 = vadd.f32 %v330, %v551
        %v553 = vpop.f32.mrf.mxu0
        %v554 = vadd.f32 %v330, %v553
        %555 = vmatmul.bf16.gmra.mxu0 %v474
        %v556 = vpop.f32.mrf.mxu0
        %v557 = vadd.f32 %v330, %v556
        %v558 = vpop.f32.mrf.mxu0
        %v559 = vadd.f32 %v330, %v558
        %560 = vmatmul.bf16.gmra.mxu0 %v477
        %v561 = vpop.f32.mrf.mxu0
        %v562 = vadd.f32 %v330, %v561
        %v563 = vpop.f32.mrf.mxu0
        %v564 = vadd.f32 %v330, %v563
        %565 = vmatmul.bf16.gmra.mxu0 %v480
        %v566 = vpop.f32.mrf.mxu0
        %v567 = vadd.f32 %v330, %v566
        %v568 = vpop.f32.mrf.mxu0
        %v569 = vadd.f32 %v330, %v568
        %570 = vmatmul.bf16.gmra.mxu0 %v483
        %v571 = vpop.f32.mrf.mxu0
        %v572 = vadd.f32 %v330, %v571
        %v573 = vpop.f32.mrf.mxu0
        %v574 = vadd.f32 %v330, %v573
        %575 = vmatmul.bf16.gmra.mxu0 %v486
        %v576 = vpop.f32.mrf.mxu0
        %v577 = vadd.f32 %v330, %v576
        %v578 = vpop.f32.mrf.mxu0
        %v579 = vadd.f32 %v330, %v578
        %580 = vdwg.mxu0
        %vm581 = vcmp.gt.f32.partialorder %v502, 0.0
        %vm582 = vcmp.gt.f32.partialorder %v504, 0.0
        %vm583 = vcmp.gt.f32.partialorder %v507, 0.0
        %vm584 = vcmp.gt.f32.partialorder %v509, 0.0
        %vm585 = vcmp.gt.f32.partialorder %v512, 0.0
        %vm586 = vcmp.gt.f32.partialorder %v514, 0.0
        %vm587 = vcmp.gt.f32.partialorder %v517, 0.0
        %vm588 = vcmp.gt.f32.partialorder %v519, 0.0
        %vm589 = vcmp.gt.f32.partialorder %v522, 0.0
        %vm590 = vcmp.gt.f32.partialorder %v524, 0.0
        %vm591 = vcmp.gt.f32.partialorder %v527, 0.0
        %vm592 = vcmp.gt.f32.partialorder %v529, 0.0
        %vm593 = vcmp.gt.f32.partialorder %v532, 0.0
        %vm594 = vcmp.gt.f32.partialorder %v534, 0.0
        %vm595 = vcmp.gt.f32.partialorder %v537, 0.0
        %vm596 = vcmp.gt.f32.partialorder %v539, 0.0
        %vm597 = vcmp.gt.f32.partialorder %v542, 0.0
        %vm598 = vcmp.gt.f32.partialorder %v544, 0.0
        %vm599 = vcmp.gt.f32.partialorder %v547, 0.0
        %vm600 = vcmp.gt.f32.partialorder %v549, 0.0
        %vm601 = vcmp.gt.f32.partialorder %v552, 0.0
        %vm602 = vcmp.gt.f32.partialorder %v554, 0.0
        %vm603 = vcmp.gt.f32.partialorder %v557, 0.0
        %vm604 = vcmp.gt.f32.partialorder %v559, 0.0
        %vm605 = vcmp.gt.f32.partialorder %v562, 0.0
        %vm606 = vcmp.gt.f32.partialorder %v564, 0.0
        %vm607 = vcmp.gt.f32.partialorder %v567, 0.0
        %vm608 = vcmp.gt.f32.partialorder %v569, 0.0
        %vm609 = vcmp.gt.f32.partialorder %v572, 0.0
        %vm610 = vcmp.gt.f32.partialorder %v574, 0.0
        %vm611 = vcmp.gt.f32.partialorder %v577, 0.0
        %vm612 = vcmp.gt.f32.partialorder %v579, 0.0
        %v613 = vld [vmem:[#allocation6] sm:$0x1]
        %v615 = vperm.slane %v613, 0
        %v617 = vmul.f32 %v615, %v502
        %v618 = vmul.f32 %v615, %v504
        %v619 = vmul.f32 %v615, %v507
        %v620 = vmul.f32 %v615, %v509
        %v621 = vmul.f32 %v615, %v512
        %v622 = vmul.f32 %v615, %v514
        %v623 = vmul.f32 %v615, %v517
        %v624 = vmul.f32 %v615, %v519
        %v625 = vmul.f32 %v615, %v522
        %v626 = vmul.f32 %v615, %v524
        %v627 = vmul.f32 %v615, %v527
        %v628 = vmul.f32 %v615, %v529
        %v629 = vmul.f32 %v615, %v532
        %v630 = vmul.f32 %v615, %v534
        %v631 = vmul.f32 %v615, %v537
        %v632 = vmul.f32 %v615, %v539
        %v633 = vmul.f32 %v615, %v542
        %v634 = vmul.f32 %v615, %v544
        %v635 = vmul.f32 %v615, %v547
        %v636 = vmul.f32 %v615, %v549
        %v637 = vmul.f32 %v615, %v552
        %v638 = vmul.f32 %v615, %v554
        %v639 = vmul.f32 %v615, %v557
        %v640 = vmul.f32 %v615, %v559
        %v641 = vmul.f32 %v615, %v562
        %v642 = vmul.f32 %v615, %v564
        %v643 = vmul.f32 %v615, %v567
        %v644 = vmul.f32 %v615, %v569
        %v645 = vmul.f32 %v615, %v572
        %v646 = vmul.f32 %v615, %v574
        %v647 = vmul.f32 %v615, %v577
        %v648 = vmul.f32 %v615, %v579
        %v649 = vsel %vm581, %v502, %v617
        %v650 = vsel %vm582, %v504, %v618
        %v651 = vsel %vm583, %v507, %v619
        %v652 = vsel %vm584, %v509, %v620
        %v653 = vsel %vm585, %v512, %v621
        %v654 = vsel %vm586, %v514, %v622
        %v655 = vsel %vm587, %v517, %v623
        %v656 = vsel %vm588, %v519, %v624
        %v657 = vsel %vm589, %v522, %v625
        %v658 = vsel %vm590, %v524, %v626
        %v659 = vsel %vm591, %v527, %v627
        %v660 = vsel %vm592, %v529, %v628
        %v661 = vsel %vm593, %v532, %v629
        %v662 = vsel %vm594, %v534, %v630
        %v663 = vsel %vm595, %v537, %v631
        %v664 = vsel %vm596, %v539, %v632
        %v665 = vsel %vm597, %v542, %v633
        %v666 = vsel %vm598, %v544, %v634
        %v667 = vsel %vm599, %v547, %v635
        %v668 = vsel %vm600, %v549, %v636
        %v669 = vsel %vm601, %v552, %v637
        %v670 = vsel %vm602, %v554, %v638
        %v671 = vsel %vm603, %v557, %v639
        %v672 = vsel %vm604, %v559, %v640
        %v673 = vsel %vm605, %v562, %v641
        %v674 = vsel %vm606, %v564, %v642
        %v675 = vsel %vm607, %v567, %v643
        %v676 = vsel %vm608, %v569, %v644
        %v677 = vsel %vm609, %v572, %v645
        %v678 = vsel %vm610, %v574, %v646
        %v679 = vsel %vm611, %v577, %v647
        %v680 = vsel %vm612, %v579, %v648
        %v681 = vpack.c.bf16 %v649, %v649
        %v682 = vpack.c.bf16 %v650, %v650
        %v683 = vpack.c.bf16 %v651, %v651
        %v684 = vpack.c.bf16 %v652, %v652
        %v685 = vpack.c.bf16 %v653, %v653
        %v686 = vpack.c.bf16 %v654, %v654
        %v687 = vpack.c.bf16 %v655, %v655
        %v688 = vpack.c.bf16 %v656, %v656
        %v689 = vpack.c.bf16 %v657, %v657
        %v690 = vpack.c.bf16 %v658, %v658
        %v691 = vpack.c.bf16 %v659, %v659
        %v692 = vpack.c.bf16 %v660, %v660
        %v693 = vpack.c.bf16 %v661, %v661
        %v694 = vpack.c.bf16 %v662, %v662
        %v695 = vpack.c.bf16 %v663, %v663
        %v696 = vpack.c.bf16 %v664, %v664
        %v697 = vpack.c.bf16 %v665, %v665
        %v698 = vpack.c.bf16 %v666, %v666
        %v699 = vpack.c.bf16 %v667, %v667
        %v700 = vpack.c.bf16 %v668, %v668
        %v701 = vpack.c.bf16 %v669, %v669
        %v702 = vpack.c.bf16 %v670, %v670
        %v703 = vpack.c.bf16 %v671, %v671
        %v704 = vpack.c.bf16 %v672, %v672
        %v705 = vpack.c.bf16 %v673, %v673
        %v706 = vpack.c.bf16 %v674, %v674
        %v707 = vpack.c.bf16 %v675, %v675
        %v708 = vpack.c.bf16 %v676, %v676
        %v709 = vpack.c.bf16 %v677, %v677
        %v710 = vpack.c.bf16 %v678, %v678
        %v711 = vpack.c.bf16 %v679, %v679
        %v712 = vpack.c.bf16 %v680, %v680
        %713 = vst [vmem:[%s284] sm:$0xf] %v681
        %714 = vst [vmem:[%s284 + $0x4] sm:$0xf] %v682
        %715 = vst [vmem:[%s284 + $0x8] sm:$0xf] %v683
        %716 = vst [vmem:[%s284 + $0xc] sm:$0xf] %v684
        %717 = vst [vmem:[%s284 + $0x10] sm:$0xf] %v685
        %718 = vst [vmem:[%s284 + $0x14] sm:$0xf] %v686
        %719 = vst [vmem:[%s284 + $0x18] sm:$0xf] %v687
        %720 = vst [vmem:[%s284 + $0x1c] sm:$0xf] %v688
        %721 = vst [vmem:[%s284 + $0x20] sm:$0xf] %v689
        %722 = vst [vmem:[%s284 + $0x24] sm:$0xf] %v690
        %723 = vst [vmem:[%s284 + $0x28] sm:$0xf] %v691
        %724 = vst [vmem:[%s284 + $0x2c] sm:$0xf] %v692
        %725 = vst [vmem:[%s284 + $0x30] sm:$0xf] %v693
        %726 = vst [vmem:[%s284 + $0x34] sm:$0xf] %v694
        %727 = vst [vmem:[%s284 + $0x38] sm:$0xf] %v695
        %728 = vst [vmem:[%s284 + $0x3c] sm:$0xf] %v696
        %729 = vst [vmem:[%s284 + $0x40] sm:$0xf] %v697
        %730 = vst [vmem:[%s284 + $0x44] sm:$0xf] %v698
        %731 = vst [vmem:[%s284 + $0x48] sm:$0xf] %v699
        %732 = vst [vmem:[%s284 + $0x4c] sm:$0xf] %v700
        %733 = vst [vmem:[%s284 + $0x50] sm:$0xf] %v701
        %734 = vst [vmem:[%s284 + $0x54] sm:$0xf] %v702
        %735 = vst [vmem:[%s284 + $0x58] sm:$0xf] %v703
        %736 = vst [vmem:[%s284 + $0x5c] sm:$0xf] %v704
        %737 = vst [vmem:[%s284 + $0x60] sm:$0xf] %v705
        %738 = vst [vmem:[%s284 + $0x64] sm:$0xf] %v706
        %739 = vst [vmem:[%s284 + $0x68] sm:$0xf] %v707
        %740 = vst [vmem:[%s284 + $0x6c] sm:$0xf] %v708
        %741 = vst [vmem:[%s284 + $0x70] sm:$0xf] %v709
        %742 = vst [vmem:[%s284 + $0x74] sm:$0xf] %v710
        %743 = vst [vmem:[%s284 + $0x78] sm:$0xf] %v711
        %744 = vst [vmem:[%s284 + $0x7c] sm:$0xf] %v712
        %s745 = smul.u32 32, %s22
        %p746 = scmp.lt.s32.totalorder %s745, 63
        %s747 = scalar_select %p746, %s745, 63
        %p748 = scmp.lt.s32.totalorder %s21, 0
        %s749 = scalar_select %p748, %s21, 0
        %s750 = sadd.s32 %s749, %s747
        %s751 = smul.addr %s750, 4
        %s752 = scalar_lea.vmem %s4, %s751
        // Predicated region
        $region49: #{dense_projection_forward.5} parent=35 // pred_check
          %p753 = pneg %p153
        $region50: #{dense_projection_forward.5} parent=35 // pred_check_branch
          %755 = sbr.rel (%p753) target = $region52
        $region51: #{dense_projection_forward.5} parent=35 // pred_region
          %s756 = smul.u32 32, %s22
        $region52: #{dense_projection_forward.5} parent=35 // pred_fallthru
          _
      $region36: #{dense_projection_forward.5} parent=5 // pred_fallthru
        _
      %p757 = scmp.le.s32.totalorder 2, %s12
      // Predicated region
      $region53: #{dense_projection_forward.5} parent=5 // pred_check
        %p758 = pneg %p757
      $region54: #{dense_projection_forward.5} parent=5 // pred_check_branch
        %760 = sbr.rel (%p758) target = $region56
      $region55: #{dense_projection_forward.5} parent=5 // pred_region
        %s761 = ssub.s32 %s12, 2
        // Predicated region
        $region57: #{dense_projection_forward.5} parent=55 // pred_check
          %p762 = pneg %p159
        $region58: #{dense_projection_forward.5} parent=55 // pred_check_branch
          %764 = sbr.rel (%p762) target = $region60
        $region59: #{dense_projection_forward.5} parent=55 // pred_region
          %s765 = smul.u32 32, %s24
          %p766 = scmp.lt.s32.totalorder %s765, 63
          %s767 = scalar_select %p766, %s765, 63
          %p768 = scmp.lt.s32.totalorder %s23, 0
          %s769 = scalar_select %p768, %s23, 0
          %s770 = sadd.s32 %s769, %s767
          %s771 = smul.addr %s770, 4
          %s772 = scalar_lea.vmem %s4, %s771
        $region60: #{dense_projection_forward.5} parent=55 // pred_fallthru
          _
      $region56: #{dense_projection_forward.5} parent=5 // pred_fallthru
        _
    $region6: #{dense_projection_forward.5} parent=1 // loop_footer
      %s16 = sadd.s32 1, %s12
    $region7: #{dense_projection_forward.5} parent=1 // loop_footer_branch
      %11 = sbr.rel target = $region3
    $region8: #{dense_projection_forward.5} parent=1 // loop_exit
      _
    %773 = vsyncpa [#allocation3], 1
    %s774 = scalar_lea.sflag [#allocation3], 1
    %775 = vsyncpa %s774, 1
    %776 = vsyncpa [#allocation5], 1

// kernel: dense_projection_forward.6
$region0: #{dense_projection_forward.6}
  #allocation0 [shape = 'u32[]', space=smem, size = 0x4, offset = 0x4, fixed_abs, tag = 'smem constant byte address 0x4 - core index']
  #allocation1 [shape = 'u32[72,128]{1,0:T(1,128)}', space=vmem, size = 0x9000, scoped, tag = 'internal scratch']
  %s0 = inlined_call_operand.vmem [shape: bf16[512,288], index: 0, kind: input, shape index: {}]
  %s1 = inlined_call_operand.vmem [shape: bf16[288,128], index: 1, kind: input, shape index: {}]
  %s2 = inlined_call_operand.vmem [shape: f32[1,128], index: 2, kind: input, shape index: {}]
  %s3 = inlined_call_operand.vmem [shape: f32[1,128], index: 3, kind: input, shape index: {}]
  %s4 = inlined_call_operand.vmem [shape: bf16[512,128], index: 4, kind: input, shape index: {}]
  %s5 = inlined_call_operand.vmem [shape: bf16[512,128], index: 5, kind: output, shape index: {}]
  %s6 = sld [smem:[#allocation0]]
  $region53: #{dense_projection_forward.6} parent=0
    _
  %s8 = ssub.s32 1, %s6
  %s9 = scalar_select 0, %s8, %s6
  loop: start=0, step=1, limit=4
  $region2: #{dense_projection_forward.6} parent=0 // loop_pre_header
    _
  $region3: #{dense_projection_forward.6} parent=0 // loop_header
    %s11 = sphi 0, %s15
    %p12 = scmp.ge.s32.totalorder %s11, 4
    %s18 = sphi 0, %s30
    %s19 = sphi 0, %s26
    %s20 = sphi 0, %s18
    %s21 = sphi 0, %s19
    %s22 = sphi 0, %s20
    %s23 = sphi 0, %s21
    %s33 = sphi 0, %s35
    %s36 = sphi 0, %s33
    %s37 = sphi 0, %s36
    %s53 = sphi 0, %s37
    %s59 = sphi 0, %s61
    %s62 = sphi 0, %s59
    %s63 = sphi 0, %s62
    %s79 = sphi 0, %s63
    %s85 = sphi 0, %s87
    %s88 = sphi 0, %s85
    %s89 = sphi 0, %s88
    %s105 = sphi 0, %s89
    %s111 = sphi 0, %s113
    %s114 = sphi 0, %s111
    %s115 = sphi 0, %s114
    %s131 = sphi 0, %s115
    %s139 = sphi 0, %s141
    %s142 = sphi 0, %s139
    %s143 = sphi 0, %s142
    %s159 = sphi 0, %s143
    %s167 = sphi 0, %s169
    %s170 = sphi 0, %s167
    %s171 = sphi 0, %s170
    %s187 = sphi 0, %s171
  $region4: #{dense_projection_forward.6} parent=0 // loop_header_branch
    %14 = sbr.rel (%p12) target = $region8
  $region5: #{dense_projection_forward.6} parent=0 // loop_body
    %s16 = ssub.s32 %s11, 1
    %s17 = ssub.s32 %s11, 2
    %s24 = sadd.s32 1, %s19
    %p25 = scmp.ge.s32.totalorder %s24, 2
    %s26 = scalar_select %p25, 0, %s24
    %s27 = sadd.s32 1, %s18
    %s28 = scalar_select %p25, %s27, %s18
    %p29 = scmp.ge.s32.totalorder %s28, 1
    %s30 = scalar_select %p29, 0, %s28
    %s31 = ssub.s32 %s19, %s26
    %p32 = scmp.eq.s32.totalorder %s31, 0
    %s34 = sadd.s32 %s33, 1
    %s35 = scalar_select %p32, %s33, %s34
    %p38 = pneg %p32
    %p39 = scmp.eq.s32.totalorder %s11, 1
    %p40 = por %p38, %p39
    %p41 = scmp.ne.s32.totalorder %s33, %s36
    %p42 = scmp.eq.s32.totalorder %s11, 0
    %p43 = por %p41, %p42
    %p44 = scmp.ne.s32.totalorder %s33, %s36
    %p45 = scmp.eq.s32.totalorder %s16, 1
    %p46 = por %p44, %p45
    %p47 = scmp.ne.s32.totalorder %s36, %s37
    %p48 = scmp.eq.s32.totalorder %s16, 0
    %p49 = por %p47, %p48
    %p50 = scmp.ne.s32.totalorder %s36, %s37
    %p51 = scmp.eq.s32.totalorder %s17, 1
    %p52 = por %p50, %p51
    %p54 = scmp.ne.s32.totalorder %s37, %s53
    %p55 = scmp.eq.s32.totalorder %s17, 0
    %p56 = por %p54, %p55
    %s57 = ssub.s32 %s18, %s30
    %p58 = scmp.eq.s32.totalorder %s57, 0
    %s60 = sadd.s32 %s59, 1
    %s61 = scalar_select %p58, %s59, %s60
    %p64 = pneg %p58
    %p65 = scmp.eq.s32.totalorder %s11, 1
    %p66 = por %p64, %p65
    %p67 = scmp.ne.s32.totalorder %s59, %s62
    %p68 = scmp.eq.s32.totalorder %s11, 0
    %p69 = por %p67, %p68
    %p70 = scmp.ne.s32.totalorder %s59, %s62
    %p71 = scmp.eq.s32.totalorder %s16, 1
    %p72 = por %p70, %p71
    %p73 = scmp.ne.s32.totalorder %s62, %s63
    %p74 = scmp.eq.s32.totalorder %s16, 0
    %p75 = por %p73, %p74
    %p76 = scmp.ne.s32.totalorder %s62, %s63
    %p77 = scmp.eq.s32.totalorder %s17, 1
    %p78 = por %p76, %p77
    %p80 = scmp.ne.s32.totalorder %s63, %s79
    %p81 = scmp.eq.s32.totalorder %s17, 0
    %p82 = por %p80, %p81
    %s83 = ssub.s32 %s18, %s30
    %p84 = scmp.eq.s32.totalorder %s83, 0
    %s86 = sadd.s32 %s85, 1
    %s87 = scalar_select %p84, %s85, %s86
    %p90 = pneg %p84
    %p91 = scmp.eq.s32.totalorder %s11, 1
    %p92 = por %p90, %p91
    %p93 = scmp.ne.s32.totalorder %s85, %s88
    %p94 = scmp.eq.s32.totalorder %s11, 0
    %p95 = por %p93, %p94
    %p96 = scmp.ne.s32.totalorder %s85, %s88
    %p97 = scmp.eq.s32.totalorder %s16, 1
    %p98 = por %p96, %p97
    %p99 = scmp.ne.s32.totalorder %s88, %s89
    %p100 = scmp.eq.s32.totalorder %s16, 0
    %p101 = por %p99, %p100
    %p102 = scmp.ne.s32.totalorder %s88, %s89
    %p103 = scmp.eq.s32.totalorder %s17, 1
    %p104 = por %p102, %p103
    %p106 = scmp.ne.s32.totalorder %s89, %s105
    %p107 = scmp.eq.s32.totalorder %s17, 0
    %p108 = por %p106, %p107
    %s109 = ssub.s32 %s18, %s30
    %p110 = scmp.eq.s32.totalorder %s109, 0
    %s112 = sadd.s32 %s111, 1
    %s113 = scalar_select %p110, %s111, %s112
    %p116 = pneg %p110
    %p117 = scmp.eq.s32.totalorder %s11, 1
    %p118 = por %p116, %p117
    %p119 = scmp.ne.s32.totalorder %s111, %s114
    %p120 = scmp.eq.s32.totalorder %s11, 0
    %p121 = por %p119, %p120
    %p122 = scmp.ne.s32.totalorder %s111, %s114
    %p123 = scmp.eq.s32.totalorder %s16, 1
    %p124 = por %p122, %p123
    %p125 = scmp.ne.s32.totalorder %s114, %s115
    %p126 = scmp.eq.s32.totalorder %s16, 0
    %p127 = por %p125, %p126
    %p128 = scmp.ne.s32.totalorder %s114, %s115
    %p129 = scmp.eq.s32.totalorder %s17, 1
    %p130 = por %p128, %p129
    %p132 = scmp.ne.s32.totalorder %s115, %s131
    %p133 = scmp.eq.s32.totalorder %s17, 0
    %p134 = por %p132, %p133
    %s135 = ssub.s32 %s19, %s26
    %s136 = ssub.s32 %s18, %s30
    %s137 = sor.u32 %s135, %s136
    %p138 = scmp.eq.s32.totalorder %s137, 0
    %s140 = sadd.s32 %s139, 1
    %s141 = scalar_select %p138, %s139, %s140
    %p144 = pneg %p138
    %p145 = scmp.eq.s32.totalorder %s11, 1
    %p146 = por %p144, %p145
    %p147 = scmp.ne.s32.totalorder %s139, %s142
    %p148 = scmp.eq.s32.totalorder %s11, 0
    %p149 = por %p147, %p148
    %p150 = scmp.ne.s32.totalorder %s139, %s142
    %p151 = scmp.eq.s32.totalorder %s16, 1
    %p152 = por %p150, %p151
    %p153 = scmp.ne.s32.totalorder %s142, %s143
    %p154 = scmp.eq.s32.totalorder %s16, 0
    %p155 = por %p153, %p154
    %p156 = scmp.ne.s32.totalorder %s142, %s143
    %p157 = scmp.eq.s32.totalorder %s17, 1
    %p158 = por %p156, %p157
    %p160 = scmp.ne.s32.totalorder %s143, %s159
    %p161 = scmp.eq.s32.totalorder %s17, 0
    %p162 = por %p160, %p161
    %s163 = ssub.s32 %s19, %s26
    %s164 = ssub.s32 %s18, %s30
    %s165 = sor.u32 %s163, %s164
    %p166 = scmp.eq.s32.totalorder %s165, 0
    %s168 = sadd.s32 %s167, 1
    %s169 = scalar_select %p166, %s167, %s168
    %p172 = pneg %p166
    %p173 = scmp.eq.s32.totalorder %s11, 1
    %p174 = por %p172, %p173
    %p175 = scmp.ne.s32.totalorder %s167, %s170
    %p176 = scmp.eq.s32.totalorder %s11, 0
    %p177 = por %p175, %p176
    %p178 = scmp.ne.s32.totalorder %s167, %s170
    %p179 = scmp.eq.s32.totalorder %s16, 1
    %p180 = por %p178, %p179
    %p181 = scmp.ne.s32.totalorder %s170, %s171
    %p182 = scmp.eq.s32.totalorder %s16, 0
    %p183 = por %p181, %p182
    %p184 = scmp.ne.s32.totalorder %s170, %s171
    %p185 = scmp.eq.s32.totalorder %s17, 1
    %p186 = por %p184, %p185
    %p188 = scmp.ne.s32.totalorder %s171, %s187
    %p189 = scmp.eq.s32.totalorder %s17, 0
    %p190 = por %p188, %p189
    %p191 = scmp.le.s32.totalorder 1, %s11
    %p192 = scmp.lt.s32.totalorder %s11, 3
    %p193 = pnand %p191, %p192
    %p194 = pneg %p193
    // Predicated region
    $region9: #{dense_projection_forward.6} parent=5 // pred_check
      _
    $region10: #{dense_projection_forward.6} parent=5 // pred_check_branch
      %196 = sbr.rel (%p193) target = $region12
    $region11: #{dense_projection_forward.6} parent=5 // pred_region
      %s197 = ssub.s32 %s11, 1
      // Predicated region
      $region13: #{dense_projection_forward.6} parent=11 // pred_check
        %p198 = pneg %p75
      $region14: #{dense_projection_forward.6} parent=11 // pred_check_branch
        %200 = sbr.rel (%p198) target = $region16
      $region15: #{dense_projection_forward.6} parent=11 // pred_region
        %p201 = scmp.lt.s32.totalorder %s20, 0
        %s202 = scalar_select %p201, %s20, 0
        %s203 = smul.addr %s202, 4
        %s204 = scalar_lea.vmem %s1, %s203
      $region16: #{dense_projection_forward.6} parent=11 // pred_fallthru
        _
      // Predicated region
      $region17: #{dense_projection_forward.6} parent=11 // pred_check
        %p205 = pneg %p101
      $region18: #{dense_projection_forward.6} parent=11 // pred_check_branch
        %207 = sbr.rel (%p205) target = $region20
      $region19: #{dense_projection_forward.6} parent=11 // pred_region
        %p208 = scmp.lt.s32.totalorder %s20, 0
        %s209 = scalar_select %p208, %s20, 0
        %s210 = scalar_lea.vmem %s2, %s209
      $region20: #{dense_projection_forward.6} parent=11 // pred_fallthru
        _
      // Predicated region
      $region21: #{dense_projection_forward.6} parent=11 // pred_check
        %p211 = pneg %p127
      $region22: #{dense_projection_forward.6} parent=11 // pred_check_branch
        %213 = sbr.rel (%p211) target = $region24
      $region23: #{dense_projection_forward.6} parent=11 // pred_region
        %p214 = scmp.lt.s32.totalorder %s20, 0
        %s215 = scalar_select %p214, %s20, 0
        %s216 = scalar_lea.vmem %s3, %s215
      $region24: #{dense_projection_forward.6} parent=11 // pred_fallthru
        _
    $region12: #{dense_projection_forward.6} parent=5 // pred_fallthru
      _
    %p217 = scmp.lt.s32.totalorder %s11, 2
    // Predicated region
    $region25: #{dense_projection_forward.6} parent=5 // pred_check
      %p218 = pneg %p217
    $region26: #{dense_projection_forward.6} parent=5 // pred_check_branch
      %220 = sbr.rel (%p218) target = $region28
    $region27: #{dense_projection_forward.6} parent=5 // pred_region
      // Predicated region
      $region29: #{dense_projection_forward.6} parent=27 // pred_check
        %p221 = pneg %p43
      $region30: #{dense_projection_forward.6} parent=27 // pred_check_branch
        %223 = sbr.rel (%p221) target = $region32
      $region31: #{dense_projection_forward.6} parent=27 // pred_region
        %s224 = smul.u32 32, %s19
        %p225 = scmp.lt.s32.totalorder %s224, 63
        %s226 = scalar_select %p225, %s224, 63
        %s227 = smul.addr %s226, 3
        %s228 = smul.addr %s227, 4
        %s229 = scalar_lea.vmem %s0, %s228
        %s230 = smul.u32 32, %s19
      $region32: #{dense_projection_forward.6} parent=27 // pred_fallthru
        _
      // Predicated region
      $region33: #{dense_projection_forward.6} parent=27 // pred_check
        %p231 = pneg %p149
      $region34: #{dense_projection_forward.6} parent=27 // pred_check_branch
        %233 = sbr.rel (%p231) target = $region36
      $region35: #{dense_projection_forward.6} parent=27 // pred_region
        %s234 = smul.u32 32, %s19
        %p235 = scmp.lt.s32.totalorder %s234, 63
        %s236 = scalar_select %p235, %s234, 63
        %p237 = scmp.lt.s32.totalorder %s18, 0
        %s238 = scalar_select %p237, %s18, 0
        %s239 = sadd.s32 %s238, %s236
        %s240 = smul.addr %s239, 4
        %s241 = scalar_lea.vmem %s4, %s240
        %s242 = smul.u32 32, %s19
      $region36: #{dense_projection_forward.6} parent=27 // pred_fallthru
        _
    $region28: #{dense_projection_forward.6} parent=5 // pred_fallthru
      _
    %p243 = scmp.le.s32.totalorder 1, %s11
    %p244 = scmp.lt.s32.totalorder %s11, 3
    %p245 = pnand %p243, %p244
    %p246 = pneg %p245
    // Predicated region
    $region37: #{dense_projection_forward.6} parent=5 // pred_check
      _
    $region38: #{dense_projection_forward.6} parent=5 // pred_check_branch
      %248 = sbr.rel (%p245) target = $region40
    $region39: #{dense_projection_forward.6} parent=5 // pred_region
      %s249 = ssub.s32 %s11, 1
      %s250 = smul.u32 32, %s21
      %p251 = scmp.lt.s32.totalorder %s250, 63
      %s252 = scalar_select %p251, %s250, 63
      %s253 = smul.addr %s252, 3
      %s254 = smul.addr %s253, 4
      %s255 = scalar_lea.vmem %s0, %s254
      %p256 = pneg %p49
      %p257 = pneg %p46
      %p258 = scmp.lt.s32.totalorder %s20, 0
      %s259 = scalar_select %p258, %s20, 0
      %s260 = smul.addr %s259, 4
      %s261 = scalar_lea.vmem %s1, %s260
      %p262 = pneg %p75
      %p263 = pneg %p72
      %p264 = scmp.lt.s32.totalorder %s20, 0
      %s265 = scalar_select %p264, %s20, 0
      %s266 = scalar_lea.vmem %s2, %s265
      %p267 = pneg %p101
      %p268 = pneg %p98
      %p269 = scmp.lt.s32.totalorder %s20, 0
      %s270 = scalar_select %p269, %s20, 0
      %s271 = scalar_lea.vmem %s3, %s270
      %p272 = pneg %p127
      %p273 = pneg %p124
      %s274 = smul.u32 32, %s21
      %p275 = scmp.lt.s32.totalorder %s274, 63
      %s276 = scalar_select %p275, %s274, 63
      %p277 = scmp.lt.s32.totalorder %s20, 0
      %s278 = scalar_select %p277, %s20, 0
      %s279 = sadd.s32 %s278, %s276
      %s280 = smul.addr %s279, 4
      %s281 = scalar_lea.vmem %s4, %s280
      %p282 = pneg %p155
      %p283 = pneg %p152
      %p284 = pneg %p183
      %p285 = pneg %p180
      %s286 = smul.u32 32, %s21
      %p287 = scmp.lt.s32.totalorder %s286, 63
      %s288 = scalar_select %p287, %s286, 63
      %p289 = scmp.lt.s32.totalorder %s20, 0
      %s290 = scalar_select %p289, %s20, 0
      %s291 = sadd.s32 %s290, %s288
      %s292 = smul.addr %s291, 4
      %s293 = scalar_lea.vmem %s5, %s292
      %s294 = smul.u32 32, %s21
      %p295 = scmp.lt.s32.totalorder %s294, 63
      %s296 = scalar_select %p295, %s294, 63
      %s297 = smul.addr %s296, 3
      %s298 = smul.addr %s297, 4
      %s299 = scalar_lea.vmem %s0, %s298
      %s300 = smul.u32 32, %s21
      %p301 = scmp.lt.s32.totalorder %s20, 0
      %s302 = scalar_select %p301, %s20, 0
      %s303 = smul.addr %s302, 4
      %s304 = scalar_lea.vmem %s1, %s303
      %p305 = scmp.lt.s32.totalorder %s20, 0
      %s306 = scalar_select %p305, %s20, 0
      %s307 = scalar_lea.vmem %s2, %s306
      %p308 = scmp.lt.s32.totalorder %s20, 0
      %s309 = scalar_select %p308, %s20, 0
      %s310 = scalar_lea.vmem %s3, %s309
      %s311 = smul.u32 32, %s21
      %p312 = scmp.lt.s32.totalorder %s311, 63
      %s313 = scalar_select %p312, %s311, 63
      %p314 = scmp.lt.s32.totalorder %s20, 0
      %s315 = scalar_select %p314, %s20, 0
      %s316 = sadd.s32 %s315, %s313
      %s317 = smul.addr %s316, 4
      %s318 = scalar_lea.vmem %s4, %s317
      %s319 = smul.u32 32, %s21
      %s320 = smul.u32 32, %s21
      %p321 = scmp.lt.s32.totalorder %s320, 63
      %s322 = scalar_select %p321, %s320, 63
      %p323 = scmp.lt.s32.totalorder %s20, 0
      %s324 = scalar_select %p323, %s20, 0
      %s325 = sadd.s32 %s324, %s322
      %s326 = smul.addr %s325, 4
      %s327 = scalar_lea.vmem %s5, %s326
      %s328 = smul.u32 32, %s21
      %v330 = vld [vmem:[%s299] sm:$0xff]
      %v331 = vld [vmem:[%s299 + $0x8] sm:$0xf]
      %v332 = vld [vmem:[%s299 + $0xc] sm:$0xff]
      %v333 = vld [vmem:[%s299 + $0x14] sm:$0xf]
      %v334 = vld [vmem:[%s299 + $0x18] sm:$0xff]
      %v335 = vld [vmem:[%s299 + $0x20] sm:$0xf]
      %v336 = vld [vmem:[%s299 + $0x24] sm:$0xff]
      %v337 = vld [vmem:[%s299 + $0x2c] sm:$0xf]
      %v338 = vld [vmem:[%s299 + $0x30] sm:$0xff]
      %v339 = vld [vmem:[%s299 + $0x38] sm:$0xf]
      %v340 = vld [vmem:[%s299 + $0x3c] sm:$0xff]
      %v341 = vld [vmem:[%s299 + $0x44] sm:$0xf]
      %v342 = vld [vmem:[%s299 + $0x48] sm:$0xff]
      %v343 = vld [vmem:[%s299 + $0x50] sm:$0xf]
      %v344 = vld [vmem:[%s299 + $0x54] sm:$0xff]
      %v345 = vld [vmem:[%s299 + $0x5c] sm:$0xf]
      %v346 = vld [vmem:[%s299 + $0x60] sm:$0xff]
      %v347 = vld [vmem:[%s299 + $0x68] sm:$0xf]
      %v348 = vld [vmem:[%s299 + $0x6c] sm:$0xff]
      %v349 = vld [vmem:[%s299 + $0x74] sm:$0xf]
      %v350 = vld [vmem:[%s299 + $0x78] sm:$0xff]
      %v351 = vld [vmem:[%s299 + $0x80] sm:$0xf]
      %v352 = vld [vmem:[%s299 + $0x84] sm:$0xff]
      %v353 = vld [vmem:[%s299 + $0x8c] sm:$0xf]
      %v354 = vld [vmem:[%s299 + $0x90] sm:$0xff]
      %v355 = vld [vmem:[%s299 + $0x98] sm:$0xf]
      %v356 = vld [vmem:[%s299 + $0x9c] sm:$0xff]
      %v357 = vld [vmem:[%s299 + $0xa4] sm:$0xf]
      %v358 = vld [vmem:[%s299 + $0xa8] sm:$0xff]
      %v359 = vld [vmem:[%s299 + $0xb0] sm:$0xf]
      %v360 = vld [vmem:[%s299 + $0xb4] sm:$0xff]
      %v361 = vld [vmem:[%s299 + $0xbc] sm:$0xf]
      %v362 = vld [vmem:[%s299 + $0xc0] sm:$0xff]
      %v363 = vld [vmem:[%s299 + $0xc8] sm:$0xf]
      %v364 = vld [vmem:[%s299 + $0xcc] sm:$0xff]
      %v365 = vld [vmem:[%s299 + $0xd4] sm:$0xf]
      %v366 = vld [vmem:[%s299 + $0xd8] sm:$0xff]
      %v367 = vld [vmem:[%s299 + $0xe0] sm:$0xf]
      %v368 = vld [vmem:[%s299 + $0xe4] sm:$0xff]
      %v369 = vld [vmem:[%s299 + $0xec] sm:$0xf]
      %v370 = vld [vmem:[%s299 + $0xf0] sm:$0xff]
      %v371 = vld [vmem:[%s299 + $0xf8] sm:$0xf]
      %v372 = vld [vmem:[%s299 + $0xfc] sm:$0xff]
      %v373 = vld [vmem:[%s299 + $0x104] sm:$0xf]
      %v374 = vld [vmem:[%s299 + $0x108] sm:$0xff]
      %v375 = vld [vmem:[%s299 + $0x110] sm:$0xf]
      %v376 = vld [vmem:[%s299 + $0x114] sm:$0xff]
      %v377 = vld [vmem:[%s299 + $0x11c] sm:$0xf]
      %v378 = vld [vmem:[%s299 + $0x120] sm:$0xff]
      %v379 = vld [vmem:[%s299 + $0x128] sm:$0xf]
      %v380 = vld [vmem:[%s299 + $0x12c] sm:$0xff]
      %v381 = vld [vmem:[%s299 + $0x134] sm:$0xf]
      %v382 = vld [vmem:[%s299 + $0x138] sm:$0xff]
      %v383 = vld [vmem:[%s299 + $0x140] sm:$0xf]
      %v384 = vld [vmem:[%s299 + $0x144] sm:$0xff]
      %v385 = vld [vmem:[%s299 + $0x14c] sm:$0xf]
      %v386 = vld [vmem:[%s299 + $0x150] sm:$0xff]
      %v387 = vld [vmem:[%s299 + $0x158] sm:$0xf]
      %v388 = vld [vmem:[%s299 + $0x15c] sm:$0xff]
      %v389 = vld [vmem:[%s299 + $0x164] sm:$0xf]
      %v390 = vld [vmem:[%s299 + $0x168] sm:$0xff]
      %v391 = vld [vmem:[%s299 + $0x170] sm:$0xf]
      %v392 = vld [vmem:[%s299 + $0x174] sm:$0xff]
      %v393 = vld [vmem:[%s299 + $0x17c] sm:$0xf]
      %v394 = vld [vmem:[%s304] sm:$0xf]
      %v395 = vld [vmem:[%s304 + $0x4] sm:$0xf]
      %v396 = vld [vmem:[%s304 + $0x8] sm:$0xf]
      %v397 = vld [vmem:[%s304 + $0xc] sm:$0xf]
      %v398 = vld [vmem:[%s304 + $0x10] sm:$0xf]
      %v399 = vld [vmem:[%s304 + $0x14] sm:$0xf]
      %v400 = vld [vmem:[%s304 + $0x18] sm:$0xf]
      %v401 = vld [vmem:[%s304 + $0x1c] sm:$0xf]
      %v402 = vld [vmem:[%s304 + $0x20] sm:$0xf]
      %v403 = vld [vmem:[%s304 + $0x24] sm:$0xf]
      %v404 = vld [vmem:[%s304 + $0x28] sm:$0xf]
      %v405 = vld [vmem:[%s304 + $0x2c] sm:$0xf]
      %v406 = vld [vmem:[%s304 + $0x30] sm:$0xf]
      %v407 = vld [vmem:[%s304 + $0x34] sm:$0xf]
      %v408 = vld [vmem:[%s304 + $0x38] sm:$0xf]
      %v409 = vld [vmem:[%s304 + $0x3c] sm:$0xf]
      %v410 = vld [vmem:[%s304 + $0x40] sm:$0xf]
      %v411 = vld [vmem:[%s304 + $0x44] sm:$0xf]
      %v412 = vld [vmem:[%s304 + $0x48] sm:$0xf]
      %v413 = vld [vmem:[%s304 + $0x4c] sm:$0xf]
      %v414 = vld [vmem:[%s304 + $0x50] sm:$0xf]
      %v415 = vld [vmem:[%s304 + $0x54] sm:$0xf]
      %v416 = vld [vmem:[%s304 + $0x58] sm:$0xf]
      %v417 = vld [vmem:[%s304 + $0x5c] sm:$0xf]
      %v418 = vld [vmem:[%s304 + $0x60] sm:$0xf]
      %v419 = vld [vmem:[%s304 + $0x64] sm:$0xf]
      %v420 = vld [vmem:[%s304 + $0x68] sm:$0xf]
      %v421 = vld [vmem:[%s304 + $0x6c] sm:$0xf]
      %v422 = vld [vmem:[%s304 + $0x70] sm:$0xf]
      %v423 = vld [vmem:[%s304 + $0x74] sm:$0xf]
      %v424 = vld [vmem:[%s304 + $0x78] sm:$0xf]
      %v425 = vld [vmem:[%s304 + $0x7c] sm:$0xf]
      %v426 = vld [vmem:[%s304 + $0x80] sm:$0xf]
      %v427 = vld [vmem:[%s304 + $0x84] sm:$0xf]
      %v428 = vld [vmem:[%s304 + $0x88] sm:$0xf]
      %v429 = vld [vmem:[%s304 + $0x8c] sm:$0xf]
      %v430 = vld [vmem:[%s307] sm:$0x1]
      %v432 = vperm.slane %v430, 0
      %v498 = vunpack.c.l.b16 %v330
      %v499 = vunpack.c.h.b16 %v330
      %v500 = vunpack.c.l.b16 %v331
      %v501 = vunpack.c.l.b16 %v332
      %v502 = vunpack.c.h.b16 %v332
      %v503 = vunpack.c.l.b16 %v333
      %v504 = vunpack.c.l.b16 %v334
      %v505 = vunpack.c.h.b16 %v334
      %v506 = vunpack.c.l.b16 %v335
      %v507 = vunpack.c.l.b16 %v336
      %v508 = vunpack.c.h.b16 %v336
      %v509 = vunpack.c.l.b16 %v337
      %v510 = vunpack.c.l.b16 %v338
      %v511 = vunpack.c.h.b16 %v338
      %v512 = vunpack.c.l.b16 %v339
      %v513 = vunpack.c.l.b16 %v340
      %v514 = vunpack.c.h.b16 %v340
      %v515 = vunpack.c.l.b16 %v341
      %v516 = vunpack.c.l.b16 %v342
      %v517 = vunpack.c.h.b16 %v342
      %v518 = vunpack.c.l.b16 %v343
      %v519 = vunpack.c.l.b16 %v344
      %v520 = vunpack.c.h.b16 %v344
      %v521 = vunpack.c.l.b16 %v345
      %v522 = vunpack.c.l.b16 %v346
      %v523 = vunpack.c.h.b16 %v346
      %v524 = vunpack.c.l.b16 %v347
      %v525 = vunpack.c.l.b16 %v348
      %v526 = vunpack.c.h.b16 %v348
      %v527 = vunpack.c.l.b16 %v349
      %v528 = vunpack.c.l.b16 %v350
      %v529 = vunpack.c.h.b16 %v350
      %v530 = vunpack.c.l.b16 %v351
      %v531 = vunpack.c.l.b16 %v352
      %v532 = vunpack.c.h.b16 %v352
      %v533 = vunpack.c.l.b16 %v353
      %v534 = vunpack.c.l.b16 %v354
      %v535 = vunpack.c.h.b16 %v354
      %v536 = vunpack.c.l.b16 %v355
      %v537 = vunpack.c.l.b16 %v356
      %v538 = vunpack.c.h.b16 %v356
      %v539 = vunpack.c.l.b16 %v357
      %v540 = vunpack.c.l.b16 %v358
      %v541 = vunpack.c.h.b16 %v358
      %v542 = vunpack.c.l.b16 %v359
      %v543 = vunpack.c.l.b16 %v360
      %v544 = vunpack.c.h.b16 %v360
      %v545 = vunpack.c.l.b16 %v361
      %v546 = vunpack.c.l.b16 %v362
      %v547 = vunpack.c.h.b16 %v362
      %v548 = vunpack.c.l.b16 %v363
      %v549 = vunpack.c.l.b16 %v364
      %v550 = vunpack.c.h.b16 %v364
      %v551 = vunpack.c.l.b16 %v365
      %v552 = vunpack.c.l.b16 %v366
      %v553 = vunpack.c.h.b16 %v366
      %v554 = vunpack.c.l.b16 %v367
      %v555 = vunpack.c.l.b16 %v368
      %v556 = vunpack.c.h.b16 %v368
      %v557 = vunpack.c.l.b16 %v369
      %v558 = vunpack.c.l.b16 %v370
      %v559 = vunpack.c.h.b16 %v370
      %v560 = vunpack.c.l.b16 %v371
      %v561 = vunpack.c.l.b16 %v372
      %v562 = vunpack.c.h.b16 %v372
      %v563 = vunpack.c.l.b16 %v373
      %v564 = vunpack.c.l.b16 %v374
      %v565 = vunpack.c.h.b16 %v374
      %v566 = vunpack.c.l.b16 %v375
      %v567 = vunpack.c.l.b16 %v376
      %v568 = vunpack.c.h.b16 %v376
      %v569 = vunpack.c.l.b16 %v377
      %v570 = vunpack.c.l.b16 %v378
      %v571 = vunpack.c.h.b16 %v378
      %v572 = vunpack.c.l.b16 %v379
      %v573 = vunpack.c.l.b16 %v380
      %v574 = vunpack.c.h.b16 %v380
      %v575 = vunpack.c.l.b16 %v381
      %v576 = vunpack.c.l.b16 %v382
      %v577 = vunpack.c.h.b16 %v382
      %v578 = vunpack.c.l.b16 %v383
      %v579 = vunpack.c.l.b16 %v384
      %v580 = vunpack.c.h.b16 %v384
      %v581 = vunpack.c.l.b16 %v385
      %v582 = vunpack.c.l.b16 %v386
      %v583 = vunpack.c.h.b16 %v386
      %v584 = vunpack.c.l.b16 %v387
      %v585 = vunpack.c.l.b16 %v388
      %v586 = vunpack.c.h.b16 %v388
      %v587 = vunpack.c.l.b16 %v389
      %v588 = vunpack.c.l.b16 %v390
      %v589 = vunpack.c.h.b16 %v390
      %v590 = vunpack.c.l.b16 %v391
      %v591 = vunpack.c.l.b16 %v392
      %v592 = vunpack.c.h.b16 %v392
      %v593 = vunpack.c.l.b16 %v393
      %v594 = vpack.c.b16 %v501, %v498
      %v595 = vpack.c.b16 %v502, %v499
      %v596 = vpack.c.b16 %v503, %v500
      %v597 = vpack.c.b16 %v507, %v504
      %v598 = vpack.c.b16 %v508, %v505
      %v599 = vpack.c.b16 %v509, %v506
      %v600 = vpack.c.b16 %v513, %v510
      %v601 = vpack.c.b16 %v514, %v511
      %v602 = vpack.c.b16 %v515, %v512
      %v603 = vpack.c.b16 %v519, %v516
      %v604 = vpack.c.b16 %v520, %v517
      %v605 = vpack.c.b16 %v521, %v518
      %v606 = vpack.c.b16 %v525, %v522
      %v607 = vpack.c.b16 %v526, %v523
      %v608 = vpack.c.b16 %v527, %v524
      %v609 = vpack.c.b16 %v531, %v528
      %v610 = vpack.c.b16 %v532, %v529
      %v611 = vpack.c.b16 %v533, %v530
      %v612 = vpack.c.b16 %v537, %v534
      %v613 = vpack.c.b16 %v538, %v535
      %v614 = vpack.c.b16 %v539, %v536
      %v615 = vpack.c.b16 %v543, %v540
      %v616 = vpack.c.b16 %v544, %v541
      %v617 = vpack.c.b16 %v545, %v542
      %v618 = vpack.c.b16 %v549, %v546
      %v619 = vpack.c.b16 %v550, %v547
      %v620 = vpack.c.b16 %v551, %v548
      %v621 = vpack.c.b16 %v555, %v552
      %v622 = vpack.c.b16 %v556, %v553
      %v623 = vpack.c.b16 %v557, %v554
      %v624 = vpack.c.b16 %v561, %v558
      %v625 = vpack.c.b16 %v562, %v559
      %v626 = vpack.c.b16 %v563, %v560
      %v627 = vpack.c.b16 %v567, %v564
      %v628 = vpack.c.b16 %v568, %v565
      %v629 = vpack.c.b16 %v569, %v566
      %v630 = vpack.c.b16 %v573, %v570
      %v631 = vpack.c.b16 %v574, %v571
      %v632 = vpack.c.b16 %v575, %v572
      %v633 = vpack.c.b16 %v579, %v576
      %v634 = vpack.c.b16 %v580, %v577
      %v635 = vpack.c.b16 %v581, %v578
      %v636 = vpack.c.b16 %v585, %v582
      %v637 = vpack.c.b16 %v586, %v583
      %v638 = vpack.c.b16 %v587, %v584
      %v639 = vpack.c.b16 %v591, %v588
      %v640 = vpack.c.b16 %v592, %v589
      %v641 = vpack.c.b16 %v593, %v590
      %v710 = vunpack.c.l.b16 %v394
      %v711 = vunpack.c.l.b16 %v395
      %v712 = vunpack.c.l.b16 %v396
      %v713 = vunpack.c.l.b16 %v397
      %v714 = vunpack.c.l.b16 %v398
      %v715 = vunpack.c.l.b16 %v399
      %v716 = vunpack.c.l.b16 %v400
      %v717 = vunpack.c.l.b16 %v401
      %v718 = vunpack.c.l.b16 %v402
      %v719 = vunpack.c.l.b16 %v403
      %v720 = vunpack.c.l.b16 %v404
      %v721 = vunpack.c.l.b16 %v405
      %v722 = vunpack.c.l.b16 %v406
      %v723 = vunpack.c.l.b16 %v407
      %v724 = vunpack.c.l.b16 %v408
      %v725 = vunpack.c.l.b16 %v409
      %v726 = vunpack.c.l.b16 %v410
      %v727 = vunpack.c.l.b16 %v411
      %v728 = vunpack.c.l.b16 %v412
      %v729 = vunpack.c.l.b16 %v413
      %v730 = vunpack.c.l.b16 %v414
      %v731 = vunpack.c.l.b16 %v415
      %v732 = vunpack.c.l.b16 %v416
      %v733 = vunpack.c.l.b16 %v417
      %v734 = vunpack.c.l.b16 %v418
      %v735 = vunpack.c.l.b16 %v419
      %v736 = vunpack.c.l.b16 %v420
      %v737 = vunpack.c.l.b16 %v421
      %v738 = vunpack.c.l.b16 %v422
      %v739 = vunpack.c.l.b16 %v423
      %v740 = vunpack.c.l.b16 %v424
      %v741 = vunpack.c.l.b16 %v425
      %v742 = vunpack.c.l.b16 %v426
      %v743 = vunpack.c.l.b16 %v427
      %v744 = vunpack.c.l.b16 %v428
      %v745 = vunpack.c.l.b16 %v429
      %v746 = vpack.c.b16 %v711, %v710
      %v747 = vpack.c.b16 %v713, %v712
      %v748 = vpack.c.b16 %v715, %v714
      %v749 = vpack.c.b16 %v717, %v716
      %v750 = vpack.c.b16 %v719, %v718
      %v751 = vpack.c.b16 %v721, %v720
      %v752 = vpack.c.b16 %v723, %v722
      %v753 = vpack.c.b16 %v725, %v724
      %v754 = vpack.c.b16 %v727, %v726
      %v755 = vpack.c.b16 %v729, %v728
      %v756 = vpack.c.b16 %v731, %v730
      %v757 = vpack.c.b16 %v733, %v732
      %v758 = vpack.c.b16 %v735, %v734
      %v759 = vpack.c.b16 %v737, %v736
      %v760 = vpack.c.b16 %v739, %v738
      %v761 = vpack.c.b16 %v741, %v740
      %v762 = vpack.c.b16 %v743, %v742
      %v763 = vpack.c.b16 %v745, %v744
      %vm782 = vcmask 261120
      %v784 = vsel %vm782, %v596, 0
      %v787 = vsel %vm782, %v599, 0
      %v790 = vsel %vm782, %v602, 0
      %v793 = vsel %vm782, %v605, 0
      %v796 = vsel %vm782, %v608, 0
      %v799 = vsel %vm782, %v611, 0
      %v802 = vsel %vm782, %v614, 0
      %v805 = vsel %vm782, %v617, 0
      %v808 = vsel %vm782, %v620, 0
      %v811 = vsel %vm782, %v623, 0
      %v814 = vsel %vm782, %v626, 0
      %v817 = vsel %vm782, %v629, 0
      %v820 = vsel %vm782, %v632, 0
      %v823 = vsel %vm782, %v635, 0
      %v826 = vsel %vm782, %v638, 0
      %v829 = vsel %vm782, %v641, 0
      %831 = vmatpush.bf16.msra.mxu0 %v753
      %832 = vmatpush.bf16.msra.mxu0 %v752
      %833 = vmatpush.bf16.msra.mxu0 %v751
      %834 = vmatpush.bf16.msra.mxu0 %v750
      %835 = vmatpush.bf16.msra.mxu0 %v749
      %836 = vmatpush.bf16.msra.mxu0 %v748
      %837 = vmatpush.bf16.msra.mxu0 %v747
      %838 = vmatpush.bf16.msra.mxu0 %v746
      %839 = vmatmul.bf16.gmra.mxu0 %v594
      %v840 = vpop.f32.mrf.mxu0
      %v841 = vadd.f32 %v432, %v840
      %v842 = vpop.f32.mrf.mxu0
      %v843 = vadd.f32 %v432, %v842
      %844 = vmatmul.bf16.gmra.mxu0 %v597
      %v845 = vpop.f32.mrf.mxu0
      %v846 = vadd.f32 %v432, %v845
      %v847 = vpop.f32.mrf.mxu0
      %v848 = vadd.f32 %v432, %v847
      %849 = vmatmul.bf16.gmra.mxu0 %v600
      %v850 = vpop.f32.mrf.mxu0
      %v851 = vadd.f32 %v432, %v850
      %v852 = vpop.f32.mrf.mxu0
      %v853 = vadd.f32 %v432, %v852
      %854 = vmatmul.bf16.gmra.mxu0 %v603
      %v855 = vpop.f32.mrf.mxu0
      %v856 = vadd.f32 %v432, %v855
      %v857 = vpop.f32.mrf.mxu0
      %v858 = vadd.f32 %v432, %v857
      %859 = vmatmul.bf16.gmra.mxu0 %v606
      %v860 = vpop.f32.mrf.mxu0
      %v861 = vadd.f32 %v432, %v860
      %v862 = vpop.f32.mrf.mxu0
      %v863 = vadd.f32 %v432, %v862
      %864 = vmatmul.bf16.gmra.mxu0 %v609
      %v865 = vpop.f32.mrf.mxu0
      %v866 = vadd.f32 %v432, %v865
      %v867 = vpop.f32.mrf.mxu0
      %v868 = vadd.f32 %v432, %v867
      %869 = vmatmul.bf16.gmra.mxu0 %v612
      %v870 = vpop.f32.mrf.mxu0
      %v871 = vadd.f32 %v432, %v870
      %v872 = vpop.f32.mrf.mxu0
      %v873 = vadd.f32 %v432, %v872
      %874 = vmatmul.bf16.gmra.mxu0 %v615
      %v875 = vpop.f32.mrf.mxu0
      %v876 = vadd.f32 %v432, %v875
      %v877 = vpop.f32.mrf.mxu0
      %v878 = vadd.f32 %v432, %v877
      %879 = vmatmul.bf16.gmra.mxu0 %v618
      %v880 = vpop.f32.mrf.mxu0
      %v881 = vadd.f32 %v432, %v880
      %v882 = vpop.f32.mrf.mxu0
      %v883 = vadd.f32 %v432, %v882
      %884 = vmatmul.bf16.gmra.mxu0 %v621
      %v885 = vpop.f32.mrf.mxu0
      %v886 = vadd.f32 %v432, %v885
      %v887 = vpop.f32.mrf.mxu0
      %v888 = vadd.f32 %v432, %v887
      %889 = vmatmul.bf16.gmra.mxu0 %v624
      %v890 = vpop.f32.mrf.mxu0
      %v891 = vadd.f32 %v432, %v890
      %v892 = vpop.f32.mrf.mxu0
      %v893 = vadd.f32 %v432, %v892
      %894 = vmatmul.bf16.gmra.mxu0 %v627
      %v895 = vpop.f32.mrf.mxu0
      %v896 = vadd.f32 %v432, %v895
      %v897 = vpop.f32.mrf.mxu0
      %v898 = vadd.f32 %v432, %v897
      %899 = vmatmul.bf16.gmra.mxu0 %v630
      %v900 = vpop.f32.mrf.mxu0
      %v901 = vadd.f32 %v432, %v900
      %v902 = vpop.f32.mrf.mxu0
      %v903 = vadd.f32 %v432, %v902
      %904 = vmatmul.bf16.gmra.mxu0 %v633
      %v905 = vpop.f32.mrf.mxu0
      %v906 = vadd.f32 %v432, %v905
      %v907 = vpop.f32.mrf.mxu0
      %v908 = vadd.f32 %v432, %v907
      %909 = vmatmul.bf16.gmra.mxu0 %v636
      %v910 = vpop.f32.mrf.mxu0
      %v911 = vadd.f32 %v432, %v910
      %v912 = vpop.f32.mrf.mxu0
      %v913 = vadd.f32 %v432, %v912
      %914 = vmatmul.bf16.gmra.mxu0 %v639
      %v915 = vpop.f32.mrf.mxu0
      %v916 = vadd.f32 %v432, %v915
      %v917 = vpop.f32.mrf.mxu0
      %v918 = vadd.f32 %v432, %v917
      %919 = vdwg.mxu0
      %920 = vmatpush.bf16.msra.mxu0 %v761
      %921 = vmatpush.bf16.msra.mxu0 %v760
      %922 = vmatpush.bf16.msra.mxu0 %v759
      %923 = vmatpush.bf16.msra.mxu0 %v758
      %924 = vmatpush.bf16.msra.mxu0 %v757
      %925 = vmatpush.bf16.msra.mxu0 %v756
      %926 = vmatpush.bf16.msra.mxu0 %v755
      %927 = vmatpush.bf16.msra.mxu0 %v754
      %928 = vmatmul.bf16.gmra.mxu0 %v595
      %v929 = vpop.f32.mrf.mxu0
      %v930 = vadd.f32 %v841, %v929
      %v931 = vpop.f32.mrf.mxu0
      %v932 = vadd.f32 %v843, %v931
      %933 = vmatmul.bf16.gmra.mxu0 %v598
      %v934 = vpop.f32.mrf.mxu0
      %v935 = vadd.f32 %v846, %v934
      %v936 = vpop.f32.mrf.mxu0
      %v937 = vadd.f32 %v848, %v936
      %938 = vmatmul.bf16.gmra.mxu0 %v601
      %v939 = vpop.f32.mrf.mxu0
      %v940 = vadd.f32 %v851, %v939
      %v941 = vpop.f32.mrf.mxu0
      %v942 = vadd.f32 %v853, %v941
      %943 = vmatmul.bf16.gmra.mxu0 %v604
      %v944 = vpop.f32.mrf.mxu0
      %v945 = vadd.f32 %v856, %v944
      %v946 = vpop.f32.mrf.mxu0
      %v947 = vadd.f32 %v858, %v946
      %948 = vmatmul.bf16.gmra.mxu0 %v607
      %v949 = vpop.f32.mrf.mxu0
      %v950 = vadd.f32 %v861, %v949
      %v951 = vpop.f32.mrf.mxu0
      %v952 = vadd.f32 %v863, %v951
      %953 = vmatmul.bf16.gmra.mxu0 %v610
      %v954 = vpop.f32.mrf.mxu0
      %v955 = vadd.f32 %v866, %v954
      %v956 = vpop.f32.mrf.mxu0
      %v957 = vadd.f32 %v868, %v956
      %958 = vmatmul.bf16.gmra.mxu0 %v613
      %v959 = vpop.f32.mrf.mxu0
      %v960 = vadd.f32 %v871, %v959
      %v961 = vpop.f32.mrf.mxu0
      %v962 = vadd.f32 %v873, %v961
      %963 = vmatmul.bf16.gmra.mxu0 %v616
      %v964 = vpop.f32.mrf.mxu0
      %v965 = vadd.f32 %v876, %v964
      %v966 = vpop.f32.mrf.mxu0
      %v967 = vadd.f32 %v878, %v966
      %968 = vmatmul.bf16.gmra.mxu0 %v619
      %v969 = vpop.f32.mrf.mxu0
      %v970 = vadd.f32 %v881, %v969
      %v971 = vpop.f32.mrf.mxu0
      %v972 = vadd.f32 %v883, %v971
      %973 = vmatmul.bf16.gmra.mxu0 %v622
      %v974 = vpop.f32.mrf.mxu0
      %v975 = vadd.f32 %v886, %v974
      %v976 = vpop.f32.mrf.mxu0
      %v977 = vadd.f32 %v888, %v976
      %978 = vmatmul.bf16.gmra.mxu0 %v625
      %v979 = vpop.f32.mrf.mxu0
      %v980 = vadd.f32 %v891, %v979
      %v981 = vpop.f32.mrf.mxu0
      %v982 = vadd.f32 %v893, %v981
      %983 = vmatmul.bf16.gmra.mxu0 %v628
      %v984 = vpop.f32.mrf.mxu0
      %v985 = vadd.f32 %v896, %v984
      %v986 = vpop.f32.mrf.mxu0
      %v987 = vadd.f32 %v898, %v986
      %988 = vmatmul.bf16.gmra.mxu0 %v631
      %v989 = vpop.f32.mrf.mxu0
      %v990 = vadd.f32 %v901, %v989
      %v991 = vpop.f32.mrf.mxu0
      %v992 = vadd.f32 %v903, %v991
      %993 = vmatmul.bf16.gmra.mxu0 %v634
      %v994 = vpop.f32.mrf.mxu0
      %v995 = vadd.f32 %v906, %v994
      %v996 = vpop.f32.mrf.mxu0
      %v997 = vadd.f32 %v908, %v996
      %998 = vmatmul.bf16.gmra.mxu0 %v637
      %v999 = vpop.f32.mrf.mxu0
      %v1000 = vadd.f32 %v911, %v999
      %v1001 = vpop.f32.mrf.mxu0
      %v1002 = vadd.f32 %v913, %v1001
      %1003 = vmatmul.bf16.gmra.mxu0 %v640
      %v1004 = vpop.f32.mrf.mxu0
      %v1005 = vadd.f32 %v916, %v1004
      %v1006 = vpop.f32.mrf.mxu0
      %v1007 = vadd.f32 %v918, %v1006
      %1008 = vdwg.mxu0
      %1009 = vmatpush.bf16.msra.mxu0 0
      %1010 = vmatpush.bf16.msra.mxu0 0
      %1011 = vmatpush.bf16.msra.mxu0 0
      %1012 = vmatpush.bf16.msra.mxu0 0
      %1013 = vmatpush.bf16.msra.mxu0 0
      %1014 = vmatpush.bf16.msra.mxu0 0
      %1015 = vmatpush.bf16.msra.mxu0 %v763
      %1016 = vmatpush.bf16.msra.mxu0 %v762
      %1017 = vmatmul.bf16.gmra.mxu0 %v784
      %v1018 = vpop.f32.mrf.mxu0
      %v1019 = vadd.f32 %v930, %v1018
      %v1020 = vpop.f32.mrf.mxu0
      %v1021 = vadd.f32 %v932, %v1020
      %1022 = vmatmul.bf16.gmra.mxu0 %v787
      %v1023 = vpop.f32.mrf.mxu0
      %v1024 = vadd.f32 %v935, %v1023
      %v1025 = vpop.f32.mrf.mxu0
      %v1026 = vadd.f32 %v937, %v1025
      %1027 = vmatmul.bf16.gmra.mxu0 %v790
      %v1028 = vpop.f32.mrf.mxu0
      %v1029 = vadd.f32 %v940, %v1028
      %v1030 = vpop.f32.mrf.mxu0
      %v1031 = vadd.f32 %v942, %v1030
      %1032 = vmatmul.bf16.gmra.mxu0 %v793
      %v1033 = vpop.f32.mrf.mxu0
      %v1034 = vadd.f32 %v945, %v1033
      %v1035 = vpop.f32.mrf.mxu0
      %v1036 = vadd.f32 %v947, %v1035
      %1037 = vmatmul.bf16.gmra.mxu0 %v796
      %v1038 = vpop.f32.mrf.mxu0
      %v1039 = vadd.f32 %v950, %v1038
      %v1040 = vpop.f32.mrf.mxu0
      %v1041 = vadd.f32 %v952, %v1040
      %1042 = vmatmul.bf16.gmra.mxu0 %v799
      %v1043 = vpop.f32.mrf.mxu0
      %v1044 = vadd.f32 %v955, %v1043
      %v1045 = vpop.f32.mrf.mxu0
      %v1046 = vadd.f32 %v957, %v1045
      %1047 = vmatmul.bf16.gmra.mxu0 %v802
      %v1048 = vpop.f32.mrf.mxu0
      %v1049 = vadd.f32 %v960, %v1048
      %v1050 = vpop.f32.mrf.mxu0
      %v1051 = vadd.f32 %v962, %v1050
      %1052 = vmatmul.bf16.gmra.mxu0 %v805
      %v1053 = vpop.f32.mrf.mxu0
      %v1054 = vadd.f32 %v965, %v1053
      %v1055 = vpop.f32.mrf.mxu0
      %v1056 = vadd.f32 %v967, %v1055
      %1057 = vmatmul.bf16.gmra.mxu0 %v808
      %v1058 = vpop.f32.mrf.mxu0
      %v1059 = vadd.f32 %v970, %v1058
      %v1060 = vpop.f32.mrf.mxu0
      %v1061 = vadd.f32 %v972, %v1060
      %1062 = vmatmul.bf16.gmra.mxu0 %v811
      %v1063 = vpop.f32.mrf.mxu0
      %v1064 = vadd.f32 %v975, %v1063
      %v1065 = vpop.f32.mrf.mxu0
      %v1066 = vadd.f32 %v977, %v1065
      %1067 = vmatmul.bf16.gmra.mxu0 %v814
      %v1068 = vpop.f32.mrf.mxu0
      %v1069 = vadd.f32 %v980, %v1068
      %v1070 = vpop.f32.mrf.mxu0
      %v1071 = vadd.f32 %v982, %v1070
      %1072 = vmatmul.bf16.gmra.mxu0 %v817
      %v1073 = vpop.f32.mrf.mxu0
      %v1074 = vadd.f32 %v985, %v1073
      %v1075 = vpop.f32.mrf.mxu0
      %v1076 = vadd.f32 %v987, %v1075
      %1077 = vmatmul.bf16.gmra.mxu0 %v820
      %v1078 = vpop.f32.mrf.mxu0
      %v1079 = vadd.f32 %v990, %v1078
      %v1080 = vpop.f32.mrf.mxu0
      %v1081 = vadd.f32 %v992, %v1080
      %1082 = vmatmul.bf16.gmra.mxu0 %v823
      %v1083 = vpop.f32.mrf.mxu0
      %v1084 = vadd.f32 %v995, %v1083
      %v1085 = vpop.f32.mrf.mxu0
      %v1086 = vadd.f32 %v997, %v1085
      %1087 = vmatmul.bf16.gmra.mxu0 %v826
      %v1088 = vpop.f32.mrf.mxu0
      %v1089 = vadd.f32 %v1000, %v1088
      %v1090 = vpop.f32.mrf.mxu0
      %v1091 = vadd.f32 %v1002, %v1090
      %1092 = vmatmul.bf16.gmra.mxu0 %v829
      %v1093 = vpop.f32.mrf.mxu0
      %v1094 = vadd.f32 %v1005, %v1093
      %v1095 = vpop.f32.mrf.mxu0
      %v1096 = vadd.f32 %v1007, %v1095
      %1097 = vdwg.mxu0
      %vm1098 = vcmp.gt.f32.partialorder %v1019, 0.0
      %vm1099 = vcmp.gt.f32.partialorder %v1021, 0.0
      %vm1100 = vcmp.gt.f32.partialorder %v1024, 0.0
      %vm1101 = vcmp.gt.f32.partialorder %v1026, 0.0
      %vm1102 = vcmp.gt.f32.partialorder %v1029, 0.0
      %vm1103 = vcmp.gt.f32.partialorder %v1031, 0.0
      %vm1104 = vcmp.gt.f32.partialorder %v1034, 0.0
      %vm1105 = vcmp.gt.f32.partialorder %v1036, 0.0
      %vm1106 = vcmp.gt.f32.partialorder %v1039, 0.0
      %vm1107 = vcmp.gt.f32.partialorder %v1041, 0.0
      %vm1108 = vcmp.gt.f32.partialorder %v1044, 0.0
      %vm1109 = vcmp.gt.f32.partialorder %v1046, 0.0
      %vm1110 = vcmp.gt.f32.partialorder %v1049, 0.0
      %vm1111 = vcmp.gt.f32.partialorder %v1051, 0.0
      %vm1112 = vcmp.gt.f32.partialorder %v1054, 0.0
      %vm1113 = vcmp.gt.f32.partialorder %v1056, 0.0
      %vm1114 = vcmp.gt.f32.partialorder %v1059, 0.0
      %vm1115 = vcmp.gt.f32.partialorder %v1061, 0.0
      %vm1116 = vcmp.gt.f32.partialorder %v1064, 0.0
      %vm1117 = vcmp.gt.f32.partialorder %v1066, 0.0
      %vm1118 = vcmp.gt.f32.partialorder %v1069, 0.0
      %vm1119 = vcmp.gt.f32.partialorder %v1071, 0.0
      %vm1120 = vcmp.gt.f32.partialorder %v1074, 0.0
      %vm1121 = vcmp.gt.f32.partialorder %v1076, 0.0
      %vm1122 = vcmp.gt.f32.partialorder %v1079, 0.0
      %vm1123 = vcmp.gt.f32.partialorder %v1081, 0.0
      %vm1124 = vcmp.gt.f32.partialorder %v1084, 0.0
      %vm1125 = vcmp.gt.f32.partialorder %v1086, 0.0
      %vm1126 = vcmp.gt.f32.partialorder %v1089, 0.0
      %vm1127 = vcmp.gt.f32.partialorder %v1091, 0.0
      %vm1128 = vcmp.gt.f32.partialorder %v1094, 0.0
      %vm1129 = vcmp.gt.f32.partialorder %v1096, 0.0
      %v1130 = vld [vmem:[%s310] sm:$0x1]
      %v1132 = vperm.slane %v1130, 0
      %v1134 = vmul.f32 %v1132, %v1019
      %v1135 = vmul.f32 %v1132, %v1021
      %v1136 = vmul.f32 %v1132, %v1024
      %v1137 = vmul.f32 %v1132, %v1026
      %v1138 = vmul.f32 %v1132, %v1029
      %v1139 = vmul.f32 %v1132, %v1031
      %v1140 = vmul.f32 %v1132, %v1034
      %v1141 = vmul.f32 %v1132, %v1036
      %v1142 = vmul.f32 %v1132, %v1039
      %v1143 = vmul.f32 %v1132, %v1041
      %v1144 = vmul.f32 %v1132, %v1044
      %v1145 = vmul.f32 %v1132, %v1046
      %v1146 = vmul.f32 %v1132, %v1049
      %v1147 = vmul.f32 %v1132, %v1051
      %v1148 = vmul.f32 %v1132, %v1054
      %v1149 = vmul.f32 %v1132, %v1056
      %v1150 = vmul.f32 %v1132, %v1059
      %v1151 = vmul.f32 %v1132, %v1061
      %v1152 = vmul.f32 %v1132, %v1064
      %v1153 = vmul.f32 %v1132, %v1066
      %v1154 = vmul.f32 %v1132, %v1069
      %v1155 = vmul.f32 %v1132, %v1071
      %v1156 = vmul.f32 %v1132, %v1074
      %v1157 = vmul.f32 %v1132, %v1076
      %v1158 = vmul.f32 %v1132, %v1079
      %v1159 = vmul.f32 %v1132, %v1081
      %v1160 = vmul.f32 %v1132, %v1084
      %v1161 = vmul.f32 %v1132, %v1086
      %v1162 = vmul.f32 %v1132, %v1089
      %v1163 = vmul.f32 %v1132, %v1091
      %v1164 = vmul.f32 %v1132, %v1094
      %v1165 = vmul.f32 %v1132, %v1096
      %v1166 = vsel %vm1098, %v1019, %v1134
      %v1167 = vsel %vm1099, %v1021, %v1135
      %v1168 = vsel %vm1100, %v1024, %v1136
      %v1169 = vsel %vm1101, %v1026, %v1137
      %v1170 = vsel %vm1102, %v1029, %v1138
      %v1171 = vsel %vm1103, %v1031, %v1139
      %v1172 = vsel %vm1104, %v1034, %v1140
      %v1173 = vsel %vm1105, %v1036, %v1141
      %v1174 = vsel %vm1106, %v1039, %v1142
      %v1175 = vsel %vm1107, %v1041, %v1143
      %v1176 = vsel %vm1108, %v1044, %v1144
      %v1177 = vsel %vm1109, %v1046, %v1145
      %v1178 = vsel %vm1110, %v1049, %v1146
      %v1179 = vsel %vm1111, %v1051, %v1147
      %v1180 = vsel %vm1112, %v1054, %v1148
      %v1181 = vsel %vm1113, %v1056, %v1149
      %v1182 = vsel %vm1114, %v1059, %v1150
      %v1183 = vsel %vm1115, %v1061, %v1151
      %v1184 = vsel %vm1116, %v1064, %v1152
      %v1185 = vsel %vm1117, %v1066, %v1153
      %v1186 = vsel %vm1118, %v1069, %v1154
      %v1187 = vsel %vm1119, %v1071, %v1155
      %v1188 = vsel %vm1120, %v1074, %v1156
      %v1189 = vsel %vm1121, %v1076, %v1157
      %v1190 = vsel %vm1122, %v1079, %v1158
      %v1191 = vsel %vm1123, %v1081, %v1159
      %v1192 = vsel %vm1124, %v1084, %v1160
      %v1193 = vsel %vm1125, %v1086, %v1161
      %v1194 = vsel %vm1126, %v1089, %v1162
      %v1195 = vsel %vm1127, %v1091, %v1163
      %v1196 = vsel %vm1128, %v1094, %v1164
      %v1197 = vsel %vm1129, %v1096, %v1165
      %v1198 = vld [vmem:[%s318] sm:$0xf]
      %v1199 = vld [vmem:[%s318 + $0x4] sm:$0xf]
      %v1200 = vld [vmem:[%s318 + $0x8] sm:$0xf]
      %v1201 = vld [vmem:[%s318 + $0xc] sm:$0xf]
      %v1202 = vld [vmem:[%s318 + $0x10] sm:$0xf]
      %v1203 = vld [vmem:[%s318 + $0x14] sm:$0xf]
      %v1204 = vld [vmem:[%s318 + $0x18] sm:$0xf]
      %v1205 = vld [vmem:[%s318 + $0x1c] sm:$0xf]
      %v1206 = vld [vmem:[%s318 + $0x20] sm:$0xf]
      %v1207 = vld [vmem:[%s318 + $0x24] sm:$0xf]
      %v1208 = vld [vmem:[%s318 + $0x28] sm:$0xf]
      %v1209 = vld [vmem:[%s318 + $0x2c] sm:$0xf]
      %v1210 = vld [vmem:[%s318 + $0x30] sm:$0xf]
      %v1211 = vld [vmem:[%s318 + $0x34] sm:$0xf]
      %v1212 = vld [vmem:[%s318 + $0x38] sm:$0xf]
      %v1213 = vld [vmem:[%s318 + $0x3c] sm:$0xf]
      %v1214 = vld [vmem:[%s318 + $0x40] sm:$0xf]
      %v1215 = vld [vmem:[%s318 + $0x44] sm:$0xf]
      %v1216 = vld [vmem:[%s318 + $0x48] sm:$0xf]
      %v1217 = vld [vmem:[%s318 + $0x4c] sm:$0xf]
      %v1218 = vld [vmem:[%s318 + $0x50] sm:$0xf]
      %v1219 = vld [vmem:[%s318 + $0x54] sm:$0xf]
      %v1220 = vld [vmem:[%s318 + $0x58] sm:$0xf]
      %v1221 = vld [vmem:[%s318 + $0x5c] sm:$0xf]
      %v1222 = vld [vmem:[%s318 + $0x60] sm:$0xf]
      %v1223 = vld [vmem:[%s318 + $0x64] sm:$0xf]
      %v1224 = vld [vmem:[%s318 + $0x68] sm:$0xf]
      %v1225 = vld [vmem:[%s318 + $0x6c] sm:$0xf]
      %v1226 = vld [vmem:[%s318 + $0x70] sm:$0xf]
      %v1227 = vld [vmem:[%s318 + $0x74] sm:$0xf]
      %v1228 = vld [vmem:[%s318 + $0x78] sm:$0xf]
      %v1229 = vld [vmem:[%s318 + $0x7c] sm:$0xf]
      %v1230 = vunpack.c.l.bf16 %v1198
      %v1231 = vunpack.c.l.bf16 %v1199
      %v1232 = vunpack.c.l.bf16 %v1200
      %v1233 = vunpack.c.l.bf16 %v1201
      %v1234 = vunpack.c.l.bf16 %v1202
      %v1235 = vunpack.c.l.bf16 %v1203
      %v1236 = vunpack.c.l.bf16 %v1204
      %v1237 = vunpack.c.l.bf16 %v1205
      %v1238 = vunpack.c.l.bf16 %v1206
      %v1239 = vunpack.c.l.bf16 %v1207
      %v1240 = vunpack.c.l.bf16 %v1208
      %v1241 = vunpack.c.l.bf16 %v1209
      %v1242 = vunpack.c.l.bf16 %v1210
      %v1243 = vunpack.c.l.bf16 %v1211
      %v1244 = vunpack.c.l.bf16 %v1212
      %v1245 = vunpack.c.l.bf16 %v1213
      %v1246 = vunpack.c.l.bf16 %v1214
      %v1247 = vunpack.c.l.bf16 %v1215
      %v1248 = vunpack.c.l.bf16 %v1216
      %v1249 = vunpack.c.l.bf16 %v1217
      %v1250 = vunpack.c.l.bf16 %v1218
      %v1251 = vunpack.c.l.bf16 %v1219
      %v1252 = vunpack.c.l.bf16 %v1220
      %v1253 = vunpack.c.l.bf16 %v1221
      %v1254 = vunpack.c.l.bf16 %v1222
      %v1255 = vunpack.c.l.bf16 %v1223
      %v1256 = vunpack.c.l.bf16 %v1224
      %v1257 = vunpack.c.l.bf16 %v1225
      %v1258 = vunpack.c.l.bf16 %v1226
      %v1259 = vunpack.c.l.bf16 %v1227
      %v1260 = vunpack.c.l.bf16 %v1228
      %v1261 = vunpack.c.l.bf16 %v1229
      %v1262 = vmul.f32 %v1230, -1.0
      %v1263 = vmul.f32 %v1231, -1.0
      %v1264 = vmul.f32 %v1232, -1.0
      %v1265 = vmul.f32 %v1233, -1.0
      %v1266 = vmul.f32 %v1234, -1.0
      %v1267 = vmul.f32 %v1235, -1.0
      %v1268 = vmul.f32 %v1236, -1.0
      %v1269 = vmul.f32 %v1237, -1.0
      %v1270 = vmul.f32 %v1238, -1.0
      %v1271 = vmul.f32 %v1239, -1.0
      %v1272 = vmul.f32 %v1240, -1.0
      %v1273 = vmul.f32 %v1241, -1.0
      %v1274 = vmul.f32 %v1242, -1.0
      %v1275 = vmul.f32 %v1243, -1.0
      %v1276 = vmul.f32 %v1244, -1.0
      %v1277 = vmul.f32 %v1245, -1.0
      %v1278 = vmul.f32 %v1246, -1.0
      %v1279 = vmul.f32 %v1247, -1.0
      %v1280 = vmul.f32 %v1248, -1.0
      %v1281 = vmul.f32 %v1249, -1.0
      %v1282 = vmul.f32 %v1250, -1.0
      %v1283 = vmul.f32 %v1251, -1.0
      %v1284 = vmul.f32 %v1252, -1.0
      %v1285 = vmul.f32 %v1253, -1.0
      %v1286 = vmul.f32 %v1254, -1.0
      %v1287 = vmul.f32 %v1255, -1.0
      %v1288 = vmul.f32 %v1256, -1.0
      %v1289 = vmul.f32 %v1257, -1.0
      %v1290 = vmul.f32 %v1258, -1.0
      %v1291 = vmul.f32 %v1259, -1.0
      %v1292 = vmul.f32 %v1260, -1.0
      %v1293 = vmul.f32 %v1261, -1.0
      %v1294 = vadd.f32 %v1166, %v1262
      %v1295 = vadd.f32 %v1167, %v1263
      %v1296 = vadd.f32 %v1168, %v1264
      %v1297 = vadd.f32 %v1169, %v1265
      %v1298 = vadd.f32 %v1170, %v1266
      %v1299 = vadd.f32 %v1171, %v1267
      %v1300 = vadd.f32 %v1172, %v1268
      %v1301 = vadd.f32 %v1173, %v1269
      %v1302 = vadd.f32 %v1174, %v1270
      %v1303 = vadd.f32 %v1175, %v1271
      %v1304 = vadd.f32 %v1176, %v1272
      %v1305 = vadd.f32 %v1177, %v1273
      %v1306 = vadd.f32 %v1178, %v1274
      %v1307 = vadd.f32 %v1179, %v1275
      %v1308 = vadd.f32 %v1180, %v1276
      %v1309 = vadd.f32 %v1181, %v1277
      %v1310 = vadd.f32 %v1182, %v1278
      %v1311 = vadd.f32 %v1183, %v1279
      %v1312 = vadd.f32 %v1184, %v1280
      %v1313 = vadd.f32 %v1185, %v1281
      %v1314 = vadd.f32 %v1186, %v1282
      %v1315 = vadd.f32 %v1187, %v1283
      %v1316 = vadd.f32 %v1188, %v1284
      %v1317 = vadd.f32 %v1189, %v1285
      %v1318 = vadd.f32 %v1190, %v1286
      %v1319 = vadd.f32 %v1191, %v1287
      %v1320 = vadd.f32 %v1192, %v1288
      %v1321 = vadd.f32 %v1193, %v1289
      %v1322 = vadd.f32 %v1194, %v1290
      %v1323 = vadd.f32 %v1195, %v1291
      %v1324 = vadd.f32 %v1196, %v1292
      %v1325 = vadd.f32 %v1197, %v1293
      %v1326 = vpack.c.bf16 %v1294, %v1294
      %v1327 = vpack.c.bf16 %v1295, %v1295
      %v1328 = vpack.c.bf16 %v1296, %v1296
      %v1329 = vpack.c.bf16 %v1297, %v1297
      %v1330 = vpack.c.bf16 %v1298, %v1298
      %v1331 = vpack.c.bf16 %v1299, %v1299
      %v1332 = vpack.c.bf16 %v1300, %v1300
      %v1333 = vpack.c.bf16 %v1301, %v1301
      %v1334 = vpack.c.bf16 %v1302, %v1302
      %v1335 = vpack.c.bf16 %v1303, %v1303
      %v1336 = vpack.c.bf16 %v1304, %v1304
      %v1337 = vpack.c.bf16 %v1305, %v1305
      %v1338 = vpack.c.bf16 %v1306, %v1306
      %v1339 = vpack.c.bf16 %v1307, %v1307
      %v1340 = vpack.c.bf16 %v1308, %v1308
      %v1341 = vpack.c.bf16 %v1309, %v1309
      %v1342 = vpack.c.bf16 %v1310, %v1310
      %v1343 = vpack.c.bf16 %v1311, %v1311
      %v1344 = vpack.c.bf16 %v1312, %v1312
      %v1345 = vpack.c.bf16 %v1313, %v1313
      %v1346 = vpack.c.bf16 %v1314, %v1314
      %v1347 = vpack.c.bf16 %v1315, %v1315
      %v1348 = vpack.c.bf16 %v1316, %v1316
      %v1349 = vpack.c.bf16 %v1317, %v1317
      %v1350 = vpack.c.bf16 %v1318, %v1318
      %v1351 = vpack.c.bf16 %v1319, %v1319
      %v1352 = vpack.c.bf16 %v1320, %v1320
      %v1353 = vpack.c.bf16 %v1321, %v1321
      %v1354 = vpack.c.bf16 %v1322, %v1322
      %v1355 = vpack.c.bf16 %v1323, %v1323
      %v1356 = vpack.c.bf16 %v1324, %v1324
      %v1357 = vpack.c.bf16 %v1325, %v1325
      %1358 = vst [vmem:[%s327] sm:$0xf] %v1326
      %1359 = vst [vmem:[%s327 + $0x4] sm:$0xf] %v1327
      %1360 = vst [vmem:[%s327 + $0x8] sm:$0xf] %v1328
      %1361 = vst [vmem:[%s327 + $0xc] sm:$0xf] %v1329
      %1362 = vst [vmem:[%s327 + $0x10] sm:$0xf] %v1330
      %1363 = vst [vmem:[%s327 + $0x14] sm:$0xf] %v1331
      %1364 = vst [vmem:[%s327 + $0x18] sm:$0xf] %v1332
      %1365 = vst [vmem:[%s327 + $0x1c] sm:$0xf] %v1333
      %1366 = vst [vmem:[%s327 + $0x20] sm:$0xf] %v1334
      %1367 = vst [vmem:[%s327 + $0x24] sm:$0xf] %v1335
      %1368 = vst [vmem:[%s327 + $0x28] sm:$0xf] %v1336
      %1369 = vst [vmem:[%s327 + $0x2c] sm:$0xf] %v1337
      %1370 = vst [vmem:[%s327 + $0x30] sm:$0xf] %v1338
      %1371 = vst [vmem:[%s327 + $0x34] sm:$0xf] %v1339
      %1372 = vst [vmem:[%s327 + $0x38] sm:$0xf] %v1340
      %1373 = vst [vmem:[%s327 + $0x3c] sm:$0xf] %v1341
      %1374 = vst [vmem:[%s327 + $0x40] sm:$0xf] %v1342
      %1375 = vst [vmem:[%s327 + $0x44] sm:$0xf] %v1343
      %1376 = vst [vmem:[%s327 + $0x48] sm:$0xf] %v1344
      %1377 = vst [vmem:[%s327 + $0x4c] sm:$0xf] %v1345
      %1378 = vst [vmem:[%s327 + $0x50] sm:$0xf] %v1346
      %1379 = vst [vmem:[%s327 + $0x54] sm:$0xf] %v1347
      %1380 = vst [vmem:[%s327 + $0x58] sm:$0xf] %v1348
      %1381 = vst [vmem:[%s327 + $0x5c] sm:$0xf] %v1349
      %1382 = vst [vmem:[%s327 + $0x60] sm:$0xf] %v1350
      %1383 = vst [vmem:[%s327 + $0x64] sm:$0xf] %v1351
      %1384 = vst [vmem:[%s327 + $0x68] sm:$0xf] %v1352
      %1385 = vst [vmem:[%s327 + $0x6c] sm:$0xf] %v1353
      %1386 = vst [vmem:[%s327 + $0x70] sm:$0xf] %v1354
      %1387 = vst [vmem:[%s327 + $0x74] sm:$0xf] %v1355
      %1388 = vst [vmem:[%s327 + $0x78] sm:$0xf] %v1356
      %1389 = vst [vmem:[%s327 + $0x7c] sm:$0xf] %v1357
      %s1390 = smul.u32 32, %s21
      %p1391 = scmp.lt.s32.totalorder %s1390, 63
      %s1392 = scalar_select %p1391, %s1390, 63
      %p1393 = scmp.lt.s32.totalorder %s20, 0
      %s1394 = scalar_select %p1393, %s20, 0
      %s1395 = sadd.s32 %s1394, %s1392
      %s1396 = smul.addr %s1395, 4
      %s1397 = scalar_lea.vmem %s5, %s1396
      // Predicated region
      $region41: #{dense_projection_forward.6} parent=39 // pred_check
        %p1398 = pneg %p180
      $region42: #{dense_projection_forward.6} parent=39 // pred_check_branch
        %1400 = sbr.rel (%p1398) target = $region44
      $region43: #{dense_projection_forward.6} parent=39 // pred_region
        %s1401 = smul.u32 32, %s21
      $region44: #{dense_projection_forward.6} parent=39 // pred_fallthru
        _
    $region40: #{dense_projection_forward.6} parent=5 // pred_fallthru
      _
    %p1402 = scmp.le.s32.totalorder 2, %s11
    // Predicated region
    $region45: #{dense_projection_forward.6} parent=5 // pred_check
      %p1403 = pneg %p1402
    $region46: #{dense_projection_forward.6} parent=5 // pred_check_branch
      %1405 = sbr.rel (%p1403) target = $region48
    $region47: #{dense_projection_forward.6} parent=5 // pred_region
      %s1406 = ssub.s32 %s11, 2
      // Predicated region
      $region49: #{dense_projection_forward.6} parent=47 // pred_check
        %p1407 = pneg %p186
      $region50: #{dense_projection_forward.6} parent=47 // pred_check_branch
        %1409 = sbr.rel (%p1407) target = $region52
      $region51: #{dense_projection_forward.6} parent=47 // pred_region
        %s1410 = smul.u32 32, %s23
        %p1411 = scmp.lt.s32.totalorder %s1410, 63
        %s1412 = scalar_select %p1411, %s1410, 63
        %p1413 = scmp.lt.s32.totalorder %s22, 0
        %s1414 = scalar_select %p1413, %s22, 0
        %s1415 = sadd.s32 %s1414, %s1412
        %s1416 = smul.addr %s1415, 4
        %s1417 = scalar_lea.vmem %s5, %s1416
      $region52: #{dense_projection_forward.6} parent=47 // pred_fallthru
        _
    $region48: #{dense_projection_forward.6} parent=5 // pred_fallthru
      _
  $region6: #{dense_projection_forward.6} parent=0 // loop_footer
    %s15 = sadd.s32 1, %s11
  $region7: #{dense_projection_forward.6} parent=0 // loop_footer_branch
    %10 = sbr.rel target = $region3
  $region8: #{dense_projection_forward.6} parent=0 // loop_exit
    _

// kernel: dense_projection_forward.7
$region0: #{dense_projection_forward.7}
  #allocation0 [shape = 'u32[]', space=smem, size = 0x4, offset = 0x4, fixed_abs, tag = 'smem constant byte address 0x4 - core index']
  #allocation1 [shape = 'u32[72,128]{1,0:T(1,128)}', space=vmem, size = 0x9000, scoped, tag = 'internal scratch']
  %s0 = inlined_call_operand.vmem [shape: bf16[512,72], index: 0, kind: input, shape index: {}]
  %s1 = inlined_call_operand.vmem [shape: bf16[72,128], index: 1, kind: input, shape index: {}]
  %s2 = inlined_call_operand.vmem [shape: f32[1,128], index: 2, kind: input, shape index: {}]
  %s3 = inlined_call_operand.vmem [shape: f32[1,128], index: 3, kind: input, shape index: {}]
  %s4 = inlined_call_operand.vmem [shape: bf16[512,128], index: 4, kind: input, shape index: {}]
  %s5 = inlined_call_operand.vmem [shape: bf16[512,128], index: 5, kind: output, shape index: {}]
  %s6 = sld [smem:[#allocation0]]
  $region53: #{dense_projection_forward.7} parent=0
    _
  %s8 = ssub.s32 1, %s6
  %s9 = scalar_select 0, %s8, %s6
  loop: start=0, step=1, limit=4
  $region2: #{dense_projection_forward.7} parent=0 // loop_pre_header
    _
  $region3: #{dense_projection_forward.7} parent=0 // loop_header
    %s11 = sphi 0, %s15
    %p12 = scmp.ge.s32.totalorder %s11, 4
    %s18 = sphi 0, %s30
    %s19 = sphi 0, %s26
    %s20 = sphi 0, %s18
    %s21 = sphi 0, %s19
    %s22 = sphi 0, %s20
    %s23 = sphi 0, %s21
    %s33 = sphi 0, %s35
    %s36 = sphi 0, %s33
    %s37 = sphi 0, %s36
    %s53 = sphi 0, %s37
    %s59 = sphi 0, %s61
    %s62 = sphi 0, %s59
    %s63 = sphi 0, %s62
    %s79 = sphi 0, %s63
    %s85 = sphi 0, %s87
    %s88 = sphi 0, %s85
    %s89 = sphi 0, %s88
    %s105 = sphi 0, %s89
    %s111 = sphi 0, %s113
    %s114 = sphi 0, %s111
    %s115 = sphi 0, %s114
    %s131 = sphi 0, %s115
    %s139 = sphi 0, %s141
    %s142 = sphi 0, %s139
    %s143 = sphi 0, %s142
    %s159 = sphi 0, %s143
    %s167 = sphi 0, %s169
    %s170 = sphi 0, %s167
    %s171 = sphi 0, %s170
    %s187 = sphi 0, %s171
  $region4: #{dense_projection_forward.7} parent=0 // loop_header_branch
    %14 = sbr.rel (%p12) target = $region8
  $region5: #{dense_projection_forward.7} parent=0 // loop_body
    %s16 = ssub.s32 %s11, 1
    %s17 = ssub.s32 %s11, 2
    %s24 = sadd.s32 1, %s19
    %p25 = scmp.ge.s32.totalorder %s24, 2
    %s26 = scalar_select %p25, 0, %s24
    %s27 = sadd.s32 1, %s18
    %s28 = scalar_select %p25, %s27, %s18
    %p29 = scmp.ge.s32.totalorder %s28, 1
    %s30 = scalar_select %p29, 0, %s28
    %s31 = ssub.s32 %s19, %s26
    %p32 = scmp.eq.s32.totalorder %s31, 0
    %s34 = sadd.s32 %s33, 1
    %s35 = scalar_select %p32, %s33, %s34
    %p38 = pneg %p32
    %p39 = scmp.eq.s32.totalorder %s11, 1
    %p40 = por %p38, %p39
    %p41 = scmp.ne.s32.totalorder %s33, %s36
    %p42 = scmp.eq.s32.totalorder %s11, 0
    %p43 = por %p41, %p42
    %p44 = scmp.ne.s32.totalorder %s33, %s36
    %p45 = scmp.eq.s32.totalorder %s16, 1
    %p46 = por %p44, %p45
    %p47 = scmp.ne.s32.totalorder %s36, %s37
    %p48 = scmp.eq.s32.totalorder %s16, 0
    %p49 = por %p47, %p48
    %p50 = scmp.ne.s32.totalorder %s36, %s37
    %p51 = scmp.eq.s32.totalorder %s17, 1
    %p52 = por %p50, %p51
    %p54 = scmp.ne.s32.totalorder %s37, %s53
    %p55 = scmp.eq.s32.totalorder %s17, 0
    %p56 = por %p54, %p55
    %s57 = ssub.s32 %s18, %s30
    %p58 = scmp.eq.s32.totalorder %s57, 0
    %s60 = sadd.s32 %s59, 1
    %s61 = scalar_select %p58, %s59, %s60
    %p64 = pneg %p58
    %p65 = scmp.eq.s32.totalorder %s11, 1
    %p66 = por %p64, %p65
    %p67 = scmp.ne.s32.totalorder %s59, %s62
    %p68 = scmp.eq.s32.totalorder %s11, 0
    %p69 = por %p67, %p68
    %p70 = scmp.ne.s32.totalorder %s59, %s62
    %p71 = scmp.eq.s32.totalorder %s16, 1
    %p72 = por %p70, %p71
    %p73 = scmp.ne.s32.totalorder %s62, %s63
    %p74 = scmp.eq.s32.totalorder %s16, 0
    %p75 = por %p73, %p74
    %p76 = scmp.ne.s32.totalorder %s62, %s63
    %p77 = scmp.eq.s32.totalorder %s17, 1
    %p78 = por %p76, %p77
    %p80 = scmp.ne.s32.totalorder %s63, %s79
    %p81 = scmp.eq.s32.totalorder %s17, 0
    %p82 = por %p80, %p81
    %s83 = ssub.s32 %s18, %s30
    %p84 = scmp.eq.s32.totalorder %s83, 0
    %s86 = sadd.s32 %s85, 1
    %s87 = scalar_select %p84, %s85, %s86
    %p90 = pneg %p84
    %p91 = scmp.eq.s32.totalorder %s11, 1
    %p92 = por %p90, %p91
    %p93 = scmp.ne.s32.totalorder %s85, %s88
    %p94 = scmp.eq.s32.totalorder %s11, 0
    %p95 = por %p93, %p94
    %p96 = scmp.ne.s32.totalorder %s85, %s88
    %p97 = scmp.eq.s32.totalorder %s16, 1
    %p98 = por %p96, %p97
    %p99 = scmp.ne.s32.totalorder %s88, %s89
    %p100 = scmp.eq.s32.totalorder %s16, 0
    %p101 = por %p99, %p100
    %p102 = scmp.ne.s32.totalorder %s88, %s89
    %p103 = scmp.eq.s32.totalorder %s17, 1
    %p104 = por %p102, %p103
    %p106 = scmp.ne.s32.totalorder %s89, %s105
    %p107 = scmp.eq.s32.totalorder %s17, 0
    %p108 = por %p106, %p107
    %s109 = ssub.s32 %s18, %s30
    %p110 = scmp.eq.s32.totalorder %s109, 0
    %s112 = sadd.s32 %s111, 1
    %s113 = scalar_select %p110, %s111, %s112
    %p116 = pneg %p110
    %p117 = scmp.eq.s32.totalorder %s11, 1
    %p118 = por %p116, %p117
    %p119 = scmp.ne.s32.totalorder %s111, %s114
    %p120 = scmp.eq.s32.totalorder %s11, 0
    %p121 = por %p119, %p120
    %p122 = scmp.ne.s32.totalorder %s111, %s114
    %p123 = scmp.eq.s32.totalorder %s16, 1
    %p124 = por %p122, %p123
    %p125 = scmp.ne.s32.totalorder %s114, %s115
    %p126 = scmp.eq.s32.totalorder %s16, 0
    %p127 = por %p125, %p126
    %p128 = scmp.ne.s32.totalorder %s114, %s115
    %p129 = scmp.eq.s32.totalorder %s17, 1
    %p130 = por %p128, %p129
    %p132 = scmp.ne.s32.totalorder %s115, %s131
    %p133 = scmp.eq.s32.totalorder %s17, 0
    %p134 = por %p132, %p133
    %s135 = ssub.s32 %s19, %s26
    %s136 = ssub.s32 %s18, %s30
    %s137 = sor.u32 %s135, %s136
    %p138 = scmp.eq.s32.totalorder %s137, 0
    %s140 = sadd.s32 %s139, 1
    %s141 = scalar_select %p138, %s139, %s140
    %p144 = pneg %p138
    %p145 = scmp.eq.s32.totalorder %s11, 1
    %p146 = por %p144, %p145
    %p147 = scmp.ne.s32.totalorder %s139, %s142
    %p148 = scmp.eq.s32.totalorder %s11, 0
    %p149 = por %p147, %p148
    %p150 = scmp.ne.s32.totalorder %s139, %s142
    %p151 = scmp.eq.s32.totalorder %s16, 1
    %p152 = por %p150, %p151
    %p153 = scmp.ne.s32.totalorder %s142, %s143
    %p154 = scmp.eq.s32.totalorder %s16, 0
    %p155 = por %p153, %p154
    %p156 = scmp.ne.s32.totalorder %s142, %s143
    %p157 = scmp.eq.s32.totalorder %s17, 1
    %p158 = por %p156, %p157
    %p160 = scmp.ne.s32.totalorder %s143, %s159
    %p161 = scmp.eq.s32.totalorder %s17, 0
    %p162 = por %p160, %p161
    %s163 = ssub.s32 %s19, %s26
    %s164 = ssub.s32 %s18, %s30
    %s165 = sor.u32 %s163, %s164
    %p166 = scmp.eq.s32.totalorder %s165, 0
    %s168 = sadd.s32 %s167, 1
    %s169 = scalar_select %p166, %s167, %s168
    %p172 = pneg %p166
    %p173 = scmp.eq.s32.totalorder %s11, 1
    %p174 = por %p172, %p173
    %p175 = scmp.ne.s32.totalorder %s167, %s170
    %p176 = scmp.eq.s32.totalorder %s11, 0
    %p177 = por %p175, %p176
    %p178 = scmp.ne.s32.totalorder %s167, %s170
    %p179 = scmp.eq.s32.totalorder %s16, 1
    %p180 = por %p178, %p179
    %p181 = scmp.ne.s32.totalorder %s170, %s171
    %p182 = scmp.eq.s32.totalorder %s16, 0
    %p183 = por %p181, %p182
    %p184 = scmp.ne.s32.totalorder %s170, %s171
    %p185 = scmp.eq.s32.totalorder %s17, 1
    %p186 = por %p184, %p185
    %p188 = scmp.ne.s32.totalorder %s171, %s187
    %p189 = scmp.eq.s32.totalorder %s17, 0
    %p190 = por %p188, %p189
    %p191 = scmp.le.s32.totalorder 1, %s11
    %p192 = scmp.lt.s32.totalorder %s11, 3
    %p193 = pnand %p191, %p192
    %p194 = pneg %p193
    // Predicated region
    $region9: #{dense_projection_forward.7} parent=5 // pred_check
      _
    $region10: #{dense_projection_forward.7} parent=5 // pred_check_branch
      %196 = sbr.rel (%p193) target = $region12
    $region11: #{dense_projection_forward.7} parent=5 // pred_region
      %s197 = ssub.s32 %s11, 1
      // Predicated region
      $region13: #{dense_projection_forward.7} parent=11 // pred_check
        %p198 = pneg %p75
      $region14: #{dense_projection_forward.7} parent=11 // pred_check_branch
        %200 = sbr.rel (%p198) target = $region16
      $region15: #{dense_projection_forward.7} parent=11 // pred_region
        %p201 = scmp.lt.s32.totalorder %s20, 0
        %s202 = scalar_select %p201, %s20, 0
        %s203 = smul.addr %s202, 4
        %s204 = scalar_lea.vmem %s1, %s203
      $region16: #{dense_projection_forward.7} parent=11 // pred_fallthru
        _
      // Predicated region
      $region17: #{dense_projection_forward.7} parent=11 // pred_check
        %p205 = pneg %p101
      $region18: #{dense_projection_forward.7} parent=11 // pred_check_branch
        %207 = sbr.rel (%p205) target = $region20
      $region19: #{dense_projection_forward.7} parent=11 // pred_region
        %p208 = scmp.lt.s32.totalorder %s20, 0
        %s209 = scalar_select %p208, %s20, 0
        %s210 = scalar_lea.vmem %s2, %s209
      $region20: #{dense_projection_forward.7} parent=11 // pred_fallthru
        _
      // Predicated region
      $region21: #{dense_projection_forward.7} parent=11 // pred_check
        %p211 = pneg %p127
      $region22: #{dense_projection_forward.7} parent=11 // pred_check_branch
        %213 = sbr.rel (%p211) target = $region24
      $region23: #{dense_projection_forward.7} parent=11 // pred_region
        %p214 = scmp.lt.s32.totalorder %s20, 0
        %s215 = scalar_select %p214, %s20, 0
        %s216 = scalar_lea.vmem %s3, %s215
      $region24: #{dense_projection_forward.7} parent=11 // pred_fallthru
        _
    $region12: #{dense_projection_forward.7} parent=5 // pred_fallthru
      _
    %p217 = scmp.lt.s32.totalorder %s11, 2
    // Predicated region
    $region25: #{dense_projection_forward.7} parent=5 // pred_check
      %p218 = pneg %p217
    $region26: #{dense_projection_forward.7} parent=5 // pred_check_branch
      %220 = sbr.rel (%p218) target = $region28
    $region27: #{dense_projection_forward.7} parent=5 // pred_region
      // Predicated region
      $region29: #{dense_projection_forward.7} parent=27 // pred_check
        %p221 = pneg %p43
      $region30: #{dense_projection_forward.7} parent=27 // pred_check_branch
        %223 = sbr.rel (%p221) target = $region32
      $region31: #{dense_projection_forward.7} parent=27 // pred_region
        %s224 = smul.u32 32, %s19
        %p225 = scmp.lt.s32.totalorder %s224, 63
        %s226 = scalar_select %p225, %s224, 63
        %s227 = smul.addr %s226, 4
        %s228 = scalar_lea.vmem %s0, %s227
        %s229 = smul.u32 32, %s19
      $region32: #{dense_projection_forward.7} parent=27 // pred_fallthru
        _
      // Predicated region
      $region33: #{dense_projection_forward.7} parent=27 // pred_check
        %p230 = pneg %p149
      $region34: #{dense_projection_forward.7} parent=27 // pred_check_branch
        %232 = sbr.rel (%p230) target = $region36
      $region35: #{dense_projection_forward.7} parent=27 // pred_region
        %s233 = smul.u32 32, %s19
        %p234 = scmp.lt.s32.totalorder %s233, 63
        %s235 = scalar_select %p234, %s233, 63
        %p236 = scmp.lt.s32.totalorder %s18, 0
        %s237 = scalar_select %p236, %s18, 0
        %s238 = sadd.s32 %s237, %s235
        %s239 = smul.addr %s238, 4
        %s240 = scalar_lea.vmem %s4, %s239
        %s241 = smul.u32 32, %s19
      $region36: #{dense_projection_forward.7} parent=27 // pred_fallthru
        _
    $region28: #{dense_projection_forward.7} parent=5 // pred_fallthru
      _
    %p242 = scmp.le.s32.totalorder 1, %s11
    %p243 = scmp.lt.s32.totalorder %s11, 3
    %p244 = pnand %p242, %p243
    %p245 = pneg %p244
    // Predicated region
    $region37: #{dense_projection_forward.7} parent=5 // pred_check
      _
    $region38: #{dense_projection_forward.7} parent=5 // pred_check_branch
      %247 = sbr.rel (%p244) target = $region40
    $region39: #{dense_projection_forward.7} parent=5 // pred_region
      %s248 = ssub.s32 %s11, 1
      %s249 = smul.u32 32, %s21
      %p250 = scmp.lt.s32.totalorder %s249, 63
      %s251 = scalar_select %p250, %s249, 63
      %s252 = smul.addr %s251, 4
      %s253 = scalar_lea.vmem %s0, %s252
      %p254 = pneg %p49
      %p255 = pneg %p46
      %p256 = scmp.lt.s32.totalorder %s20, 0
      %s257 = scalar_select %p256, %s20, 0
      %s258 = smul.addr %s257, 4
      %s259 = scalar_lea.vmem %s1, %s258
      %p260 = pneg %p75
      %p261 = pneg %p72
      %p262 = scmp.lt.s32.totalorder %s20, 0
      %s263 = scalar_select %p262, %s20, 0
      %s264 = scalar_lea.vmem %s2, %s263
      %p265 = pneg %p101
      %p266 = pneg %p98
      %p267 = scmp.lt.s32.totalorder %s20, 0
      %s268 = scalar_select %p267, %s20, 0
      %s269 = scalar_lea.vmem %s3, %s268
      %p270 = pneg %p127
      %p271 = pneg %p124
      %s272 = smul.u32 32, %s21
      %p273 = scmp.lt.s32.totalorder %s272, 63
      %s274 = scalar_select %p273, %s272, 63
      %p275 = scmp.lt.s32.totalorder %s20, 0
      %s276 = scalar_select %p275, %s20, 0
      %s277 = sadd.s32 %s276, %s274
      %s278 = smul.addr %s277, 4
      %s279 = scalar_lea.vmem %s4, %s278
      %p280 = pneg %p155
      %p281 = pneg %p152
      %p282 = pneg %p183
      %p283 = pneg %p180
      %s284 = smul.u32 32, %s21
      %p285 = scmp.lt.s32.totalorder %s284, 63
      %s286 = scalar_select %p285, %s284, 63
      %p287 = scmp.lt.s32.totalorder %s20, 0
      %s288 = scalar_select %p287, %s20, 0
      %s289 = sadd.s32 %s288, %s286
      %s290 = smul.addr %s289, 4
      %s291 = scalar_lea.vmem %s5, %s290
      %s292 = smul.u32 32, %s21
      %p293 = scmp.lt.s32.totalorder %s292, 63
      %s294 = scalar_select %p293, %s292, 63
      %s295 = smul.addr %s294, 4
      %s296 = scalar_lea.vmem %s0, %s295
      %s297 = smul.u32 32, %s21
      %p298 = scmp.lt.s32.totalorder %s20, 0
      %s299 = scalar_select %p298, %s20, 0
      %s300 = smul.addr %s299, 4
      %s301 = scalar_lea.vmem %s1, %s300
      %p302 = scmp.lt.s32.totalorder %s20, 0
      %s303 = scalar_select %p302, %s20, 0
      %s304 = scalar_lea.vmem %s2, %s303
      %p305 = scmp.lt.s32.totalorder %s20, 0
      %s306 = scalar_select %p305, %s20, 0
      %s307 = scalar_lea.vmem %s3, %s306
      %s308 = smul.u32 32, %s21
      %p309 = scmp.lt.s32.totalorder %s308, 63
      %s310 = scalar_select %p309, %s308, 63
      %p311 = scmp.lt.s32.totalorder %s20, 0
      %s312 = scalar_select %p311, %s20, 0
      %s313 = sadd.s32 %s312, %s310
      %s314 = smul.addr %s313, 4
      %s315 = scalar_lea.vmem %s4, %s314
      %s316 = smul.u32 32, %s21
      %s317 = smul.u32 32, %s21
      %p318 = scmp.lt.s32.totalorder %s317, 63
      %s319 = scalar_select %p318, %s317, 63
      %p320 = scmp.lt.s32.totalorder %s20, 0
      %s321 = scalar_select %p320, %s20, 0
      %s322 = sadd.s32 %s321, %s319
      %s323 = smul.addr %s322, 4
      %s324 = scalar_lea.vmem %s5, %s323
      %s325 = smul.u32 32, %s21
      %v327 = vld [vmem:[%s296] sm:$0xf]
      %v328 = vld [vmem:[%s296 + $0x4] sm:$0xf]
      %v329 = vld [vmem:[%s296 + $0x8] sm:$0xf]
      %v330 = vld [vmem:[%s296 + $0xc] sm:$0xf]
      %v331 = vld [vmem:[%s296 + $0x10] sm:$0xf]
      %v332 = vld [vmem:[%s296 + $0x14] sm:$0xf]
      %v333 = vld [vmem:[%s296 + $0x18] sm:$0xf]
      %v334 = vld [vmem:[%s296 + $0x1c] sm:$0xf]
      %v335 = vld [vmem:[%s296 + $0x20] sm:$0xf]
      %v336 = vld [vmem:[%s296 + $0x24] sm:$0xf]
      %v337 = vld [vmem:[%s296 + $0x28] sm:$0xf]
      %v338 = vld [vmem:[%s296 + $0x2c] sm:$0xf]
      %v339 = vld [vmem:[%s296 + $0x30] sm:$0xf]
      %v340 = vld [vmem:[%s296 + $0x34] sm:$0xf]
      %v341 = vld [vmem:[%s296 + $0x38] sm:$0xf]
      %v342 = vld [vmem:[%s296 + $0x3c] sm:$0xf]
      %v343 = vld [vmem:[%s296 + $0x40] sm:$0xf]
      %v344 = vld [vmem:[%s296 + $0x44] sm:$0xf]
      %v345 = vld [vmem:[%s296 + $0x48] sm:$0xf]
      %v346 = vld [vmem:[%s296 + $0x4c] sm:$0xf]
      %v347 = vld [vmem:[%s296 + $0x50] sm:$0xf]
      %v348 = vld [vmem:[%s296 + $0x54] sm:$0xf]
      %v349 = vld [vmem:[%s296 + $0x58] sm:$0xf]
      %v350 = vld [vmem:[%s296 + $0x5c] sm:$0xf]
      %v351 = vld [vmem:[%s296 + $0x60] sm:$0xf]
      %v352 = vld [vmem:[%s296 + $0x64] sm:$0xf]
      %v353 = vld [vmem:[%s296 + $0x68] sm:$0xf]
      %v354 = vld [vmem:[%s296 + $0x6c] sm:$0xf]
      %v355 = vld [vmem:[%s296 + $0x70] sm:$0xf]
      %v356 = vld [vmem:[%s296 + $0x74] sm:$0xf]
      %v357 = vld [vmem:[%s296 + $0x78] sm:$0xf]
      %v358 = vld [vmem:[%s296 + $0x7c] sm:$0xf]
      %v359 = vld [vmem:[%s301] sm:$0xf]
      %v360 = vld [vmem:[%s301 + $0x4] sm:$0xf]
      %v361 = vld [vmem:[%s301 + $0x8] sm:$0xf]
      %v362 = vld [vmem:[%s301 + $0xc] sm:$0xf]
      %v363 = vld [vmem:[%s301 + $0x10] sm:$0xf]
      %v364 = vld [vmem:[%s301 + $0x14] sm:$0xf]
      %v365 = vld [vmem:[%s301 + $0x18] sm:$0xf]
      %v366 = vld [vmem:[%s301 + $0x1c] sm:$0xf]
      %v367 = vld [vmem:[%s301 + $0x20] sm:$0xf]
      %v368 = vld [vmem:[%s304] sm:$0x1]
      %v370 = vperm.slane %v368, 0
      %v404 = vunpack.c.l.b16 %v327
      %v405 = vunpack.c.l.b16 %v328
      %v406 = vunpack.c.l.b16 %v329
      %v407 = vunpack.c.l.b16 %v330
      %v408 = vunpack.c.l.b16 %v331
      %v409 = vunpack.c.l.b16 %v332
      %v410 = vunpack.c.l.b16 %v333
      %v411 = vunpack.c.l.b16 %v334
      %v412 = vunpack.c.l.b16 %v335
      %v413 = vunpack.c.l.b16 %v336
      %v414 = vunpack.c.l.b16 %v337
      %v415 = vunpack.c.l.b16 %v338
      %v416 = vunpack.c.l.b16 %v339
      %v417 = vunpack.c.l.b16 %v340
      %v418 = vunpack.c.l.b16 %v341
      %v419 = vunpack.c.l.b16 %v342
      %v420 = vunpack.c.l.b16 %v343
      %v421 = vunpack.c.l.b16 %v344
      %v422 = vunpack.c.l.b16 %v345
      %v423 = vunpack.c.l.b16 %v346
      %v424 = vunpack.c.l.b16 %v347
      %v425 = vunpack.c.l.b16 %v348
      %v426 = vunpack.c.l.b16 %v349
      %v427 = vunpack.c.l.b16 %v350
      %v428 = vunpack.c.l.b16 %v351
      %v429 = vunpack.c.l.b16 %v352
      %v430 = vunpack.c.l.b16 %v353
      %v431 = vunpack.c.l.b16 %v354
      %v432 = vunpack.c.l.b16 %v355
      %v433 = vunpack.c.l.b16 %v356
      %v434 = vunpack.c.l.b16 %v357
      %v435 = vunpack.c.l.b16 %v358
      %v436 = vpack.c.b16 %v405, %v404
      %v437 = vpack.c.b16 %v407, %v406
      %v438 = vpack.c.b16 %v409, %v408
      %v439 = vpack.c.b16 %v411, %v410
      %v440 = vpack.c.b16 %v413, %v412
      %v441 = vpack.c.b16 %v415, %v414
      %v442 = vpack.c.b16 %v417, %v416
      %v443 = vpack.c.b16 %v419, %v418
      %v444 = vpack.c.b16 %v421, %v420
      %v445 = vpack.c.b16 %v423, %v422
      %v446 = vpack.c.b16 %v425, %v424
      %v447 = vpack.c.b16 %v427, %v426
      %v448 = vpack.c.b16 %v429, %v428
      %v449 = vpack.c.b16 %v431, %v430
      %v450 = vpack.c.b16 %v433, %v432
      %v451 = vpack.c.b16 %v435, %v434
      %v461 = vunpack.c.l.b16 %v359
      %v462 = vunpack.c.l.b16 %v360
      %v463 = vunpack.c.l.b16 %v361
      %v464 = vunpack.c.l.b16 %v362
      %v465 = vunpack.c.l.b16 %v363
      %v466 = vunpack.c.l.b16 %v364
      %v467 = vunpack.c.l.b16 %v365
      %v468 = vunpack.c.l.b16 %v366
      %v469 = vunpack.c.l.b16 %v367
      %v470 = vpack.c.b16 %v462, %v461
      %v471 = vpack.c.b16 %v464, %v463
      %v472 = vpack.c.b16 %v466, %v465
      %v473 = vpack.c.b16 %v468, %v467
      %v474 = vpack.c.b16 %v469, %v469
      %vm479 = vcmask 588800
      %v481 = vsel %vm479, %v436, 0
      %v484 = vsel %vm479, %v437, 0
      %v487 = vsel %vm479, %v438, 0
      %v490 = vsel %vm479, %v439, 0
      %v493 = vsel %vm479, %v440, 0
      %v496 = vsel %vm479, %v441, 0
      %v499 = vsel %vm479, %v442, 0
      %v502 = vsel %vm479, %v443, 0
      %v505 = vsel %vm479, %v444, 0
      %v508 = vsel %vm479, %v445, 0
      %v511 = vsel %vm479, %v446, 0
      %v514 = vsel %vm479, %v447, 0
      %v517 = vsel %vm479, %v448, 0
      %v520 = vsel %vm479, %v449, 0
      %v523 = vsel %vm479, %v450, 0
      %v526 = vsel %vm479, %v451, 0
      %vm528 = vcmask 1043456
      %v530 = vsel %vm528, %v474, 0
      %532 = vmatpush.bf16.msra.mxu0 0
      %533 = vmatpush.bf16.msra.mxu0 0
      %534 = vmatpush.bf16.msra.mxu0 0
      %535 = vmatpush.bf16.msra.mxu0 %v530
      %536 = vmatpush.bf16.msra.mxu0 %v473
      %537 = vmatpush.bf16.msra.mxu0 %v472
      %538 = vmatpush.bf16.msra.mxu0 %v471
      %539 = vmatpush.bf16.msra.mxu0 %v470
      %540 = vmatmul.bf16.gmra.mxu0 %v481
      %v541 = vpop.f32.mrf.mxu0
      %v542 = vadd.f32 %v370, %v541
      %v543 = vpop.f32.mrf.mxu0
      %v544 = vadd.f32 %v370, %v543
      %545 = vmatmul.bf16.gmra.mxu0 %v484
      %v546 = vpop.f32.mrf.mxu0
      %v547 = vadd.f32 %v370, %v546
      %v548 = vpop.f32.mrf.mxu0
      %v549 = vadd.f32 %v370, %v548
      %550 = vmatmul.bf16.gmra.mxu0 %v487
      %v551 = vpop.f32.mrf.mxu0
      %v552 = vadd.f32 %v370, %v551
      %v553 = vpop.f32.mrf.mxu0
      %v554 = vadd.f32 %v370, %v553
      %555 = vmatmul.bf16.gmra.mxu0 %v490
      %v556 = vpop.f32.mrf.mxu0
      %v557 = vadd.f32 %v370, %v556
      %v558 = vpop.f32.mrf.mxu0
      %v559 = vadd.f32 %v370, %v558
      %560 = vmatmul.bf16.gmra.mxu0 %v493
      %v561 = vpop.f32.mrf.mxu0
      %v562 = vadd.f32 %v370, %v561
      %v563 = vpop.f32.mrf.mxu0
      %v564 = vadd.f32 %v370, %v563
      %565 = vmatmul.bf16.gmra.mxu0 %v496
      %v566 = vpop.f32.mrf.mxu0
      %v567 = vadd.f32 %v370, %v566
      %v568 = vpop.f32.mrf.mxu0
      %v569 = vadd.f32 %v370, %v568
      %570 = vmatmul.bf16.gmra.mxu0 %v499
      %v571 = vpop.f32.mrf.mxu0
      %v572 = vadd.f32 %v370, %v571
      %v573 = vpop.f32.mrf.mxu0
      %v574 = vadd.f32 %v370, %v573
      %575 = vmatmul.bf16.gmra.mxu0 %v502
      %v576 = vpop.f32.mrf.mxu0
      %v577 = vadd.f32 %v370, %v576
      %v578 = vpop.f32.mrf.mxu0
      %v579 = vadd.f32 %v370, %v578
      %580 = vmatmul.bf16.gmra.mxu0 %v505
      %v581 = vpop.f32.mrf.mxu0
      %v582 = vadd.f32 %v370, %v581
      %v583 = vpop.f32.mrf.mxu0
      %v584 = vadd.f32 %v370, %v583
      %585 = vmatmul.bf16.gmra.mxu0 %v508
      %v586 = vpop.f32.mrf.mxu0
      %v587 = vadd.f32 %v370, %v586
      %v588 = vpop.f32.mrf.mxu0
      %v589 = vadd.f32 %v370, %v588
      %590 = vmatmul.bf16.gmra.mxu0 %v511
      %v591 = vpop.f32.mrf.mxu0
      %v592 = vadd.f32 %v370, %v591
      %v593 = vpop.f32.mrf.mxu0
      %v594 = vadd.f32 %v370, %v593
      %595 = vmatmul.bf16.gmra.mxu0 %v514
      %v596 = vpop.f32.mrf.mxu0
      %v597 = vadd.f32 %v370, %v596
      %v598 = vpop.f32.mrf.mxu0
      %v599 = vadd.f32 %v370, %v598
      %600 = vmatmul.bf16.gmra.mxu0 %v517
      %v601 = vpop.f32.mrf.mxu0
      %v602 = vadd.f32 %v370, %v601
      %v603 = vpop.f32.mrf.mxu0
      %v604 = vadd.f32 %v370, %v603
      %605 = vmatmul.bf16.gmra.mxu0 %v520
      %v606 = vpop.f32.mrf.mxu0
      %v607 = vadd.f32 %v370, %v606
      %v608 = vpop.f32.mrf.mxu0
      %v609 = vadd.f32 %v370, %v608
      %610 = vmatmul.bf16.gmra.mxu0 %v523
      %v611 = vpop.f32.mrf.mxu0
      %v612 = vadd.f32 %v370, %v611
      %v613 = vpop.f32.mrf.mxu0
      %v614 = vadd.f32 %v370, %v613
      %615 = vmatmul.bf16.gmra.mxu0 %v526
      %v616 = vpop.f32.mrf.mxu0
      %v617 = vadd.f32 %v370, %v616
      %v618 = vpop.f32.mrf.mxu0
      %v619 = vadd.f32 %v370, %v618
      %620 = vdwg.mxu0
      %vm621 = vcmp.gt.f32.partialorder %v542, 0.0
      %vm622 = vcmp.gt.f32.partialorder %v544, 0.0
      %vm623 = vcmp.gt.f32.partialorder %v547, 0.0
      %vm624 = vcmp.gt.f32.partialorder %v549, 0.0
      %vm625 = vcmp.gt.f32.partialorder %v552, 0.0
      %vm626 = vcmp.gt.f32.partialorder %v554, 0.0
      %vm627 = vcmp.gt.f32.partialorder %v557, 0.0
      %vm628 = vcmp.gt.f32.partialorder %v559, 0.0
      %vm629 = vcmp.gt.f32.partialorder %v562, 0.0
      %vm630 = vcmp.gt.f32.partialorder %v564, 0.0
      %vm631 = vcmp.gt.f32.partialorder %v567, 0.0
      %vm632 = vcmp.gt.f32.partialorder %v569, 0.0
      %vm633 = vcmp.gt.f32.partialorder %v572, 0.0
      %vm634 = vcmp.gt.f32.partialorder %v574, 0.0
      %vm635 = vcmp.gt.f32.partialorder %v577, 0.0
      %vm636 = vcmp.gt.f32.partialorder %v579, 0.0
      %vm637 = vcmp.gt.f32.partialorder %v582, 0.0
      %vm638 = vcmp.gt.f32.partialorder %v584, 0.0
      %vm639 = vcmp.gt.f32.partialorder %v587, 0.0
      %vm640 = vcmp.gt.f32.partialorder %v589, 0.0
      %vm641 = vcmp.gt.f32.partialorder %v592, 0.0
      %vm642 = vcmp.gt.f32.partialorder %v594, 0.0
      %vm643 = vcmp.gt.f32.partialorder %v597, 0.0
      %vm644 = vcmp.gt.f32.partialorder %v599, 0.0
      %vm645 = vcmp.gt.f32.partialorder %v602, 0.0
      %vm646 = vcmp.gt.f32.partialorder %v604, 0.0
      %vm647 = vcmp.gt.f32.partialorder %v607, 0.0
      %vm648 = vcmp.gt.f32.partialorder %v609, 0.0
      %vm649 = vcmp.gt.f32.partialorder %v612, 0.0
      %vm650 = vcmp.gt.f32.partialorder %v614, 0.0
      %vm651 = vcmp.gt.f32.partialorder %v617, 0.0
      %vm652 = vcmp.gt.f32.partialorder %v619, 0.0
      %v653 = vld [vmem:[%s307] sm:$0x1]
      %v655 = vperm.slane %v653, 0
      %v657 = vmul.f32 %v655, %v542
      %v658 = vmul.f32 %v655, %v544
      %v659 = vmul.f32 %v655, %v547
      %v660 = vmul.f32 %v655, %v549
      %v661 = vmul.f32 %v655, %v552
      %v662 = vmul.f32 %v655, %v554
      %v663 = vmul.f32 %v655, %v557
      %v664 = vmul.f32 %v655, %v559
      %v665 = vmul.f32 %v655, %v562
      %v666 = vmul.f32 %v655, %v564
      %v667 = vmul.f32 %v655, %v567
      %v668 = vmul.f32 %v655, %v569
      %v669 = vmul.f32 %v655, %v572
      %v670 = vmul.f32 %v655, %v574
      %v671 = vmul.f32 %v655, %v577
      %v672 = vmul.f32 %v655, %v579
      %v673 = vmul.f32 %v655, %v582
      %v674 = vmul.f32 %v655, %v584
      %v675 = vmul.f32 %v655, %v587
      %v676 = vmul.f32 %v655, %v589
      %v677 = vmul.f32 %v655, %v592
      %v678 = vmul.f32 %v655, %v594
      %v679 = vmul.f32 %v655, %v597
      %v680 = vmul.f32 %v655, %v599
      %v681 = vmul.f32 %v655, %v602
      %v682 = vmul.f32 %v655, %v604
      %v683 = vmul.f32 %v655, %v607
      %v684 = vmul.f32 %v655, %v609
      %v685 = vmul.f32 %v655, %v612
      %v686 = vmul.f32 %v655, %v614
      %v687 = vmul.f32 %v655, %v617
      %v688 = vmul.f32 %v655, %v619
      %v689 = vsel %vm621, %v542, %v657
      %v690 = vsel %vm622, %v544, %v658
      %v691 = vsel %vm623, %v547, %v659
      %v692 = vsel %vm624, %v549, %v660
      %v693 = vsel %vm625, %v552, %v661
      %v694 = vsel %vm626, %v554, %v662
      %v695 = vsel %vm627, %v557, %v663
      %v696 = vsel %vm628, %v559, %v664
      %v697 = vsel %vm629, %v562, %v665
      %v698 = vsel %vm630, %v564, %v666
      %v699 = vsel %vm631, %v567, %v667
      %v700 = vsel %vm632, %v569, %v668
      %v701 = vsel %vm633, %v572, %v669
      %v702 = vsel %vm634, %v574, %v670
      %v703 = vsel %vm635, %v577, %v671
      %v704 = vsel %vm636, %v579, %v672
      %v705 = vsel %vm637, %v582, %v673
      %v706 = vsel %vm638, %v584, %v674
      %v707 = vsel %vm639, %v587, %v675
      %v708 = vsel %vm640, %v589, %v676
      %v709 = vsel %vm641, %v592, %v677
      %v710 = vsel %vm642, %v594, %v678
      %v711 = vsel %vm643, %v597, %v679
      %v712 = vsel %vm644, %v599, %v680
      %v713 = vsel %vm645, %v602, %v681
      %v714 = vsel %vm646, %v604, %v682
      %v715 = vsel %vm647, %v607, %v683
      %v716 = vsel %vm648, %v609, %v684
      %v717 = vsel %vm649, %v612, %v685
      %v718 = vsel %vm650, %v614, %v686
      %v719 = vsel %vm651, %v617, %v687
      %v720 = vsel %vm652, %v619, %v688
      %v721 = vld [vmem:[%s315] sm:$0xf]
      %v722 = vld [vmem:[%s315 + $0x4] sm:$0xf]
      %v723 = vld [vmem:[%s315 + $0x8] sm:$0xf]
      %v724 = vld [vmem:[%s315 + $0xc] sm:$0xf]
      %v725 = vld [vmem:[%s315 + $0x10] sm:$0xf]
      %v726 = vld [vmem:[%s315 + $0x14] sm:$0xf]
      %v727 = vld [vmem:[%s315 + $0x18] sm:$0xf]
      %v728 = vld [vmem:[%s315 + $0x1c] sm:$0xf]
      %v729 = vld [vmem:[%s315 + $0x20] sm:$0xf]
      %v730 = vld [vmem:[%s315 + $0x24] sm:$0xf]
      %v731 = vld [vmem:[%s315 + $0x28] sm:$0xf]
      %v732 = vld [vmem:[%s315 + $0x2c] sm:$0xf]
      %v733 = vld [vmem:[%s315 + $0x30] sm:$0xf]
      %v734 = vld [vmem:[%s315 + $0x34] sm:$0xf]
      %v735 = vld [vmem:[%s315 + $0x38] sm:$0xf]
      %v736 = vld [vmem:[%s315 + $0x3c] sm:$0xf]
      %v737 = vld [vmem:[%s315 + $0x40] sm:$0xf]
      %v738 = vld [vmem:[%s315 + $0x44] sm:$0xf]
      %v739 = vld [vmem:[%s315 + $0x48] sm:$0xf]
      %v740 = vld [vmem:[%s315 + $0x4c] sm:$0xf]
      %v741 = vld [vmem:[%s315 + $0x50] sm:$0xf]
      %v742 = vld [vmem:[%s315 + $0x54] sm:$0xf]
      %v743 = vld [vmem:[%s315 + $0x58] sm:$0xf]
      %v744 = vld [vmem:[%s315 + $0x5c] sm:$0xf]
      %v745 = vld [vmem:[%s315 + $0x60] sm:$0xf]
      %v746 = vld [vmem:[%s315 + $0x64] sm:$0xf]
      %v747 = vld [vmem:[%s315 + $0x68] sm:$0xf]
      %v748 = vld [vmem:[%s315 + $0x6c] sm:$0xf]
      %v749 = vld [vmem:[%s315 + $0x70] sm:$0xf]
      %v750 = vld [vmem:[%s315 + $0x74] sm:$0xf]
      %v751 = vld [vmem:[%s315 + $0x78] sm:$0xf]
      %v752 = vld [vmem:[%s315 + $0x7c] sm:$0xf]
      %v753 = vunpack.c.l.bf16 %v721
      %v754 = vunpack.c.l.bf16 %v722
      %v755 = vunpack.c.l.bf16 %v723
      %v756 = vunpack.c.l.bf16 %v724
      %v757 = vunpack.c.l.bf16 %v725
      %v758 = vunpack.c.l.bf16 %v726
      %v759 = vunpack.c.l.bf16 %v727
      %v760 = vunpack.c.l.bf16 %v728
      %v761 = vunpack.c.l.bf16 %v729
      %v762 = vunpack.c.l.bf16 %v730
      %v763 = vunpack.c.l.bf16 %v731
      %v764 = vunpack.c.l.bf16 %v732
      %v765 = vunpack.c.l.bf16 %v733
      %v766 = vunpack.c.l.bf16 %v734
      %v767 = vunpack.c.l.bf16 %v735
      %v768 = vunpack.c.l.bf16 %v736
      %v769 = vunpack.c.l.bf16 %v737
      %v770 = vunpack.c.l.bf16 %v738
      %v771 = vunpack.c.l.bf16 %v739
      %v772 = vunpack.c.l.bf16 %v740
      %v773 = vunpack.c.l.bf16 %v741
      %v774 = vunpack.c.l.bf16 %v742
      %v775 = vunpack.c.l.bf16 %v743
      %v776 = vunpack.c.l.bf16 %v744
      %v777 = vunpack.c.l.bf16 %v745
      %v778 = vunpack.c.l.bf16 %v746
      %v779 = vunpack.c.l.bf16 %v747
      %v780 = vunpack.c.l.bf16 %v748
      %v781 = vunpack.c.l.bf16 %v749
      %v782 = vunpack.c.l.bf16 %v750
      %v783 = vunpack.c.l.bf16 %v751
      %v784 = vunpack.c.l.bf16 %v752
      %v785 = vadd.f32 %v689, %v753
      %v786 = vadd.f32 %v690, %v754
      %v787 = vadd.f32 %v691, %v755
      %v788 = vadd.f32 %v692, %v756
      %v789 = vadd.f32 %v693, %v757
      %v790 = vadd.f32 %v694, %v758
      %v791 = vadd.f32 %v695, %v759
      %v792 = vadd.f32 %v696, %v760
      %v793 = vadd.f32 %v697, %v761
      %v794 = vadd.f32 %v698, %v762
      %v795 = vadd.f32 %v699, %v763
      %v796 = vadd.f32 %v700, %v764
      %v797 = vadd.f32 %v701, %v765
      %v798 = vadd.f32 %v702, %v766
      %v799 = vadd.f32 %v703, %v767
      %v800 = vadd.f32 %v704, %v768
      %v801 = vadd.f32 %v705, %v769
      %v802 = vadd.f32 %v706, %v770
      %v803 = vadd.f32 %v707, %v771
      %v804 = vadd.f32 %v708, %v772
      %v805 = vadd.f32 %v709, %v773
      %v806 = vadd.f32 %v710, %v774
      %v807 = vadd.f32 %v711, %v775
      %v808 = vadd.f32 %v712, %v776
      %v809 = vadd.f32 %v713, %v777
      %v810 = vadd.f32 %v714, %v778
      %v811 = vadd.f32 %v715, %v779
      %v812 = vadd.f32 %v716, %v780
      %v813 = vadd.f32 %v717, %v781
      %v814 = vadd.f32 %v718, %v782
      %v815 = vadd.f32 %v719, %v783
      %v816 = vadd.f32 %v720, %v784
      %v817 = vpack.c.bf16 %v785, %v785
      %v818 = vpack.c.bf16 %v786, %v786
      %v819 = vpack.c.bf16 %v787, %v787
      %v820 = vpack.c.bf16 %v788, %v788
      %v821 = vpack.c.bf16 %v789, %v789
      %v822 = vpack.c.bf16 %v790, %v790
      %v823 = vpack.c.bf16 %v791, %v791
      %v824 = vpack.c.bf16 %v792, %v792
      %v825 = vpack.c.bf16 %v793, %v793
      %v826 = vpack.c.bf16 %v794, %v794
      %v827 = vpack.c.bf16 %v795, %v795
      %v828 = vpack.c.bf16 %v796, %v796
      %v829 = vpack.c.bf16 %v797, %v797
      %v830 = vpack.c.bf16 %v798, %v798
      %v831 = vpack.c.bf16 %v799, %v799
      %v832 = vpack.c.bf16 %v800, %v800
      %v833 = vpack.c.bf16 %v801, %v801
      %v834 = vpack.c.bf16 %v802, %v802
      %v835 = vpack.c.bf16 %v803, %v803
      %v836 = vpack.c.bf16 %v804, %v804
      %v837 = vpack.c.bf16 %v805, %v805
      %v838 = vpack.c.bf16 %v806, %v806
      %v839 = vpack.c.bf16 %v807, %v807
      %v840 = vpack.c.bf16 %v808, %v808
      %v841 = vpack.c.bf16 %v809, %v809
      %v842 = vpack.c.bf16 %v810, %v810
      %v843 = vpack.c.bf16 %v811, %v811
      %v844 = vpack.c.bf16 %v812, %v812
      %v845 = vpack.c.bf16 %v813, %v813
      %v846 = vpack.c.bf16 %v814, %v814
      %v847 = vpack.c.bf16 %v815, %v815
      %v848 = vpack.c.bf16 %v816, %v816
      %849 = vst [vmem:[%s324] sm:$0xf] %v817
      %850 = vst [vmem:[%s324 + $0x4] sm:$0xf] %v818
      %851 = vst [vmem:[%s324 + $0x8] sm:$0xf] %v819
      %852 = vst [vmem:[%s324 + $0xc] sm:$0xf] %v820
      %853 = vst [vmem:[%s324 + $0x10] sm:$0xf] %v821
      %854 = vst [vmem:[%s324 + $0x14] sm:$0xf] %v822
      %855 = vst [vmem:[%s324 + $0x18] sm:$0xf] %v823
      %856 = vst [vmem:[%s324 + $0x1c] sm:$0xf] %v824
      %857 = vst [vmem:[%s324 + $0x20] sm:$0xf] %v825
      %858 = vst [vmem:[%s324 + $0x24] sm:$0xf] %v826
      %859 = vst [vmem:[%s324 + $0x28] sm:$0xf] %v827
      %860 = vst [vmem:[%s324 + $0x2c] sm:$0xf] %v828
      %861 = vst [vmem:[%s324 + $0x30] sm:$0xf] %v829
      %862 = vst [vmem:[%s324 + $0x34] sm:$0xf] %v830
      %863 = vst [vmem:[%s324 + $0x38] sm:$0xf] %v831
      %864 = vst [vmem:[%s324 + $0x3c] sm:$0xf] %v832
      %865 = vst [vmem:[%s324 + $0x40] sm:$0xf] %v833
      %866 = vst [vmem:[%s324 + $0x44] sm:$0xf] %v834
      %867 = vst [vmem:[%s324 + $0x48] sm:$0xf] %v835
      %868 = vst [vmem:[%s324 + $0x4c] sm:$0xf] %v836
      %869 = vst [vmem:[%s324 + $0x50] sm:$0xf] %v837
      %870 = vst [vmem:[%s324 + $0x54] sm:$0xf] %v838
      %871 = vst [vmem:[%s324 + $0x58] sm:$0xf] %v839
      %872 = vst [vmem:[%s324 + $0x5c] sm:$0xf] %v840
      %873 = vst [vmem:[%s324 + $0x60] sm:$0xf] %v841
      %874 = vst [vmem:[%s324 + $0x64] sm:$0xf] %v842
      %875 = vst [vmem:[%s324 + $0x68] sm:$0xf] %v843
      %876 = vst [vmem:[%s324 + $0x6c] sm:$0xf] %v844
      %877 = vst [vmem:[%s324 + $0x70] sm:$0xf] %v845
      %878 = vst [vmem:[%s324 + $0x74] sm:$0xf] %v846
      %879 = vst [vmem:[%s324 + $0x78] sm:$0xf] %v847
      %880 = vst [vmem:[%s324 + $0x7c] sm:$0xf] %v848
      %s881 = smul.u32 32, %s21
      %p882 = scmp.lt.s32.totalorder %s881, 63
      %s883 = scalar_select %p882, %s881, 63
      %p884 = scmp.lt.s32.totalorder %s20, 0
      %s885 = scalar_select %p884, %s20, 0
      %s886 = sadd.s32 %s885, %s883
      %s887 = smul.addr %s886, 4
      %s888 = scalar_lea.vmem %s5, %s887
      // Predicated region
      $region41: #{dense_projection_forward.7} parent=39 // pred_check
        %p889 = pneg %p180
      $region42: #{dense_projection_forward.7} parent=39 // pred_check_branch
        %891 = sbr.rel (%p889) target = $region44
      $region43: #{dense_projection_forward.7} parent=39 // pred_region
        %s892 = smul.u32 32, %s21
      $region44: #{dense_projection_forward.7} parent=39 // pred_fallthru
        _
    $region40: #{dense_projection_forward.7} parent=5 // pred_fallthru
      _
    %p893 = scmp.le.s32.totalorder 2, %s11
    // Predicated region
    $region45: #{dense_projection_forward.7} parent=5 // pred_check
      %p894 = pneg %p893
    $region46: #{dense_projection_forward.7} parent=5 // pred_check_branch
      %896 = sbr.rel (%p894) target = $region48
    $region47: #{dense_projection_forward.7} parent=5 // pred_region
      %s897 = ssub.s32 %s11, 2
      // Predicated region
      $region49: #{dense_projection_forward.7} parent=47 // pred_check
        %p898 = pneg %p186
      $region50: #{dense_projection_forward.7} parent=47 // pred_check_branch
        %900 = sbr.rel (%p898) target = $region52
      $region51: #{dense_projection_forward.7} parent=47 // pred_region
        %s901 = smul.u32 32, %s23
        %p902 = scmp.lt.s32.totalorder %s901, 63
        %s903 = scalar_select %p902, %s901, 63
        %p904 = scmp.lt.s32.totalorder %s22, 0
        %s905 = scalar_select %p904, %s22, 0
        %s906 = sadd.s32 %s905, %s903
        %s907 = smul.addr %s906, 4
        %s908 = scalar_lea.vmem %s5, %s907
      $region52: #{dense_projection_forward.7} parent=47 // pred_fallthru
        _
    $region48: #{dense_projection_forward.7} parent=5 // pred_fallthru
      _
  $region6: #{dense_projection_forward.7} parent=0 // loop_footer
    %s15 = sadd.s32 1, %s11
  $region7: #{dense_projection_forward.7} parent=0 // loop_footer_branch
    %10 = sbr.rel target = $region3
  $region8: #{dense_projection_forward.7} parent=0 // loop_exit
    _

</llo_original>
